<compile_context>
chip_gen: v5e
topology: v5e:2x2
jax: 0.10.0
libtpu: 0.0.40
codegen_flags: <defaults>
</compile_context>

<pallas_src>
import jax
import jax.numpy as jnp
from jax.experimental import pallas as pl
from jax.experimental.pallas import tpu as pltpu


# ----------------------------- kernel ---------------------------------------


def _fused_mlp_kernel(x_ref, b_ref, w_hbm, o_ref, wbuf, sem):
    """13-layer MLP chain with manually double-buffered weight streaming.

    x_ref : (B, D)     f32 VMEM  -- input activations (zero-padded lanes)
    b_ref : (L, 1, D)  f32 VMEM  -- all 13 biases, resident (13 KiB)
    w_hbm : (L, D, D)  f32 HBM   -- all 13 layer weights, streamed layer-by-layer
    o_ref : (B, D)     f32 VMEM  -- padded output (cols >= output_size are zero)
    wbuf  : (2, D, D)  f32 VMEM  -- 2-slot double buffer for one layer's weights
    sem   : (2,) DMA semaphores
    """
    num_layers = w_hbm.shape[0]

    def weight_copy(layer, slot):
        return pltpu.make_async_copy(w_hbm.at[layer], wbuf.at[slot], sem.at[slot])

    # Prime the pipeline: start fetching layer 0's weights immediately.
    weight_copy(0, 0).start()

    h = x_ref[...]
    # Static unroll (13 iterations): lets us (a) prefetch layer l+1 into the free
    # slot while the MXU runs layer l, and (b) skip the ReLU on the last layer
    # without pl.when.
    for l in range(num_layers):
        slot = l & 1
        weight_copy(l, slot).wait()
        if l + 1 < num_layers:
            weight_copy(l + 1, 1 - slot).start()  # overlaps the matmul below
        y = jnp.dot(h, wbuf[slot], preferred_element_type=jnp.float32) + b_ref[l]
        h = jnp.maximum(y, 0.0) if l + 1 < num_layers else y  # no ReLU after fc3
    o_ref[...] = h.astype(o_ref.dtype)


# ----------------------------- wrapper ---------------------------------------


def custom_model_forward(pp, x):
    """pp: padded params from prepare_padded_params(); x: (B, input_size1) f32."""
    w_slab = pp["w_slab"]  # (13, D, D) f32
    b_slab = pp["b_slab"]  # (13, 1, D) f32
    L, D, _ = w_slab.shape
    B = x.shape[0]

    # Zero-pad the input features to the uniform padded width (exact: padded
    # weight rows are zero).
    x_pad = jnp.pad(x, ((0, 0), (0, D - x.shape[1])))

    flops = 2 * B * D * D * L
    bytes_accessed = 4 * (w_slab.size + b_slab.size + x_pad.size + B * D)

    out_pad = pl.pallas_call(
        _fused_mlp_kernel,
        out_shape=jax.ShapeDtypeStruct((B, D), jnp.float32),
        in_specs=[
            pl.BlockSpec(memory_space=pltpu.MemorySpace.VMEM),  # x (tiny)
            pl.BlockSpec(memory_space=pltpu.MemorySpace.VMEM),  # bias stack (13 KiB)
            pl.BlockSpec(memory_space=pl.ANY),                  # weight slab stays in HBM
        ],
        out_specs=pl.BlockSpec(memory_space=pltpu.MemorySpace.VMEM),
        scratch_shapes=[
            pltpu.VMEM((2, D, D), jnp.float32),    # weight double buffer (512 KiB)
            pltpu.SemaphoreType.DMA((2,)),
        ],
        cost_estimate=pl.CostEstimate(
            flops=flops, transcendentals=0, bytes_accessed=bytes_accessed
        ),
    )(x_pad, b_slab, w_slab)

    out = out_pad[:, : pp["out_features"]]
    return out.reshape(out.shape[0], -1)  # matches x.reshape(x.size(0), -1)


# --------------------------- model definition --------------------------------


def init_linear_params(key, fan_in, fan_out):
    # Mimics PyTorch's U(-1/sqrt(fan_in), 1/sqrt(fan_in)) init.
    kw, kb = jax.random.split(key)
    bound = 1.0 / float(fan_in) ** 0.5
    w = jax.random.uniform(kw, (fan_in, fan_out), jnp.float32, -bound, bound)
    b = jax.random.uniform(kb, (1, fan_out), jnp.float32, -bound, bound)
    return w, b


def init_custom_model(key, input_size1, output_size, inner=200, num_inner_layers=10):
    keys = jax.random.split(key, 3 + num_inner_layers)
    params = {}
    params["fc1"] = init_linear_params(keys[0], input_size1, inner)
    params["fc2"] = init_linear_params(keys[1], inner, inner)
    inner_ws, inner_bs = [], []
    for i in range(num_inner_layers):
        w, b = init_linear_params(keys[2 + i], inner, inner)
        inner_ws.append(w)
        inner_bs.append(b)
    params["fc3"] = init_linear_params(keys[2 + num_inner_layers], inner, output_size)
    params["inner_w"] = jnp.stack(inner_ws)  # (10, inner, inner)
    params["inner_b"] = jnp.stack(inner_bs)  # (10, 1, inner)
    return params


def _round_up(n, m):
    return ((n + m - 1) // m) * m


def prepare_padded_params(params):
    """Pad every layer to one uniform (D, D) shape, D = round_up(max(dims), 128),
    and stack all 13 weights / biases into single slabs.  Zero padding is exact:
    padded activation columns stay zero through every ReLU layer and padded output
    columns are sliced off by the wrapper."""
    w1, b1 = params["fc1"]
    w2, b2 = params["fc2"]
    w3, b3 = params["fc3"]

    in_dim, hid = w1.shape
    out_dim = w3.shape[1]
    D = _round_up(max(in_dim, hid, out_dim), 128)  # 256 for (32, 200, 10)

    def pad_w(w):
        return jnp.pad(w, ((0, D - w.shape[0]), (0, D - w.shape[1])))

    def pad_b(b):
        return jnp.pad(b, ((0, 0), (0, D - b.shape[1])))

    n_inner = params["inner_w"].shape[0]
    ws = [pad_w(w1), pad_w(w2)]
    bs = [pad_b(b1), pad_b(b2)]
    for i in range(n_inner):
        ws.append(pad_w(params["inner_w"][i]))
        bs.append(pad_b(params["inner_b"][i]))
    ws.append(pad_w(w3))
    bs.append(pad_b(b3))

    return dict(
        w_slab=jnp.stack(ws),  # (13, D, D)
        b_slab=jnp.stack(bs),  # (13, 1, D)
        out_features=out_dim,  # python int -> static slice in wrapper
    )


def reference_forward(params, x):
    def lin(h, wb, relu):
        w, b = wb
        y = h @ w + b
        return jnp.maximum(y, 0.0) if relu else y

    h = lin(x, params["fc1"], True)
    h = lin(h, params["fc2"], True)
    for i in range(params["inner_w"].shape[0]):
        h = lin(h, (params["inner_w"][i], params["inner_b"][i]), True)
    out = lin(h, params["fc3"], False)
    return out.reshape(out.shape[0], -1)


# ------------------------------- main -----------------------------------------

if __name__ == "__main__":
    B = 8
    INPUT_SIZE1 = 32
    OUTPUT_SIZE = 10
    INNER = 200  # default inner_layer_size of CustomModel

    key = jax.random.PRNGKey(0)
    kp, kx = jax.random.split(key)
    params = init_custom_model(kp, INPUT_SIZE1, OUTPUT_SIZE, inner=INNER)
    x = jax.random.normal(kx, (B, INPUT_SIZE1), jnp.float32)

    pp = prepare_padded_params(params)
    y = custom_model_forward(pp, x)
    jax.block_until_ready(y)

    y_ref = reference_forward(params, x)
    assert y.shape == (B, OUTPUT_SIZE), y.shape
    assert jnp.allclose(y, y_ref, atol=1e-4, rtol=1e-4), "mismatch vs. reference"

    print("KERNEL_OK")
</pallas_src>

<mosaic_0001>
module attributes {stable_mosaic.version = 11 : i64} {
  func.func @_fused_mlp_kernel(%arg0: memref<8x256xf32, #tpu.memory_space<vmem>>, %arg1: memref<13x1x256xf32, #tpu.memory_space<vmem>>, %arg2: memref<13x256x256xf32, #tpu.memory_space<any>>, %arg3: memref<8x256xf32, #tpu.memory_space<vmem>>, %arg4: memref<2x256x256xf32, #tpu.memory_space<vmem>>, %arg5: memref<2x!tpu.dma_semaphore, #tpu.memory_space<semaphore_mem>>) attributes {dimension_semantics = [], scalar_prefetch = 0 : i64, scratch_operands = 2 : i64, tpu.core_type = #tpu.core_type<tc>} {
    %c0_i32 = arith.constant 0 : i32
    %c0_i32_0 = arith.constant 0 : i32
    %c0_i32_1 = arith.constant 0 : i32
    %c0_i32_2 = arith.constant 0 : i32
    %c0_i32_3 = arith.constant 0 : i32
    %0 = tpu.memref_slice %arg2[%c0_i32, %c0_i32_2, %c0_i32_3] : memref<13x256x256xf32, #tpu.memory_space<any>> -> memref<1x256x256xf32, #tpu.memory_space<any>>
    %1 = tpu.memref_squeeze %0 : memref<1x256x256xf32, #tpu.memory_space<any>> -> memref<256x256xf32, #tpu.memory_space<any>>
    %c0_i32_4 = arith.constant 0 : i32
    %c0_i32_5 = arith.constant 0 : i32
    %2 = tpu.memref_slice %arg4[%c0_i32_0, %c0_i32_4, %c0_i32_5] : memref<2x256x256xf32, #tpu.memory_space<vmem>> -> memref<1x256x256xf32, #tpu.memory_space<vmem>>
    %3 = tpu.memref_squeeze %2 : memref<1x256x256xf32, #tpu.memory_space<vmem>> -> memref<256x256xf32, #tpu.memory_space<vmem>>
    %4 = tpu.memref_slice %arg5[%c0_i32_1] : memref<2x!tpu.dma_semaphore, #tpu.memory_space<semaphore_mem>> -> memref<1x!tpu.dma_semaphore, #tpu.memory_space<semaphore_mem>>
    %5 = tpu.memref_squeeze %4 : memref<1x!tpu.dma_semaphore, #tpu.memory_space<semaphore_mem>> -> memref<!tpu.dma_semaphore, #tpu.memory_space<semaphore_mem>>
    tpu.enqueue_dma source(%1 : memref<256x256xf32, #tpu.memory_space<any>>) target(%3 : memref<256x256xf32, #tpu.memory_space<vmem>>) target_semaphore(%5 : memref<!tpu.dma_semaphore, #tpu.memory_space<semaphore_mem>>)
    %c0 = arith.constant 0 : index
    %c0_6 = arith.constant 0 : index
    %6 = vector.load %arg0[%c0, %c0_6] : memref<8x256xf32, #tpu.memory_space<vmem>>, vector<8x256xf32>
    %c0_i32_7 = arith.constant 0 : i32
    %c0_i32_8 = arith.constant 0 : i32
    %c0_i32_9 = arith.constant 0 : i32
    %c0_i32_10 = arith.constant 0 : i32
    %c0_i32_11 = arith.constant 0 : i32
    %7 = tpu.memref_slice %arg2[%c0_i32_7, %c0_i32_10, %c0_i32_11] : memref<13x256x256xf32, #tpu.memory_space<any>> -> memref<1x256x256xf32, #tpu.memory_space<any>>
    %8 = tpu.memref_squeeze %7 : memref<1x256x256xf32, #tpu.memory_space<any>> -> memref<256x256xf32, #tpu.memory_space<any>>
    %c0_i32_12 = arith.constant 0 : i32
    %c0_i32_13 = arith.constant 0 : i32
    %9 = tpu.memref_slice %arg4[%c0_i32_8, %c0_i32_12, %c0_i32_13] : memref<2x256x256xf32, #tpu.memory_space<vmem>> -> memref<1x256x256xf32, #tpu.memory_space<vmem>>
    %10 = tpu.memref_squeeze %9 : memref<1x256x256xf32, #tpu.memory_space<vmem>> -> memref<256x256xf32, #tpu.memory_space<vmem>>
    %11 = tpu.memref_slice %arg5[%c0_i32_9] : memref<2x!tpu.dma_semaphore, #tpu.memory_space<semaphore_mem>> -> memref<1x!tpu.dma_semaphore, #tpu.memory_space<semaphore_mem>>
    %12 = tpu.memref_squeeze %11 : memref<1x!tpu.dma_semaphore, #tpu.memory_space<semaphore_mem>> -> memref<!tpu.dma_semaphore, #tpu.memory_space<semaphore_mem>>
    tpu.wait_dma2 semaphore(%12 : memref<!tpu.dma_semaphore, #tpu.memory_space<semaphore_mem>>) src(%8 : memref<256x256xf32, #tpu.memory_space<any>>) dst(%10 : memref<256x256xf32, #tpu.memory_space<vmem>>)
    %c1_i32 = arith.constant 1 : i32
    %c1_i32_14 = arith.constant 1 : i32
    %c1_i32_15 = arith.constant 1 : i32
    %c0_i32_16 = arith.constant 0 : i32
    %c0_i32_17 = arith.constant 0 : i32
    %13 = tpu.memref_slice %arg2[%c1_i32, %c0_i32_16, %c0_i32_17] : memref<13x256x256xf32, #tpu.memory_space<any>> -> memref<1x256x256xf32, #tpu.memory_space<any>>
    %14 = tpu.memref_squeeze %13 : memref<1x256x256xf32, #tpu.memory_space<any>> -> memref<256x256xf32, #tpu.memory_space<any>>
    %c0_i32_18 = arith.constant 0 : i32
    %c0_i32_19 = arith.constant 0 : i32
    %15 = tpu.memref_slice %arg4[%c1_i32_14, %c0_i32_18, %c0_i32_19] : memref<2x256x256xf32, #tpu.memory_space<vmem>> -> memref<1x256x256xf32, #tpu.memory_space<vmem>>
    %16 = tpu.memref_squeeze %15 : memref<1x256x256xf32, #tpu.memory_space<vmem>> -> memref<256x256xf32, #tpu.memory_space<vmem>>
    %17 = tpu.memref_slice %arg5[%c1_i32_15] : memref<2x!tpu.dma_semaphore, #tpu.memory_space<semaphore_mem>> -> memref<1x!tpu.dma_semaphore, #tpu.memory_space<semaphore_mem>>
    %18 = tpu.memref_squeeze %17 : memref<1x!tpu.dma_semaphore, #tpu.memory_space<semaphore_mem>> -> memref<!tpu.dma_semaphore, #tpu.memory_space<semaphore_mem>>
    tpu.enqueue_dma source(%14 : memref<256x256xf32, #tpu.memory_space<any>>) target(%16 : memref<256x256xf32, #tpu.memory_space<vmem>>) target_semaphore(%18 : memref<!tpu.dma_semaphore, #tpu.memory_space<semaphore_mem>>)
    %c0_20 = arith.constant 0 : index
    %c0_21 = arith.constant 0 : index
    %c0_22 = arith.constant 0 : index
    %19 = vector.load %arg4[%c0_20, %c0_21, %c0_22] : memref<2x256x256xf32, #tpu.memory_space<vmem>>, vector<1x256x256xf32>
    %20 = vector.shape_cast %19 : vector<1x256x256xf32> to vector<256x256xf32>
    %cst = arith.constant dense<0.000000e+00> : vector<8x256xf32>
    %21 = tpu.matmul %6, %20, %cst {dimension_numbers = #tpu.dot_dimension_numbers<[1], [0], [0], [1], [0, 0, 1, 1], [], []>} : vector<8x256xf32>, vector<256x256xf32>, vector<8x256xf32> -> vector<8x256xf32>
    %c0_23 = arith.constant 0 : index
    %c0_24 = arith.constant 0 : index
    %c0_25 = arith.constant 0 : index
    %22 = vector.load %arg1[%c0_23, %c0_24, %c0_25] : memref<13x1x256xf32, #tpu.memory_space<vmem>>, vector<1x1x256xf32>
    %23 = vector.shape_cast %22 : vector<1x1x256xf32> to vector<1x256xf32>
    %24 = vector.broadcast %23 : vector<1x256xf32> to vector<8x256xf32>
    %25 = arith.addf %21, %24 : vector<8x256xf32>
    %cst_26 = arith.constant 0.000000e+00 : f32
    %26 = vector.broadcast %cst_26 : f32 to vector<8x256xf32>
    %27 = arith.maximumf %25, %26 : vector<8x256xf32>
    %c1_i32_27 = arith.constant 1 : i32
    %c1_i32_28 = arith.constant 1 : i32
    %c1_i32_29 = arith.constant 1 : i32
    %c0_i32_30 = arith.constant 0 : i32
    %c0_i32_31 = arith.constant 0 : i32
    %28 = tpu.memref_slice %arg2[%c1_i32_27, %c0_i32_30, %c0_i32_31] : memref<13x256x256xf32, #tpu.memory_space<any>> -> memref<1x256x256xf32, #tpu.memory_space<any>>
    %29 = tpu.memref_squeeze %28 : memref<1x256x256xf32, #tpu.memory_space<any>> -> memref<256x256xf32, #tpu.memory_space<any>>
    %c0_i32_32 = arith.constant 0 : i32
    %c0_i32_33 = arith.constant 0 : i32
    %30 = tpu.memref_slice %arg4[%c1_i32_28, %c0_i32_32, %c0_i32_33] : memref<2x256x256xf32, #tpu.memory_space<vmem>> -> memref<1x256x256xf32, #tpu.memory_space<vmem>>
    %31 = tpu.memref_squeeze %30 : memref<1x256x256xf32, #tpu.memory_space<vmem>> -> memref<256x256xf32, #tpu.memory_space<vmem>>
    %32 = tpu.memref_slice %arg5[%c1_i32_29] : memref<2x!tpu.dma_semaphore, #tpu.memory_space<semaphore_mem>> -> memref<1x!tpu.dma_semaphore, #tpu.memory_space<semaphore_mem>>
    %33 = tpu.memref_squeeze %32 : memref<1x!tpu.dma_semaphore, #tpu.memory_space<semaphore_mem>> -> memref<!tpu.dma_semaphore, #tpu.memory_space<semaphore_mem>>
    tpu.wait_dma2 semaphore(%33 : memref<!tpu.dma_semaphore, #tpu.memory_space<semaphore_mem>>) src(%29 : memref<256x256xf32, #tpu.memory_space<any>>) dst(%31 : memref<256x256xf32, #tpu.memory_space<vmem>>)
    %c2_i32 = arith.constant 2 : i32
    %c0_i32_34 = arith.constant 0 : i32
    %c0_i32_35 = arith.constant 0 : i32
    %c0_i32_36 = arith.constant 0 : i32
    %c0_i32_37 = arith.constant 0 : i32
    %34 = tpu.memref_slice %arg2[%c2_i32, %c0_i32_36, %c0_i32_37] : memref<13x256x256xf32, #tpu.memory_space<any>> -> memref<1x256x256xf32, #tpu.memory_space<any>>
    %35 = tpu.memref_squeeze %34 : memref<1x256x256xf32, #tpu.memory_space<any>> -> memref<256x256xf32, #tpu.memory_space<any>>
    %c0_i32_38 = arith.constant 0 : i32
    %c0_i32_39 = arith.constant 0 : i32
    %36 = tpu.memref_slice %arg4[%c0_i32_34, %c0_i32_38, %c0_i32_39] : memref<2x256x256xf32, #tpu.memory_space<vmem>> -> memref<1x256x256xf32, #tpu.memory_space<vmem>>
    %37 = tpu.memref_squeeze %36 : memref<1x256x256xf32, #tpu.memory_space<vmem>> -> memref<256x256xf32, #tpu.memory_space<vmem>>
    %38 = tpu.memref_slice %arg5[%c0_i32_35] : memref<2x!tpu.dma_semaphore, #tpu.memory_space<semaphore_mem>> -> memref<1x!tpu.dma_semaphore, #tpu.memory_space<semaphore_mem>>
    %39 = tpu.memref_squeeze %38 : memref<1x!tpu.dma_semaphore, #tpu.memory_space<semaphore_mem>> -> memref<!tpu.dma_semaphore, #tpu.memory_space<semaphore_mem>>
    tpu.enqueue_dma source(%35 : memref<256x256xf32, #tpu.memory_space<any>>) target(%37 : memref<256x256xf32, #tpu.memory_space<vmem>>) target_semaphore(%39 : memref<!tpu.dma_semaphore, #tpu.memory_space<semaphore_mem>>)
    %c1 = arith.constant 1 : index
    %c0_40 = arith.constant 0 : index
    %c0_41 = arith.constant 0 : index
    %40 = vector.load %arg4[%c1, %c0_40, %c0_41] : memref<2x256x256xf32, #tpu.memory_space<vmem>>, vector<1x256x256xf32>
    %41 = vector.shape_cast %40 : vector<1x256x256xf32> to vector<256x256xf32>
    %cst_42 = arith.constant dense<0.000000e+00> : vector<8x256xf32>
    %42 = tpu.matmul %27, %41, %cst_42 {dimension_numbers = #tpu.dot_dimension_numbers<[1], [0], [0], [1], [0, 0, 1, 1], [], []>} : vector<8x256xf32>, vector<256x256xf32>, vector<8x256xf32> -> vector<8x256xf32>
    %c1_43 = arith.constant 1 : index
    %c0_44 = arith.constant 0 : index
    %c0_45 = arith.constant 0 : index
    %43 = vector.load %arg1[%c1_43, %c0_44, %c0_45] : memref<13x1x256xf32, #tpu.memory_space<vmem>>, vector<1x1x256xf32>
    %44 = vector.shape_cast %43 : vector<1x1x256xf32> to vector<1x256xf32>
    %45 = vector.broadcast %44 : vector<1x256xf32> to vector<8x256xf32>
    %46 = arith.addf %42, %45 : vector<8x256xf32>
    %cst_46 = arith.constant 0.000000e+00 : f32
    %47 = vector.broadcast %cst_46 : f32 to vector<8x256xf32>
    %48 = arith.maximumf %46, %47 : vector<8x256xf32>
    %c2_i32_47 = arith.constant 2 : i32
    %c0_i32_48 = arith.constant 0 : i32
    %c0_i32_49 = arith.constant 0 : i32
    %c0_i32_50 = arith.constant 0 : i32
    %c0_i32_51 = arith.constant 0 : i32
    %49 = tpu.memref_slice %arg2[%c2_i32_47, %c0_i32_50, %c0_i32_51] : memref<13x256x256xf32, #tpu.memory_space<any>> -> memref<1x256x256xf32, #tpu.memory_space<any>>
    %50 = tpu.memref_squeeze %49 : memref<1x256x256xf32, #tpu.memory_space<any>> -> memref<256x256xf32, #tpu.memory_space<any>>
    %c0_i32_52 = arith.constant 0 : i32
    %c0_i32_53 = arith.constant 0 : i32
    %51 = tpu.memref_slice %arg4[%c0_i32_48, %c0_i32_52, %c0_i32_53] : memref<2x256x256xf32, #tpu.memory_space<vmem>> -> memref<1x256x256xf32, #tpu.memory_space<vmem>>
    %52 = tpu.memref_squeeze %51 : memref<1x256x256xf32, #tpu.memory_space<vmem>> -> memref<256x256xf32, #tpu.memory_space<vmem>>
    %53 = tpu.memref_slice %arg5[%c0_i32_49] : memref<2x!tpu.dma_semaphore, #tpu.memory_space<semaphore_mem>> -> memref<1x!tpu.dma_semaphore, #tpu.memory_space<semaphore_mem>>
    %54 = tpu.memref_squeeze %53 : memref<1x!tpu.dma_semaphore, #tpu.memory_space<semaphore_mem>> -> memref<!tpu.dma_semaphore, #tpu.memory_space<semaphore_mem>>
    tpu.wait_dma2 semaphore(%54 : memref<!tpu.dma_semaphore, #tpu.memory_space<semaphore_mem>>) src(%50 : memref<256x256xf32, #tpu.memory_space<any>>) dst(%52 : memref<256x256xf32, #tpu.memory_space<vmem>>)
    %c3_i32 = arith.constant 3 : i32
    %c1_i32_54 = arith.constant 1 : i32
    %c1_i32_55 = arith.constant 1 : i32
    %c0_i32_56 = arith.constant 0 : i32
    %c0_i32_57 = arith.constant 0 : i32
    %55 = tpu.memref_slice %arg2[%c3_i32, %c0_i32_56, %c0_i32_57] : memref<13x256x256xf32, #tpu.memory_space<any>> -> memref<1x256x256xf32, #tpu.memory_space<any>>
    %56 = tpu.memref_squeeze %55 : memref<1x256x256xf32, #tpu.memory_space<any>> -> memref<256x256xf32, #tpu.memory_space<any>>
    %c0_i32_58 = arith.constant 0 : i32
    %c0_i32_59 = arith.constant 0 : i32
    %57 = tpu.memref_slice %arg4[%c1_i32_54, %c0_i32_58, %c0_i32_59] : memref<2x256x256xf32, #tpu.memory_space<vmem>> -> memref<1x256x256xf32, #tpu.memory_space<vmem>>
    %58 = tpu.memref_squeeze %57 : memref<1x256x256xf32, #tpu.memory_space<vmem>> -> memref<256x256xf32, #tpu.memory_space<vmem>>
    %59 = tpu.memref_slice %arg5[%c1_i32_55] : memref<2x!tpu.dma_semaphore, #tpu.memory_space<semaphore_mem>> -> memref<1x!tpu.dma_semaphore, #tpu.memory_space<semaphore_mem>>
    %60 = tpu.memref_squeeze %59 : memref<1x!tpu.dma_semaphore, #tpu.memory_space<semaphore_mem>> -> memref<!tpu.dma_semaphore, #tpu.memory_space<semaphore_mem>>
    tpu.enqueue_dma source(%56 : memref<256x256xf32, #tpu.memory_space<any>>) target(%58 : memref<256x256xf32, #tpu.memory_space<vmem>>) target_semaphore(%60 : memref<!tpu.dma_semaphore, #tpu.memory_space<semaphore_mem>>)
    %c0_60 = arith.constant 0 : index
    %c0_61 = arith.constant 0 : index
    %c0_62 = arith.constant 0 : index
    %61 = vector.load %arg4[%c0_60, %c0_61, %c0_62] : memref<2x256x256xf32, #tpu.memory_space<vmem>>, vector<1x256x256xf32>
    %62 = vector.shape_cast %61 : vector<1x256x256xf32> to vector<256x256xf32>
    %cst_63 = arith.constant dense<0.000000e+00> : vector<8x256xf32>
    %63 = tpu.matmul %48, %62, %cst_63 {dimension_numbers = #tpu.dot_dimension_numbers<[1], [0], [0], [1], [0, 0, 1, 1], [], []>} : vector<8x256xf32>, vector<256x256xf32>, vector<8x256xf32> -> vector<8x256xf32>
    %c2 = arith.constant 2 : index
    %c0_64 = arith.constant 0 : index
    %c0_65 = arith.constant 0 : index
    %64 = vector.load %arg1[%c2, %c0_64, %c0_65] : memref<13x1x256xf32, #tpu.memory_space<vmem>>, vector<1x1x256xf32>
    %65 = vector.shape_cast %64 : vector<1x1x256xf32> to vector<1x256xf32>
    %66 = vector.broadcast %65 : vector<1x256xf32> to vector<8x256xf32>
    %67 = arith.addf %63, %66 : vector<8x256xf32>
    %cst_66 = arith.constant 0.000000e+00 : f32
    %68 = vector.broadcast %cst_66 : f32 to vector<8x256xf32>
    %69 = arith.maximumf %67, %68 : vector<8x256xf32>
    %c3_i32_67 = arith.constant 3 : i32
    %c1_i32_68 = arith.constant 1 : i32
    %c1_i32_69 = arith.constant 1 : i32
    %c0_i32_70 = arith.constant 0 : i32
    %c0_i32_71 = arith.constant 0 : i32
    %70 = tpu.memref_slice %arg2[%c3_i32_67, %c0_i32_70, %c0_i32_71] : memref<13x256x256xf32, #tpu.memory_space<any>> -> memref<1x256x256xf32, #tpu.memory_space<any>>
    %71 = tpu.memref_squeeze %70 : memref<1x256x256xf32, #tpu.memory_space<any>> -> memref<256x256xf32, #tpu.memory_space<any>>
    %c0_i32_72 = arith.constant 0 : i32
    %c0_i32_73 = arith.constant 0 : i32
    %72 = tpu.memref_slice %arg4[%c1_i32_68, %c0_i32_72, %c0_i32_73] : memref<2x256x256xf32, #tpu.memory_space<vmem>> -> memref<1x256x256xf32, #tpu.memory_space<vmem>>
    %73 = tpu.memref_squeeze %72 : memref<1x256x256xf32, #tpu.memory_space<vmem>> -> memref<256x256xf32, #tpu.memory_space<vmem>>
    %74 = tpu.memref_slice %arg5[%c1_i32_69] : memref<2x!tpu.dma_semaphore, #tpu.memory_space<semaphore_mem>> -> memref<1x!tpu.dma_semaphore, #tpu.memory_space<semaphore_mem>>
    %75 = tpu.memref_squeeze %74 : memref<1x!tpu.dma_semaphore, #tpu.memory_space<semaphore_mem>> -> memref<!tpu.dma_semaphore, #tpu.memory_space<semaphore_mem>>
    tpu.wait_dma2 semaphore(%75 : memref<!tpu.dma_semaphore, #tpu.memory_space<semaphore_mem>>) src(%71 : memref<256x256xf32, #tpu.memory_space<any>>) dst(%73 : memref<256x256xf32, #tpu.memory_space<vmem>>)
    %c4_i32 = arith.constant 4 : i32
    %c0_i32_74 = arith.constant 0 : i32
    %c0_i32_75 = arith.constant 0 : i32
    %c0_i32_76 = arith.constant 0 : i32
    %c0_i32_77 = arith.constant 0 : i32
    %76 = tpu.memref_slice %arg2[%c4_i32, %c0_i32_76, %c0_i32_77] : memref<13x256x256xf32, #tpu.memory_space<any>> -> memref<1x256x256xf32, #tpu.memory_space<any>>
    %77 = tpu.memref_squeeze %76 : memref<1x256x256xf32, #tpu.memory_space<any>> -> memref<256x256xf32, #tpu.memory_space<any>>
    %c0_i32_78 = arith.constant 0 : i32
    %c0_i32_79 = arith.constant 0 : i32
    %78 = tpu.memref_slice %arg4[%c0_i32_74, %c0_i32_78, %c0_i32_79] : memref<2x256x256xf32, #tpu.memory_space<vmem>> -> memref<1x256x256xf32, #tpu.memory_space<vmem>>
    %79 = tpu.memref_squeeze %78 : memref<1x256x256xf32, #tpu.memory_space<vmem>> -> memref<256x256xf32, #tpu.memory_space<vmem>>
    %80 = tpu.memref_slice %arg5[%c0_i32_75] : memref<2x!tpu.dma_semaphore, #tpu.memory_space<semaphore_mem>> -> memref<1x!tpu.dma_semaphore, #tpu.memory_space<semaphore_mem>>
    %81 = tpu.memref_squeeze %80 : memref<1x!tpu.dma_semaphore, #tpu.memory_space<semaphore_mem>> -> memref<!tpu.dma_semaphore, #tpu.memory_space<semaphore_mem>>
    tpu.enqueue_dma source(%77 : memref<256x256xf32, #tpu.memory_space<any>>) target(%79 : memref<256x256xf32, #tpu.memory_space<vmem>>) target_semaphore(%81 : memref<!tpu.dma_semaphore, #tpu.memory_space<semaphore_mem>>)
    %c1_80 = arith.constant 1 : index
    %c0_81 = arith.constant 0 : index
    %c0_82 = arith.constant 0 : index
    %82 = vector.load %arg4[%c1_80, %c0_81, %c0_82] : memref<2x256x256xf32, #tpu.memory_space<vmem>>, vector<1x256x256xf32>
    %83 = vector.shape_cast %82 : vector<1x256x256xf32> to vector<256x256xf32>
    %cst_83 = arith.constant dense<0.000000e+00> : vector<8x256xf32>
    %84 = tpu.matmul %69, %83, %cst_83 {dimension_numbers = #tpu.dot_dimension_numbers<[1], [0], [0], [1], [0, 0, 1, 1], [], []>} : vector<8x256xf32>, vector<256x256xf32>, vector<8x256xf32> -> vector<8x256xf32>
    %c3 = arith.constant 3 : index
    %c0_84 = arith.constant 0 : index
    %c0_85 = arith.constant 0 : index
    %85 = vector.load %arg1[%c3, %c0_84, %c0_85] : memref<13x1x256xf32, #tpu.memory_space<vmem>>, vector<1x1x256xf32>
    %86 = vector.shape_cast %85 : vector<1x1x256xf32> to vector<1x256xf32>
    %87 = vector.broadcast %86 : vector<1x256xf32> to vector<8x256xf32>
    %88 = arith.addf %84, %87 : vector<8x256xf32>
    %cst_86 = arith.constant 0.000000e+00 : f32
    %89 = vector.broadcast %cst_86 : f32 to vector<8x256xf32>
    %90 = arith.maximumf %88, %89 : vector<8x256xf32>
    %c4_i32_87 = arith.constant 4 : i32
    %c0_i32_88 = arith.constant 0 : i32
    %c0_i32_89 = arith.constant 0 : i32
    %c0_i32_90 = arith.constant 0 : i32
    %c0_i32_91 = arith.constant 0 : i32
    %91 = tpu.memref_slice %arg2[%c4_i32_87, %c0_i32_90, %c0_i32_91] : memref<13x256x256xf32, #tpu.memory_space<any>> -> memref<1x256x256xf32, #tpu.memory_space<any>>
    %92 = tpu.memref_squeeze %91 : memref<1x256x256xf32, #tpu.memory_space<any>> -> memref<256x256xf32, #tpu.memory_space<any>>
    %c0_i32_92 = arith.constant 0 : i32
    %c0_i32_93 = arith.constant 0 : i32
    %93 = tpu.memref_slice %arg4[%c0_i32_88, %c0_i32_92, %c0_i32_93] : memref<2x256x256xf32, #tpu.memory_space<vmem>> -> memref<1x256x256xf32, #tpu.memory_space<vmem>>
    %94 = tpu.memref_squeeze %93 : memref<1x256x256xf32, #tpu.memory_space<vmem>> -> memref<256x256xf32, #tpu.memory_space<vmem>>
    %95 = tpu.memref_slice %arg5[%c0_i32_89] : memref<2x!tpu.dma_semaphore, #tpu.memory_space<semaphore_mem>> -> memref<1x!tpu.dma_semaphore, #tpu.memory_space<semaphore_mem>>
    %96 = tpu.memref_squeeze %95 : memref<1x!tpu.dma_semaphore, #tpu.memory_space<semaphore_mem>> -> memref<!tpu.dma_semaphore, #tpu.memory_space<semaphore_mem>>
    tpu.wait_dma2 semaphore(%96 : memref<!tpu.dma_semaphore, #tpu.memory_space<semaphore_mem>>) src(%92 : memref<256x256xf32, #tpu.memory_space<any>>) dst(%94 : memref<256x256xf32, #tpu.memory_space<vmem>>)
    %c5_i32 = arith.constant 5 : i32
    %c1_i32_94 = arith.constant 1 : i32
    %c1_i32_95 = arith.constant 1 : i32
    %c0_i32_96 = arith.constant 0 : i32
    %c0_i32_97 = arith.constant 0 : i32
    %97 = tpu.memref_slice %arg2[%c5_i32, %c0_i32_96, %c0_i32_97] : memref<13x256x256xf32, #tpu.memory_space<any>> -> memref<1x256x256xf32, #tpu.memory_space<any>>
    %98 = tpu.memref_squeeze %97 : memref<1x256x256xf32, #tpu.memory_space<any>> -> memref<256x256xf32, #tpu.memory_space<any>>
    %c0_i32_98 = arith.constant 0 : i32
    %c0_i32_99 = arith.constant 0 : i32
    %99 = tpu.memref_slice %arg4[%c1_i32_94, %c0_i32_98, %c0_i32_99] : memref<2x256x256xf32, #tpu.memory_space<vmem>> -> memref<1x256x256xf32, #tpu.memory_space<vmem>>
    %100 = tpu.memref_squeeze %99 : memref<1x256x256xf32, #tpu.memory_space<vmem>> -> memref<256x256xf32, #tpu.memory_space<vmem>>
    %101 = tpu.memref_slice %arg5[%c1_i32_95] : memref<2x!tpu.dma_semaphore, #tpu.memory_space<semaphore_mem>> -> memref<1x!tpu.dma_semaphore, #tpu.memory_space<semaphore_mem>>
    %102 = tpu.memref_squeeze %101 : memref<1x!tpu.dma_semaphore, #tpu.memory_space<semaphore_mem>> -> memref<!tpu.dma_semaphore, #tpu.memory_space<semaphore_mem>>
    tpu.enqueue_dma source(%98 : memref<256x256xf32, #tpu.memory_space<any>>) target(%100 : memref<256x256xf32, #tpu.memory_space<vmem>>) target_semaphore(%102 : memref<!tpu.dma_semaphore, #tpu.memory_space<semaphore_mem>>)
    %c0_100 = arith.constant 0 : index
    %c0_101 = arith.constant 0 : index
    %c0_102 = arith.constant 0 : index
    %103 = vector.load %arg4[%c0_100, %c0_101, %c0_102] : memref<2x256x256xf32, #tpu.memory_space<vmem>>, vector<1x256x256xf32>
    %104 = vector.shape_cast %103 : vector<1x256x256xf32> to vector<256x256xf32>
    %cst_103 = arith.constant dense<0.000000e+00> : vector<8x256xf32>
    %105 = tpu.matmul %90, %104, %cst_103 {dimension_numbers = #tpu.dot_dimension_numbers<[1], [0], [0], [1], [0, 0, 1, 1], [], []>} : vector<8x256xf32>, vector<256x256xf32>, vector<8x256xf32> -> vector<8x256xf32>
    %c4 = arith.constant 4 : index
    %c0_104 = arith.constant 0 : index
    %c0_105 = arith.constant 0 : index
    %106 = vector.load %arg1[%c4, %c0_104, %c0_105] : memref<13x1x256xf32, #tpu.memory_space<vmem>>, vector<1x1x256xf32>
    %107 = vector.shape_cast %106 : vector<1x1x256xf32> to vector<1x256xf32>
    %108 = vector.broadcast %107 : vector<1x256xf32> to vector<8x256xf32>
    %109 = arith.addf %105, %108 : vector<8x256xf32>
    %cst_106 = arith.constant 0.000000e+00 : f32
    %110 = vector.broadcast %cst_106 : f32 to vector<8x256xf32>
    %111 = arith.maximumf %109, %110 : vector<8x256xf32>
    %c5_i32_107 = arith.constant 5 : i32
    %c1_i32_108 = arith.constant 1 : i32
    %c1_i32_109 = arith.constant 1 : i32
    %c0_i32_110 = arith.constant 0 : i32
    %c0_i32_111 = arith.constant 0 : i32
    %112 = tpu.memref_slice %arg2[%c5_i32_107, %c0_i32_110, %c0_i32_111] : memref<13x256x256xf32, #tpu.memory_space<any>> -> memref<1x256x256xf32, #tpu.memory_space<any>>
    %113 = tpu.memref_squeeze %112 : memref<1x256x256xf32, #tpu.memory_space<any>> -> memref<256x256xf32, #tpu.memory_space<any>>
    %c0_i32_112 = arith.constant 0 : i32
    %c0_i32_113 = arith.constant 0 : i32
    %114 = tpu.memref_slice %arg4[%c1_i32_108, %c0_i32_112, %c0_i32_113] : memref<2x256x256xf32, #tpu.memory_space<vmem>> -> memref<1x256x256xf32, #tpu.memory_space<vmem>>
    %115 = tpu.memref_squeeze %114 : memref<1x256x256xf32, #tpu.memory_space<vmem>> -> memref<256x256xf32, #tpu.memory_space<vmem>>
    %116 = tpu.memref_slice %arg5[%c1_i32_109] : memref<2x!tpu.dma_semaphore, #tpu.memory_space<semaphore_mem>> -> memref<1x!tpu.dma_semaphore, #tpu.memory_space<semaphore_mem>>
    %117 = tpu.memref_squeeze %116 : memref<1x!tpu.dma_semaphore, #tpu.memory_space<semaphore_mem>> -> memref<!tpu.dma_semaphore, #tpu.memory_space<semaphore_mem>>
    tpu.wait_dma2 semaphore(%117 : memref<!tpu.dma_semaphore, #tpu.memory_space<semaphore_mem>>) src(%113 : memref<256x256xf32, #tpu.memory_space<any>>) dst(%115 : memref<256x256xf32, #tpu.memory_space<vmem>>)
    %c6_i32 = arith.constant 6 : i32
    %c0_i32_114 = arith.constant 0 : i32
    %c0_i32_115 = arith.constant 0 : i32
    %c0_i32_116 = arith.constant 0 : i32
    %c0_i32_117 = arith.constant 0 : i32
    %118 = tpu.memref_slice %arg2[%c6_i32, %c0_i32_116, %c0_i32_117] : memref<13x256x256xf32, #tpu.memory_space<any>> -> memref<1x256x256xf32, #tpu.memory_space<any>>
    %119 = tpu.memref_squeeze %118 : memref<1x256x256xf32, #tpu.memory_space<any>> -> memref<256x256xf32, #tpu.memory_space<any>>
    %c0_i32_118 = arith.constant 0 : i32
    %c0_i32_119 = arith.constant 0 : i32
    %120 = tpu.memref_slice %arg4[%c0_i32_114, %c0_i32_118, %c0_i32_119] : memref<2x256x256xf32, #tpu.memory_space<vmem>> -> memref<1x256x256xf32, #tpu.memory_space<vmem>>
    %121 = tpu.memref_squeeze %120 : memref<1x256x256xf32, #tpu.memory_space<vmem>> -> memref<256x256xf32, #tpu.memory_space<vmem>>
    %122 = tpu.memref_slice %arg5[%c0_i32_115] : memref<2x!tpu.dma_semaphore, #tpu.memory_space<semaphore_mem>> -> memref<1x!tpu.dma_semaphore, #tpu.memory_space<semaphore_mem>>
    %123 = tpu.memref_squeeze %122 : memref<1x!tpu.dma_semaphore, #tpu.memory_space<semaphore_mem>> -> memref<!tpu.dma_semaphore, #tpu.memory_space<semaphore_mem>>
    tpu.enqueue_dma source(%119 : memref<256x256xf32, #tpu.memory_space<any>>) target(%121 : memref<256x256xf32, #tpu.memory_space<vmem>>) target_semaphore(%123 : memref<!tpu.dma_semaphore, #tpu.memory_space<semaphore_mem>>)
    %c1_120 = arith.constant 1 : index
    %c0_121 = arith.constant 0 : index
    %c0_122 = arith.constant 0 : index
    %124 = vector.load %arg4[%c1_120, %c0_121, %c0_122] : memref<2x256x256xf32, #tpu.memory_space<vmem>>, vector<1x256x256xf32>
    %125 = vector.shape_cast %124 : vector<1x256x256xf32> to vector<256x256xf32>
    %cst_123 = arith.constant dense<0.000000e+00> : vector<8x256xf32>
    %126 = tpu.matmul %111, %125, %cst_123 {dimension_numbers = #tpu.dot_dimension_numbers<[1], [0], [0], [1], [0, 0, 1, 1], [], []>} : vector<8x256xf32>, vector<256x256xf32>, vector<8x256xf32> -> vector<8x256xf32>
    %c5 = arith.constant 5 : index
    %c0_124 = arith.constant 0 : index
    %c0_125 = arith.constant 0 : index
    %127 = vector.load %arg1[%c5, %c0_124, %c0_125] : memref<13x1x256xf32, #tpu.memory_space<vmem>>, vector<1x1x256xf32>
    %128 = vector.shape_cast %127 : vector<1x1x256xf32> to vector<1x256xf32>
    %129 = vector.broadcast %128 : vector<1x256xf32> to vector<8x256xf32>
    %130 = arith.addf %126, %129 : vector<8x256xf32>
    %cst_126 = arith.constant 0.000000e+00 : f32
    %131 = vector.broadcast %cst_126 : f32 to vector<8x256xf32>
    %132 = arith.maximumf %130, %131 : vector<8x256xf32>
    %c6_i32_127 = arith.constant 6 : i32
    %c0_i32_128 = arith.constant 0 : i32
    %c0_i32_129 = arith.constant 0 : i32
    %c0_i32_130 = arith.constant 0 : i32
    %c0_i32_131 = arith.constant 0 : i32
    %133 = tpu.memref_slice %arg2[%c6_i32_127, %c0_i32_130, %c0_i32_131] : memref<13x256x256xf32, #tpu.memory_space<any>> -> memref<1x256x256xf32, #tpu.memory_space<any>>
    %134 = tpu.memref_squeeze %133 : memref<1x256x256xf32, #tpu.memory_space<any>> -> memref<256x256xf32, #tpu.memory_space<any>>
    %c0_i32_132 = arith.constant 0 : i32
    %c0_i32_133 = arith.constant 0 : i32
    %135 = tpu.memref_slice %arg4[%c0_i32_128, %c0_i32_132, %c0_i32_133] : memref<2x256x256xf32, #tpu.memory_space<vmem>> -> memref<1x256x256xf32, #tpu.memory_space<vmem>>
    %136 = tpu.memref_squeeze %135 : memref<1x256x256xf32, #tpu.memory_space<vmem>> -> memref<256x256xf32, #tpu.memory_space<vmem>>
    %137 = tpu.memref_slice %arg5[%c0_i32_129] : memref<2x!tpu.dma_semaphore, #tpu.memory_space<semaphore_mem>> -> memref<1x!tpu.dma_semaphore, #tpu.memory_space<semaphore_mem>>
    %138 = tpu.memref_squeeze %137 : memref<1x!tpu.dma_semaphore, #tpu.memory_space<semaphore_mem>> -> memref<!tpu.dma_semaphore, #tpu.memory_space<semaphore_mem>>
    tpu.wait_dma2 semaphore(%138 : memref<!tpu.dma_semaphore, #tpu.memory_space<semaphore_mem>>) src(%134 : memref<256x256xf32, #tpu.memory_space<any>>) dst(%136 : memref<256x256xf32, #tpu.memory_space<vmem>>)
    %c7_i32 = arith.constant 7 : i32
    %c1_i32_134 = arith.constant 1 : i32
    %c1_i32_135 = arith.constant 1 : i32
    %c0_i32_136 = arith.constant 0 : i32
    %c0_i32_137 = arith.constant 0 : i32
    %139 = tpu.memref_slice %arg2[%c7_i32, %c0_i32_136, %c0_i32_137] : memref<13x256x256xf32, #tpu.memory_space<any>> -> memref<1x256x256xf32, #tpu.memory_space<any>>
    %140 = tpu.memref_squeeze %139 : memref<1x256x256xf32, #tpu.memory_space<any>> -> memref<256x256xf32, #tpu.memory_space<any>>
    %c0_i32_138 = arith.constant 0 : i32
    %c0_i32_139 = arith.constant 0 : i32
    %141 = tpu.memref_slice %arg4[%c1_i32_134, %c0_i32_138, %c0_i32_139] : memref<2x256x256xf32, #tpu.memory_space<vmem>> -> memref<1x256x256xf32, #tpu.memory_space<vmem>>
    %142 = tpu.memref_squeeze %141 : memref<1x256x256xf32, #tpu.memory_space<vmem>> -> memref<256x256xf32, #tpu.memory_space<vmem>>
    %143 = tpu.memref_slice %arg5[%c1_i32_135] : memref<2x!tpu.dma_semaphore, #tpu.memory_space<semaphore_mem>> -> memref<1x!tpu.dma_semaphore, #tpu.memory_space<semaphore_mem>>
    %144 = tpu.memref_squeeze %143 : memref<1x!tpu.dma_semaphore, #tpu.memory_space<semaphore_mem>> -> memref<!tpu.dma_semaphore, #tpu.memory_space<semaphore_mem>>
    tpu.enqueue_dma source(%140 : memref<256x256xf32, #tpu.memory_space<any>>) target(%142 : memref<256x256xf32, #tpu.memory_space<vmem>>) target_semaphore(%144 : memref<!tpu.dma_semaphore, #tpu.memory_space<semaphore_mem>>)
    %c0_140 = arith.constant 0 : index
    %c0_141 = arith.constant 0 : index
    %c0_142 = arith.constant 0 : index
    %145 = vector.load %arg4[%c0_140, %c0_141, %c0_142] : memref<2x256x256xf32, #tpu.memory_space<vmem>>, vector<1x256x256xf32>
    %146 = vector.shape_cast %145 : vector<1x256x256xf32> to vector<256x256xf32>
    %cst_143 = arith.constant dense<0.000000e+00> : vector<8x256xf32>
    %147 = tpu.matmul %132, %146, %cst_143 {dimension_numbers = #tpu.dot_dimension_numbers<[1], [0], [0], [1], [0, 0, 1, 1], [], []>} : vector<8x256xf32>, vector<256x256xf32>, vector<8x256xf32> -> vector<8x256xf32>
    %c6 = arith.constant 6 : index
    %c0_144 = arith.constant 0 : index
    %c0_145 = arith.constant 0 : index
    %148 = vector.load %arg1[%c6, %c0_144, %c0_145] : memref<13x1x256xf32, #tpu.memory_space<vmem>>, vector<1x1x256xf32>
    %149 = vector.shape_cast %148 : vector<1x1x256xf32> to vector<1x256xf32>
    %150 = vector.broadcast %149 : vector<1x256xf32> to vector<8x256xf32>
    %151 = arith.addf %147, %150 : vector<8x256xf32>
    %cst_146 = arith.constant 0.000000e+00 : f32
    %152 = vector.broadcast %cst_146 : f32 to vector<8x256xf32>
    %153 = arith.maximumf %151, %152 : vector<8x256xf32>
    %c7_i32_147 = arith.constant 7 : i32
    %c1_i32_148 = arith.constant 1 : i32
    %c1_i32_149 = arith.constant 1 : i32
    %c0_i32_150 = arith.constant 0 : i32
    %c0_i32_151 = arith.constant 0 : i32
    %154 = tpu.memref_slice %arg2[%c7_i32_147, %c0_i32_150, %c0_i32_151] : memref<13x256x256xf32, #tpu.memory_space<any>> -> memref<1x256x256xf32, #tpu.memory_space<any>>
    %155 = tpu.memref_squeeze %154 : memref<1x256x256xf32, #tpu.memory_space<any>> -> memref<256x256xf32, #tpu.memory_space<any>>
    %c0_i32_152 = arith.constant 0 : i32
    %c0_i32_153 = arith.constant 0 : i32
    %156 = tpu.memref_slice %arg4[%c1_i32_148, %c0_i32_152, %c0_i32_153] : memref<2x256x256xf32, #tpu.memory_space<vmem>> -> memref<1x256x256xf32, #tpu.memory_space<vmem>>
    %157 = tpu.memref_squeeze %156 : memref<1x256x256xf32, #tpu.memory_space<vmem>> -> memref<256x256xf32, #tpu.memory_space<vmem>>
    %158 = tpu.memref_slice %arg5[%c1_i32_149] : memref<2x!tpu.dma_semaphore, #tpu.memory_space<semaphore_mem>> -> memref<1x!tpu.dma_semaphore, #tpu.memory_space<semaphore_mem>>
    %159 = tpu.memref_squeeze %158 : memref<1x!tpu.dma_semaphore, #tpu.memory_space<semaphore_mem>> -> memref<!tpu.dma_semaphore, #tpu.memory_space<semaphore_mem>>
    tpu.wait_dma2 semaphore(%159 : memref<!tpu.dma_semaphore, #tpu.memory_space<semaphore_mem>>) src(%155 : memref<256x256xf32, #tpu.memory_space<any>>) dst(%157 : memref<256x256xf32, #tpu.memory_space<vmem>>)
    %c8_i32 = arith.constant 8 : i32
    %c0_i32_154 = arith.constant 0 : i32
    %c0_i32_155 = arith.constant 0 : i32
    %c0_i32_156 = arith.constant 0 : i32
    %c0_i32_157 = arith.constant 0 : i32
    %160 = tpu.memref_slice %arg2[%c8_i32, %c0_i32_156, %c0_i32_157] : memref<13x256x256xf32, #tpu.memory_space<any>> -> memref<1x256x256xf32, #tpu.memory_space<any>>
    %161 = tpu.memref_squeeze %160 : memref<1x256x256xf32, #tpu.memory_space<any>> -> memref<256x256xf32, #tpu.memory_space<any>>
    %c0_i32_158 = arith.constant 0 : i32
    %c0_i32_159 = arith.constant 0 : i32
    %162 = tpu.memref_slice %arg4[%c0_i32_154, %c0_i32_158, %c0_i32_159] : memref<2x256x256xf32, #tpu.memory_space<vmem>> -> memref<1x256x256xf32, #tpu.memory_space<vmem>>
    %163 = tpu.memref_squeeze %162 : memref<1x256x256xf32, #tpu.memory_space<vmem>> -> memref<256x256xf32, #tpu.memory_space<vmem>>
    %164 = tpu.memref_slice %arg5[%c0_i32_155] : memref<2x!tpu.dma_semaphore, #tpu.memory_space<semaphore_mem>> -> memref<1x!tpu.dma_semaphore, #tpu.memory_space<semaphore_mem>>
    %165 = tpu.memref_squeeze %164 : memref<1x!tpu.dma_semaphore, #tpu.memory_space<semaphore_mem>> -> memref<!tpu.dma_semaphore, #tpu.memory_space<semaphore_mem>>
    tpu.enqueue_dma source(%161 : memref<256x256xf32, #tpu.memory_space<any>>) target(%163 : memref<256x256xf32, #tpu.memory_space<vmem>>) target_semaphore(%165 : memref<!tpu.dma_semaphore, #tpu.memory_space<semaphore_mem>>)
    %c1_160 = arith.constant 1 : index
    %c0_161 = arith.constant 0 : index
    %c0_162 = arith.constant 0 : index
    %166 = vector.load %arg4[%c1_160, %c0_161, %c0_162] : memref<2x256x256xf32, #tpu.memory_space<vmem>>, vector<1x256x256xf32>
    %167 = vector.shape_cast %166 : vector<1x256x256xf32> to vector<256x256xf32>
    %cst_163 = arith.constant dense<0.000000e+00> : vector<8x256xf32>
    %168 = tpu.matmul %153, %167, %cst_163 {dimension_numbers = #tpu.dot_dimension_numbers<[1], [0], [0], [1], [0, 0, 1, 1], [], []>} : vector<8x256xf32>, vector<256x256xf32>, vector<8x256xf32> -> vector<8x256xf32>
    %c7 = arith.constant 7 : index
    %c0_164 = arith.constant 0 : index
    %c0_165 = arith.constant 0 : index
    %169 = vector.load %arg1[%c7, %c0_164, %c0_165] : memref<13x1x256xf32, #tpu.memory_space<vmem>>, vector<1x1x256xf32>
    %170 = vector.shape_cast %169 : vector<1x1x256xf32> to vector<1x256xf32>
    %171 = vector.broadcast %170 : vector<1x256xf32> to vector<8x256xf32>
    %172 = arith.addf %168, %171 : vector<8x256xf32>
    %cst_166 = arith.constant 0.000000e+00 : f32
    %173 = vector.broadcast %cst_166 : f32 to vector<8x256xf32>
    %174 = arith.maximumf %172, %173 : vector<8x256xf32>
    %c8_i32_167 = arith.constant 8 : i32
    %c0_i32_168 = arith.constant 0 : i32
    %c0_i32_169 = arith.constant 0 : i32
    %c0_i32_170 = arith.constant 0 : i32
    %c0_i32_171 = arith.constant 0 : i32
    %175 = tpu.memref_slice %arg2[%c8_i32_167, %c0_i32_170, %c0_i32_171] : memref<13x256x256xf32, #tpu.memory_space<any>> -> memref<1x256x256xf32, #tpu.memory_space<any>>
    %176 = tpu.memref_squeeze %175 : memref<1x256x256xf32, #tpu.memory_space<any>> -> memref<256x256xf32, #tpu.memory_space<any>>
    %c0_i32_172 = arith.constant 0 : i32
    %c0_i32_173 = arith.constant 0 : i32
    %177 = tpu.memref_slice %arg4[%c0_i32_168, %c0_i32_172, %c0_i32_173] : memref<2x256x256xf32, #tpu.memory_space<vmem>> -> memref<1x256x256xf32, #tpu.memory_space<vmem>>
    %178 = tpu.memref_squeeze %177 : memref<1x256x256xf32, #tpu.memory_space<vmem>> -> memref<256x256xf32, #tpu.memory_space<vmem>>
    %179 = tpu.memref_slice %arg5[%c0_i32_169] : memref<2x!tpu.dma_semaphore, #tpu.memory_space<semaphore_mem>> -> memref<1x!tpu.dma_semaphore, #tpu.memory_space<semaphore_mem>>
    %180 = tpu.memref_squeeze %179 : memref<1x!tpu.dma_semaphore, #tpu.memory_space<semaphore_mem>> -> memref<!tpu.dma_semaphore, #tpu.memory_space<semaphore_mem>>
    tpu.wait_dma2 semaphore(%180 : memref<!tpu.dma_semaphore, #tpu.memory_space<semaphore_mem>>) src(%176 : memref<256x256xf32, #tpu.memory_space<any>>) dst(%178 : memref<256x256xf32, #tpu.memory_space<vmem>>)
    %c9_i32 = arith.constant 9 : i32
    %c1_i32_174 = arith.constant 1 : i32
    %c1_i32_175 = arith.constant 1 : i32
    %c0_i32_176 = arith.constant 0 : i32
    %c0_i32_177 = arith.constant 0 : i32
    %181 = tpu.memref_slice %arg2[%c9_i32, %c0_i32_176, %c0_i32_177] : memref<13x256x256xf32, #tpu.memory_space<any>> -> memref<1x256x256xf32, #tpu.memory_space<any>>
    %182 = tpu.memref_squeeze %181 : memref<1x256x256xf32, #tpu.memory_space<any>> -> memref<256x256xf32, #tpu.memory_space<any>>
    %c0_i32_178 = arith.constant 0 : i32
    %c0_i32_179 = arith.constant 0 : i32
    %183 = tpu.memref_slice %arg4[%c1_i32_174, %c0_i32_178, %c0_i32_179] : memref<2x256x256xf32, #tpu.memory_space<vmem>> -> memref<1x256x256xf32, #tpu.memory_space<vmem>>
    %184 = tpu.memref_squeeze %183 : memref<1x256x256xf32, #tpu.memory_space<vmem>> -> memref<256x256xf32, #tpu.memory_space<vmem>>
    %185 = tpu.memref_slice %arg5[%c1_i32_175] : memref<2x!tpu.dma_semaphore, #tpu.memory_space<semaphore_mem>> -> memref<1x!tpu.dma_semaphore, #tpu.memory_space<semaphore_mem>>
    %186 = tpu.memref_squeeze %185 : memref<1x!tpu.dma_semaphore, #tpu.memory_space<semaphore_mem>> -> memref<!tpu.dma_semaphore, #tpu.memory_space<semaphore_mem>>
    tpu.enqueue_dma source(%182 : memref<256x256xf32, #tpu.memory_space<any>>) target(%184 : memref<256x256xf32, #tpu.memory_space<vmem>>) target_semaphore(%186 : memref<!tpu.dma_semaphore, #tpu.memory_space<semaphore_mem>>)
    %c0_180 = arith.constant 0 : index
    %c0_181 = arith.constant 0 : index
    %c0_182 = arith.constant 0 : index
    %187 = vector.load %arg4[%c0_180, %c0_181, %c0_182] : memref<2x256x256xf32, #tpu.memory_space<vmem>>, vector<1x256x256xf32>
    %188 = vector.shape_cast %187 : vector<1x256x256xf32> to vector<256x256xf32>
    %cst_183 = arith.constant dense<0.000000e+00> : vector<8x256xf32>
    %189 = tpu.matmul %174, %188, %cst_183 {dimension_numbers = #tpu.dot_dimension_numbers<[1], [0], [0], [1], [0, 0, 1, 1], [], []>} : vector<8x256xf32>, vector<256x256xf32>, vector<8x256xf32> -> vector<8x256xf32>
    %c8 = arith.constant 8 : index
    %c0_184 = arith.constant 0 : index
    %c0_185 = arith.constant 0 : index
    %190 = vector.load %arg1[%c8, %c0_184, %c0_185] : memref<13x1x256xf32, #tpu.memory_space<vmem>>, vector<1x1x256xf32>
    %191 = vector.shape_cast %190 : vector<1x1x256xf32> to vector<1x256xf32>
    %192 = vector.broadcast %191 : vector<1x256xf32> to vector<8x256xf32>
    %193 = arith.addf %189, %192 : vector<8x256xf32>
    %cst_186 = arith.constant 0.000000e+00 : f32
    %194 = vector.broadcast %cst_186 : f32 to vector<8x256xf32>
    %195 = arith.maximumf %193, %194 : vector<8x256xf32>
    %c9_i32_187 = arith.constant 9 : i32
    %c1_i32_188 = arith.constant 1 : i32
    %c1_i32_189 = arith.constant 1 : i32
    %c0_i32_190 = arith.constant 0 : i32
    %c0_i32_191 = arith.constant 0 : i32
    %196 = tpu.memref_slice %arg2[%c9_i32_187, %c0_i32_190, %c0_i32_191] : memref<13x256x256xf32, #tpu.memory_space<any>> -> memref<1x256x256xf32, #tpu.memory_space<any>>
    %197 = tpu.memref_squeeze %196 : memref<1x256x256xf32, #tpu.memory_space<any>> -> memref<256x256xf32, #tpu.memory_space<any>>
    %c0_i32_192 = arith.constant 0 : i32
    %c0_i32_193 = arith.constant 0 : i32
    %198 = tpu.memref_slice %arg4[%c1_i32_188, %c0_i32_192, %c0_i32_193] : memref<2x256x256xf32, #tpu.memory_space<vmem>> -> memref<1x256x256xf32, #tpu.memory_space<vmem>>
    %199 = tpu.memref_squeeze %198 : memref<1x256x256xf32, #tpu.memory_space<vmem>> -> memref<256x256xf32, #tpu.memory_space<vmem>>
    %200 = tpu.memref_slice %arg5[%c1_i32_189] : memref<2x!tpu.dma_semaphore, #tpu.memory_space<semaphore_mem>> -> memref<1x!tpu.dma_semaphore, #tpu.memory_space<semaphore_mem>>
    %201 = tpu.memref_squeeze %200 : memref<1x!tpu.dma_semaphore, #tpu.memory_space<semaphore_mem>> -> memref<!tpu.dma_semaphore, #tpu.memory_space<semaphore_mem>>
    tpu.wait_dma2 semaphore(%201 : memref<!tpu.dma_semaphore, #tpu.memory_space<semaphore_mem>>) src(%197 : memref<256x256xf32, #tpu.memory_space<any>>) dst(%199 : memref<256x256xf32, #tpu.memory_space<vmem>>)
    %c10_i32 = arith.constant 10 : i32
    %c0_i32_194 = arith.constant 0 : i32
    %c0_i32_195 = arith.constant 0 : i32
    %c0_i32_196 = arith.constant 0 : i32
    %c0_i32_197 = arith.constant 0 : i32
    %202 = tpu.memref_slice %arg2[%c10_i32, %c0_i32_196, %c0_i32_197] : memref<13x256x256xf32, #tpu.memory_space<any>> -> memref<1x256x256xf32, #tpu.memory_space<any>>
    %203 = tpu.memref_squeeze %202 : memref<1x256x256xf32, #tpu.memory_space<any>> -> memref<256x256xf32, #tpu.memory_space<any>>
    %c0_i32_198 = arith.constant 0 : i32
    %c0_i32_199 = arith.constant 0 : i32
    %204 = tpu.memref_slice %arg4[%c0_i32_194, %c0_i32_198, %c0_i32_199] : memref<2x256x256xf32, #tpu.memory_space<vmem>> -> memref<1x256x256xf32, #tpu.memory_space<vmem>>
    %205 = tpu.memref_squeeze %204 : memref<1x256x256xf32, #tpu.memory_space<vmem>> -> memref<256x256xf32, #tpu.memory_space<vmem>>
    %206 = tpu.memref_slice %arg5[%c0_i32_195] : memref<2x!tpu.dma_semaphore, #tpu.memory_space<semaphore_mem>> -> memref<1x!tpu.dma_semaphore, #tpu.memory_space<semaphore_mem>>
    %207 = tpu.memref_squeeze %206 : memref<1x!tpu.dma_semaphore, #tpu.memory_space<semaphore_mem>> -> memref<!tpu.dma_semaphore, #tpu.memory_space<semaphore_mem>>
    tpu.enqueue_dma source(%203 : memref<256x256xf32, #tpu.memory_space<any>>) target(%205 : memref<256x256xf32, #tpu.memory_space<vmem>>) target_semaphore(%207 : memref<!tpu.dma_semaphore, #tpu.memory_space<semaphore_mem>>)
    %c1_200 = arith.constant 1 : index
    %c0_201 = arith.constant 0 : index
    %c0_202 = arith.constant 0 : index
    %208 = vector.load %arg4[%c1_200, %c0_201, %c0_202] : memref<2x256x256xf32, #tpu.memory_space<vmem>>, vector<1x256x256xf32>
    %209 = vector.shape_cast %208 : vector<1x256x256xf32> to vector<256x256xf32>
    %cst_203 = arith.constant dense<0.000000e+00> : vector<8x256xf32>
    %210 = tpu.matmul %195, %209, %cst_203 {dimension_numbers = #tpu.dot_dimension_numbers<[1], [0], [0], [1], [0, 0, 1, 1], [], []>} : vector<8x256xf32>, vector<256x256xf32>, vector<8x256xf32> -> vector<8x256xf32>
    %c9 = arith.constant 9 : index
    %c0_204 = arith.constant 0 : index
    %c0_205 = arith.constant 0 : index
    %211 = vector.load %arg1[%c9, %c0_204, %c0_205] : memref<13x1x256xf32, #tpu.memory_space<vmem>>, vector<1x1x256xf32>
    %212 = vector.shape_cast %211 : vector<1x1x256xf32> to vector<1x256xf32>
    %213 = vector.broadcast %212 : vector<1x256xf32> to vector<8x256xf32>
    %214 = arith.addf %210, %213 : vector<8x256xf32>
    %cst_206 = arith.constant 0.000000e+00 : f32
    %215 = vector.broadcast %cst_206 : f32 to vector<8x256xf32>
    %216 = arith.maximumf %214, %215 : vector<8x256xf32>
    %c10_i32_207 = arith.constant 10 : i32
    %c0_i32_208 = arith.constant 0 : i32
    %c0_i32_209 = arith.constant 0 : i32
    %c0_i32_210 = arith.constant 0 : i32
    %c0_i32_211 = arith.constant 0 : i32
    %217 = tpu.memref_slice %arg2[%c10_i32_207, %c0_i32_210, %c0_i32_211] : memref<13x256x256xf32, #tpu.memory_space<any>> -> memref<1x256x256xf32, #tpu.memory_space<any>>
    %218 = tpu.memref_squeeze %217 : memref<1x256x256xf32, #tpu.memory_space<any>> -> memref<256x256xf32, #tpu.memory_space<any>>
    %c0_i32_212 = arith.constant 0 : i32
    %c0_i32_213 = arith.constant 0 : i32
    %219 = tpu.memref_slice %arg4[%c0_i32_208, %c0_i32_212, %c0_i32_213] : memref<2x256x256xf32, #tpu.memory_space<vmem>> -> memref<1x256x256xf32, #tpu.memory_space<vmem>>
    %220 = tpu.memref_squeeze %219 : memref<1x256x256xf32, #tpu.memory_space<vmem>> -> memref<256x256xf32, #tpu.memory_space<vmem>>
    %221 = tpu.memref_slice %arg5[%c0_i32_209] : memref<2x!tpu.dma_semaphore, #tpu.memory_space<semaphore_mem>> -> memref<1x!tpu.dma_semaphore, #tpu.memory_space<semaphore_mem>>
    %222 = tpu.memref_squeeze %221 : memref<1x!tpu.dma_semaphore, #tpu.memory_space<semaphore_mem>> -> memref<!tpu.dma_semaphore, #tpu.memory_space<semaphore_mem>>
    tpu.wait_dma2 semaphore(%222 : memref<!tpu.dma_semaphore, #tpu.memory_space<semaphore_mem>>) src(%218 : memref<256x256xf32, #tpu.memory_space<any>>) dst(%220 : memref<256x256xf32, #tpu.memory_space<vmem>>)
    %c11_i32 = arith.constant 11 : i32
    %c1_i32_214 = arith.constant 1 : i32
    %c1_i32_215 = arith.constant 1 : i32
    %c0_i32_216 = arith.constant 0 : i32
    %c0_i32_217 = arith.constant 0 : i32
    %223 = tpu.memref_slice %arg2[%c11_i32, %c0_i32_216, %c0_i32_217] : memref<13x256x256xf32, #tpu.memory_space<any>> -> memref<1x256x256xf32, #tpu.memory_space<any>>
    %224 = tpu.memref_squeeze %223 : memref<1x256x256xf32, #tpu.memory_space<any>> -> memref<256x256xf32, #tpu.memory_space<any>>
    %c0_i32_218 = arith.constant 0 : i32
    %c0_i32_219 = arith.constant 0 : i32
    %225 = tpu.memref_slice %arg4[%c1_i32_214, %c0_i32_218, %c0_i32_219] : memref<2x256x256xf32, #tpu.memory_space<vmem>> -> memref<1x256x256xf32, #tpu.memory_space<vmem>>
    %226 = tpu.memref_squeeze %225 : memref<1x256x256xf32, #tpu.memory_space<vmem>> -> memref<256x256xf32, #tpu.memory_space<vmem>>
    %227 = tpu.memref_slice %arg5[%c1_i32_215] : memref<2x!tpu.dma_semaphore, #tpu.memory_space<semaphore_mem>> -> memref<1x!tpu.dma_semaphore, #tpu.memory_space<semaphore_mem>>
    %228 = tpu.memref_squeeze %227 : memref<1x!tpu.dma_semaphore, #tpu.memory_space<semaphore_mem>> -> memref<!tpu.dma_semaphore, #tpu.memory_space<semaphore_mem>>
    tpu.enqueue_dma source(%224 : memref<256x256xf32, #tpu.memory_space<any>>) target(%226 : memref<256x256xf32, #tpu.memory_space<vmem>>) target_semaphore(%228 : memref<!tpu.dma_semaphore, #tpu.memory_space<semaphore_mem>>)
    %c0_220 = arith.constant 0 : index
    %c0_221 = arith.constant 0 : index
    %c0_222 = arith.constant 0 : index
    %229 = vector.load %arg4[%c0_220, %c0_221, %c0_222] : memref<2x256x256xf32, #tpu.memory_space<vmem>>, vector<1x256x256xf32>
    %230 = vector.shape_cast %229 : vector<1x256x256xf32> to vector<256x256xf32>
    %cst_223 = arith.constant dense<0.000000e+00> : vector<8x256xf32>
    %231 = tpu.matmul %216, %230, %cst_223 {dimension_numbers = #tpu.dot_dimension_numbers<[1], [0], [0], [1], [0, 0, 1, 1], [], []>} : vector<8x256xf32>, vector<256x256xf32>, vector<8x256xf32> -> vector<8x256xf32>
    %c10 = arith.constant 10 : index
    %c0_224 = arith.constant 0 : index
    %c0_225 = arith.constant 0 : index
    %232 = vector.load %arg1[%c10, %c0_224, %c0_225] : memref<13x1x256xf32, #tpu.memory_space<vmem>>, vector<1x1x256xf32>
    %233 = vector.shape_cast %232 : vector<1x1x256xf32> to vector<1x256xf32>
    %234 = vector.broadcast %233 : vector<1x256xf32> to vector<8x256xf32>
    %235 = arith.addf %231, %234 : vector<8x256xf32>
    %cst_226 = arith.constant 0.000000e+00 : f32
    %236 = vector.broadcast %cst_226 : f32 to vector<8x256xf32>
    %237 = arith.maximumf %235, %236 : vector<8x256xf32>
    %c11_i32_227 = arith.constant 11 : i32
    %c1_i32_228 = arith.constant 1 : i32
    %c1_i32_229 = arith.constant 1 : i32
    %c0_i32_230 = arith.constant 0 : i32
    %c0_i32_231 = arith.constant 0 : i32
    %238 = tpu.memref_slice %arg2[%c11_i32_227, %c0_i32_230, %c0_i32_231] : memref<13x256x256xf32, #tpu.memory_space<any>> -> memref<1x256x256xf32, #tpu.memory_space<any>>
    %239 = tpu.memref_squeeze %238 : memref<1x256x256xf32, #tpu.memory_space<any>> -> memref<256x256xf32, #tpu.memory_space<any>>
    %c0_i32_232 = arith.constant 0 : i32
    %c0_i32_233 = arith.constant 0 : i32
    %240 = tpu.memref_slice %arg4[%c1_i32_228, %c0_i32_232, %c0_i32_233] : memref<2x256x256xf32, #tpu.memory_space<vmem>> -> memref<1x256x256xf32, #tpu.memory_space<vmem>>
    %241 = tpu.memref_squeeze %240 : memref<1x256x256xf32, #tpu.memory_space<vmem>> -> memref<256x256xf32, #tpu.memory_space<vmem>>
    %242 = tpu.memref_slice %arg5[%c1_i32_229] : memref<2x!tpu.dma_semaphore, #tpu.memory_space<semaphore_mem>> -> memref<1x!tpu.dma_semaphore, #tpu.memory_space<semaphore_mem>>
    %243 = tpu.memref_squeeze %242 : memref<1x!tpu.dma_semaphore, #tpu.memory_space<semaphore_mem>> -> memref<!tpu.dma_semaphore, #tpu.memory_space<semaphore_mem>>
    tpu.wait_dma2 semaphore(%243 : memref<!tpu.dma_semaphore, #tpu.memory_space<semaphore_mem>>) src(%239 : memref<256x256xf32, #tpu.memory_space<any>>) dst(%241 : memref<256x256xf32, #tpu.memory_space<vmem>>)
    %c12_i32 = arith.constant 12 : i32
    %c0_i32_234 = arith.constant 0 : i32
    %c0_i32_235 = arith.constant 0 : i32
    %c0_i32_236 = arith.constant 0 : i32
    %c0_i32_237 = arith.constant 0 : i32
    %244 = tpu.memref_slice %arg2[%c12_i32, %c0_i32_236, %c0_i32_237] : memref<13x256x256xf32, #tpu.memory_space<any>> -> memref<1x256x256xf32, #tpu.memory_space<any>>
    %245 = tpu.memref_squeeze %244 : memref<1x256x256xf32, #tpu.memory_space<any>> -> memref<256x256xf32, #tpu.memory_space<any>>
    %c0_i32_238 = arith.constant 0 : i32
    %c0_i32_239 = arith.constant 0 : i32
    %246 = tpu.memref_slice %arg4[%c0_i32_234, %c0_i32_238, %c0_i32_239] : memref<2x256x256xf32, #tpu.memory_space<vmem>> -> memref<1x256x256xf32, #tpu.memory_space<vmem>>
    %247 = tpu.memref_squeeze %246 : memref<1x256x256xf32, #tpu.memory_space<vmem>> -> memref<256x256xf32, #tpu.memory_space<vmem>>
    %248 = tpu.memref_slice %arg5[%c0_i32_235] : memref<2x!tpu.dma_semaphore, #tpu.memory_space<semaphore_mem>> -> memref<1x!tpu.dma_semaphore, #tpu.memory_space<semaphore_mem>>
    %249 = tpu.memref_squeeze %248 : memref<1x!tpu.dma_semaphore, #tpu.memory_space<semaphore_mem>> -> memref<!tpu.dma_semaphore, #tpu.memory_space<semaphore_mem>>
    tpu.enqueue_dma source(%245 : memref<256x256xf32, #tpu.memory_space<any>>) target(%247 : memref<256x256xf32, #tpu.memory_space<vmem>>) target_semaphore(%249 : memref<!tpu.dma_semaphore, #tpu.memory_space<semaphore_mem>>)
    %c1_240 = arith.constant 1 : index
    %c0_241 = arith.constant 0 : index
    %c0_242 = arith.constant 0 : index
    %250 = vector.load %arg4[%c1_240, %c0_241, %c0_242] : memref<2x256x256xf32, #tpu.memory_space<vmem>>, vector<1x256x256xf32>
    %251 = vector.shape_cast %250 : vector<1x256x256xf32> to vector<256x256xf32>
    %cst_243 = arith.constant dense<0.000000e+00> : vector<8x256xf32>
    %252 = tpu.matmul %237, %251, %cst_243 {dimension_numbers = #tpu.dot_dimension_numbers<[1], [0], [0], [1], [0, 0, 1, 1], [], []>} : vector<8x256xf32>, vector<256x256xf32>, vector<8x256xf32> -> vector<8x256xf32>
    %c11 = arith.constant 11 : index
    %c0_244 = arith.constant 0 : index
    %c0_245 = arith.constant 0 : index
    %253 = vector.load %arg1[%c11, %c0_244, %c0_245] : memref<13x1x256xf32, #tpu.memory_space<vmem>>, vector<1x1x256xf32>
    %254 = vector.shape_cast %253 : vector<1x1x256xf32> to vector<1x256xf32>
    %255 = vector.broadcast %254 : vector<1x256xf32> to vector<8x256xf32>
    %256 = arith.addf %252, %255 : vector<8x256xf32>
    %cst_246 = arith.constant 0.000000e+00 : f32
    %257 = vector.broadcast %cst_246 : f32 to vector<8x256xf32>
    %258 = arith.maximumf %256, %257 : vector<8x256xf32>
    %c12_i32_247 = arith.constant 12 : i32
    %c0_i32_248 = arith.constant 0 : i32
    %c0_i32_249 = arith.constant 0 : i32
    %c0_i32_250 = arith.constant 0 : i32
    %c0_i32_251 = arith.constant 0 : i32
    %259 = tpu.memref_slice %arg2[%c12_i32_247, %c0_i32_250, %c0_i32_251] : memref<13x256x256xf32, #tpu.memory_space<any>> -> memref<1x256x256xf32, #tpu.memory_space<any>>
    %260 = tpu.memref_squeeze %259 : memref<1x256x256xf32, #tpu.memory_space<any>> -> memref<256x256xf32, #tpu.memory_space<any>>
    %c0_i32_252 = arith.constant 0 : i32
    %c0_i32_253 = arith.constant 0 : i32
    %261 = tpu.memref_slice %arg4[%c0_i32_248, %c0_i32_252, %c0_i32_253] : memref<2x256x256xf32, #tpu.memory_space<vmem>> -> memref<1x256x256xf32, #tpu.memory_space<vmem>>
    %262 = tpu.memref_squeeze %261 : memref<1x256x256xf32, #tpu.memory_space<vmem>> -> memref<256x256xf32, #tpu.memory_space<vmem>>
    %263 = tpu.memref_slice %arg5[%c0_i32_249] : memref<2x!tpu.dma_semaphore, #tpu.memory_space<semaphore_mem>> -> memref<1x!tpu.dma_semaphore, #tpu.memory_space<semaphore_mem>>
    %264 = tpu.memref_squeeze %263 : memref<1x!tpu.dma_semaphore, #tpu.memory_space<semaphore_mem>> -> memref<!tpu.dma_semaphore, #tpu.memory_space<semaphore_mem>>
    tpu.wait_dma2 semaphore(%264 : memref<!tpu.dma_semaphore, #tpu.memory_space<semaphore_mem>>) src(%260 : memref<256x256xf32, #tpu.memory_space<any>>) dst(%262 : memref<256x256xf32, #tpu.memory_space<vmem>>)
    %c0_254 = arith.constant 0 : index
    %c0_255 = arith.constant 0 : index
    %c0_256 = arith.constant 0 : index
    %265 = vector.load %arg4[%c0_254, %c0_255, %c0_256] : memref<2x256x256xf32, #tpu.memory_space<vmem>>, vector<1x256x256xf32>
    %266 = vector.shape_cast %265 : vector<1x256x256xf32> to vector<256x256xf32>
    %cst_257 = arith.constant dense<0.000000e+00> : vector<8x256xf32>
    %267 = tpu.matmul %258, %266, %cst_257 {dimension_numbers = #tpu.dot_dimension_numbers<[1], [0], [0], [1], [0, 0, 1, 1], [], []>} : vector<8x256xf32>, vector<256x256xf32>, vector<8x256xf32> -> vector<8x256xf32>
    %c12 = arith.constant 12 : index
    %c0_258 = arith.constant 0 : index
    %c0_259 = arith.constant 0 : index
    %268 = vector.load %arg1[%c12, %c0_258, %c0_259] : memref<13x1x256xf32, #tpu.memory_space<vmem>>, vector<1x1x256xf32>
    %269 = vector.shape_cast %268 : vector<1x1x256xf32> to vector<1x256xf32>
    %270 = vector.broadcast %269 : vector<1x256xf32> to vector<8x256xf32>
    %271 = arith.addf %267, %270 : vector<8x256xf32>
    %c0_260 = arith.constant 0 : index
    %c0_261 = arith.constant 0 : index
    %272 = vector.load %arg3[%c0_260, %c0_261] : memref<8x256xf32, #tpu.memory_space<vmem>>, vector<8x256xf32>
    tpu.vector_store %arg3[%c0_260, %c0_261], %271 {strides = array<i32>} : memref<8x256xf32, #tpu.memory_space<vmem>>, vector<8x256xf32>,
    return
  }
}

</mosaic_0001>

<llo_original>
// kernel: tpu_custom_call.1
$region0: #{tpu_custom_call.1}
  #allocation0 [shape = 'u32[]', space=smem, size = 0x4, offset = 0x4, fixed_abs, tag = 'smem constant byte address 0x4 - core index']
  #allocation1 [shape = 'u32[72,128]{1,0:T(1,128)}', space=vmem, size = 0x9000, scoped, tag = 'internal scratch']
  #allocation2 [shape = 'f32[2,256,256]{2,1,0:T(8,128)}', space=vmem, size = 0x80000, scoped, tag = 'scratch operand']
  #allocation3 [shape = 's32[2]{0}', space=sflag, size = 0x8, scoped, tag = 'scratch operand']
  #allocation10 [shape = 's32[]', space=sflag, size = 0x4, offset = 0, fixed_abs, tag = 'sflag constant byte address 0x0 - dummy sync flag']
  #allocation11 [shape = 's32[]', space=sflag, size = 0x4, offset = 0, fixed_abs, tag = 'sflag constant byte address 0x0 - dummy sync flag']
  #allocation12 [shape = 'u32[]', space=smem, size = 0x4, offset = 0x44, fixed_abs, tag = 'smem constant byte address 0x44 - assertion arg 0']
  #allocation13 [shape = 'u32[]', space=smem, size = 0x4, offset = 0x48, fixed_abs, tag = 'smem constant byte address 0x48 - assertion arg 1']
  #allocation14 [shape = 's32[]', space=sflag, size = 0x4, offset = 0, fixed_abs, tag = 'sflag constant byte address 0x0 - dummy sync flag']
  #allocation15 [shape = 's32[]', space=sflag, size = 0x4, offset = 0, fixed_abs, tag = 'sflag constant byte address 0x0 - dummy sync flag']
  #allocation16 [shape = 's32[]', space=sflag, size = 0x4, offset = 0, fixed_abs, tag = 'sflag constant byte address 0x0 - dummy sync flag']
  #allocation17 [shape = 's32[]', space=sflag, size = 0x4, offset = 0, fixed_abs, tag = 'sflag constant byte address 0x0 - dummy sync flag']
  #allocation18 [shape = 's32[]', space=sflag, size = 0x4, offset = 0, fixed_abs, tag = 'sflag constant byte address 0x0 - dummy sync flag']
  #allocation19 [shape = 's32[]', space=sflag, size = 0x4, offset = 0, fixed_abs, tag = 'sflag constant byte address 0x0 - dummy sync flag']
  #allocation20 [shape = 's32[]', space=sflag, size = 0x4, offset = 0, fixed_abs, tag = 'sflag constant byte address 0x0 - dummy sync flag']
  #allocation21 [shape = 's32[]', space=sflag, size = 0x4, offset = 0, fixed_abs, tag = 'sflag constant byte address 0x0 - dummy sync flag']
  #allocation22 [shape = 's32[]', space=sflag, size = 0x4, offset = 0, fixed_abs, tag = 'sflag constant byte address 0x0 - dummy sync flag']
  #allocation23 [shape = 's32[]', space=sflag, size = 0x4, offset = 0, fixed_abs, tag = 'sflag constant byte address 0x0 - dummy sync flag']
  #allocation24 [shape = 's32[]', space=sflag, size = 0x4, offset = 0, fixed_abs, tag = 'sflag constant byte address 0x0 - dummy sync flag']
  #allocation25 [shape = 's32[]', space=sflag, size = 0x4, offset = 0, fixed_abs, tag = 'sflag constant byte address 0x0 - dummy sync flag']
  #allocation26 [shape = 's32[]', space=sflag, size = 0x4, offset = 0, fixed_abs, tag = 'sflag constant byte address 0x0 - dummy sync flag']
  #allocation27 [shape = 's32[]', space=sflag, size = 0x4, offset = 0, fixed_abs, tag = 'sflag constant byte address 0x0 - dummy sync flag']
  #allocation28 [shape = 's32[]', space=sflag, size = 0x4, offset = 0, fixed_abs, tag = 'sflag constant byte address 0x0 - dummy sync flag']
  #allocation29 [shape = 's32[]', space=sflag, size = 0x4, offset = 0, fixed_abs, tag = 'sflag constant byte address 0x0 - dummy sync flag']
  #allocation30 [shape = 's32[]', space=sflag, size = 0x4, offset = 0, fixed_abs, tag = 'sflag constant byte address 0x0 - dummy sync flag']
  #allocation31 [shape = 's32[]', space=sflag, size = 0x4, offset = 0, fixed_abs, tag = 'sflag constant byte address 0x0 - dummy sync flag']
  #allocation32 [shape = 's32[]', space=sflag, size = 0x4, offset = 0, fixed_abs, tag = 'sflag constant byte address 0x0 - dummy sync flag']
  #allocation33 [shape = 's32[]', space=sflag, size = 0x4, offset = 0, fixed_abs, tag = 'sflag constant byte address 0x0 - dummy sync flag']
  #allocation34 [shape = 's32[]', space=sflag, size = 0x4, offset = 0, fixed_abs, tag = 'sflag constant byte address 0x0 - dummy sync flag']
  #allocation35 [shape = 's32[]', space=sflag, size = 0x4, offset = 0, fixed_abs, tag = 'sflag constant byte address 0x0 - dummy sync flag']
  #allocation36 [shape = 's32[]', space=sflag, size = 0x4, offset = 0, fixed_abs, tag = 'sflag constant byte address 0x0 - dummy sync flag']
  #allocation37 [shape = 's32[]', space=sflag, size = 0x4, offset = 0, fixed_abs, tag = 'sflag constant byte address 0x0 - dummy sync flag']
  %s0 = inlined_call_operand.hbm [shape: f32[8,256], index: 0, kind: input, shape index: {}]
  %s1 = inlined_call_operand.hbm [shape: f32[13,1,256], index: 1, kind: input, shape index: {}]
  %s2 = inlined_call_operand.hbm [shape: f32[13,256,256], index: 2, kind: input, shape index: {}]
  %s3 = inlined_call_operand.hbm [shape: f32[8,256], index: 3, kind: output, shape index: {}]
  %s4 = sld [smem:[#allocation0]]
  $region78: #{tpu_custom_call.1} parent=0
    _
  %s6 = ssub.s32 1, %s4
  %s7 = scalar_select 0, %s6, %s4
  $region1: #{tpu_custom_call.1} parent=0
    #allocation4 [shape = 'u8[8192]{0}', space=vmem, size = 0x2000, scoped, tag = 'input window, operand 0, single buffered']
    #allocation5 [shape = 's32[1]{0}', space=sflag, size = 0x4, scoped, tag = 'scoped memory for tpu_custom_call.1']
    #allocation6 [shape = 's32[1]{0}', space=sflag, size = 0x4, scoped, tag = 'scoped memory for tpu_custom_call.1']
    #allocation7 [shape = 'u8[13312]{0}', space=vmem, size = 0x3400, scoped, tag = 'input window, operand 1, single buffered']
    #allocation8 [shape = 's32[1]{0}', space=sflag, size = 0x4, scoped, tag = 'scoped memory for tpu_custom_call.1']
    #allocation9 [shape = 'u8[8192]{0}', space=vmem, size = 0x2000, scoped, tag = 'output window, operand 0, single buffered']
    %8 = vsyncpa [#allocation5], 0
    %9 = vsyncpa [#allocation8], 0
    %10 = vsyncpa [#allocation6], 0
    // Predicated region
    $region2: #{tpu_custom_call.1} parent=1 // pred_check
      _
    $region3: #{tpu_custom_call.1} parent=1 // pred_check_branch
      %12 = sbr.rel (0) target = $region5
    $region4: #{tpu_custom_call.1} parent=1 // pred_region
      %14 = vsyncadd [#allocation5], 0
      %s16 = sshll.u32 %s0, 4
      %s17 = int_to_ptr.hbm [resolvable:$true] %s16
      %s18 = sshll.u32 [#allocation4], 4
      %s19 = int_to_ptr.vmem [resolvable:$true] %s18
      %21 = dma.hbm_to_vmem [thread:$0]  %s17, 256, %s19, [#allocation5]
    $region5: #{tpu_custom_call.1} parent=1 // pred_fallthru
      _
    // Predicated region
    $region6: #{tpu_custom_call.1} parent=1 // pred_check
      _
    $region7: #{tpu_custom_call.1} parent=1 // pred_check_branch
      %23 = sbr.rel (0) target = $region9
    $region8: #{tpu_custom_call.1} parent=1 // pred_region
      %25 = vsyncadd [#allocation8], 0
      %s26 = sshll.u32 %s1, 4
      %s27 = int_to_ptr.hbm [resolvable:$true] %s26
      %s28 = sshll.u32 [#allocation7], 4
      %s29 = int_to_ptr.vmem [resolvable:$true] %s28
      %34 = dma.hbm_to_vmem [thread:$0]  %s27, 416, %s29, [#allocation8], 32, 32, 2
    $region9: #{tpu_custom_call.1} parent=1 // pred_fallthru
      _
    // Predicated region
    $region10: #{tpu_custom_call.1} parent=1 // pred_check
      _
    $region11: #{tpu_custom_call.1} parent=1 // pred_check_branch
      %36 = sbr.rel (0) target = $region13
    $region12: #{tpu_custom_call.1} parent=1 // pred_region
      %38 = dma.done [#allocation5], 256
    $region13: #{tpu_custom_call.1} parent=1 // pred_fallthru
      _
    // Predicated region
    $region14: #{tpu_custom_call.1} parent=1 // pred_check
      _
    $region15: #{tpu_custom_call.1} parent=1 // pred_check_branch
      %40 = sbr.rel (0) target = $region17
    $region16: #{tpu_custom_call.1} parent=1 // pred_region
      %42 = dma.done [#allocation8], 416
    $region17: #{tpu_custom_call.1} parent=1 // pred_fallthru
      _
    // Predicated region
    $region18: #{tpu_custom_call.1} parent=1 // pred_check
      _
    $region19: #{tpu_custom_call.1} parent=1 // pred_check_branch
      %44 = sbr.rel target = $region21
    $region20: #{tpu_custom_call.1} parent=1 // pred_region
      %45 = sst [smem:[#allocation12]] [#allocation11]
      %46 = sst [smem:[#allocation13]] [#allocation10]
    $region21: #{tpu_custom_call.1} parent=1 // pred_fallthru
      _
    %48 = shalt.err (0)
    %s50 = sshll.u32 %s2, 4
    %s51 = int_to_ptr.hbm [resolvable:$true] %s50
    %s52 = sshll.u32 [#allocation2], 4
    %s53 = int_to_ptr.vmem [resolvable:$true] %s52
    %55 = dma.hbm_to_vmem [thread:$0]  %s51, 8192, %s53, [#allocation3]
    %v56 = vld [vmem:[#allocation4] sm:$0xff]
    %v57 = vld [vmem:[#allocation4 + $0x8] sm:$0xff]
    %s58 = smul.u32 8, 32
    %s59 = smul.u32 %s58, 2
    %s60 = sshll.u32 %s59, 4
    %61 = dma.done [#allocation3], %s60
    %s62 = scalar_lea.hbm %s2, 512
    %s63 = scalar_lea.vmem [#allocation2], 512
    %s64 = scalar_lea.sflag [#allocation3], 1
    // Predicated region
    $region22: #{tpu_custom_call.1} parent=1 // pred_check
      _
    $region23: #{tpu_custom_call.1} parent=1 // pred_check_branch
      %66 = sbr.rel target = $region25
    $region24: #{tpu_custom_call.1} parent=1 // pred_region
      %67 = sst [smem:[#allocation12]] [#allocation15]
      %68 = sst [smem:[#allocation13]] [#allocation14]
    $region25: #{tpu_custom_call.1} parent=1 // pred_fallthru
      _
    %70 = shalt.err (0)
    %s72 = sshll.u32 %s62, 4
    %s73 = int_to_ptr.hbm [resolvable:$true] %s72
    %s74 = sshll.u32 %s63, 4
    %s75 = int_to_ptr.vmem [resolvable:$true] %s74
    %77 = dma.hbm_to_vmem [thread:$0]  %s73, 8192, %s75, %s64
    %v78 = vld [vmem:[#allocation2] sm:$0xff]
    %v79 = vld [vmem:[#allocation2 + $0x8] sm:$0xff]
    %v80 = vld [vmem:[#allocation2 + $0x10] sm:$0xff]
    %v81 = vld [vmem:[#allocation2 + $0x18] sm:$0xff]
    %v82 = vld [vmem:[#allocation2 + $0x20] sm:$0xff]
    %v83 = vld [vmem:[#allocation2 + $0x28] sm:$0xff]
    %v84 = vld [vmem:[#allocation2 + $0x30] sm:$0xff]
    %v85 = vld [vmem:[#allocation2 + $0x38] sm:$0xff]
    %v86 = vld [vmem:[#allocation2 + $0x40] sm:$0xff]
    %v87 = vld [vmem:[#allocation2 + $0x48] sm:$0xff]
    %v88 = vld [vmem:[#allocation2 + $0x50] sm:$0xff]
    %v89 = vld [vmem:[#allocation2 + $0x58] sm:$0xff]
    %v90 = vld [vmem:[#allocation2 + $0x60] sm:$0xff]
    %v91 = vld [vmem:[#allocation2 + $0x68] sm:$0xff]
    %v92 = vld [vmem:[#allocation2 + $0x70] sm:$0xff]
    %v93 = vld [vmem:[#allocation2 + $0x78] sm:$0xff]
    %v94 = vld [vmem:[#allocation2 + $0x80] sm:$0xff]
    %v95 = vld [vmem:[#allocation2 + $0x88] sm:$0xff]
    %v96 = vld [vmem:[#allocation2 + $0x90] sm:$0xff]
    %v97 = vld [vmem:[#allocation2 + $0x98] sm:$0xff]
    %v98 = vld [vmem:[#allocation2 + $0xa0] sm:$0xff]
    %v99 = vld [vmem:[#allocation2 + $0xa8] sm:$0xff]
    %v100 = vld [vmem:[#allocation2 + $0xb0] sm:$0xff]
    %v101 = vld [vmem:[#allocation2 + $0xb8] sm:$0xff]
    %v102 = vld [vmem:[#allocation2 + $0xc0] sm:$0xff]
    %v103 = vld [vmem:[#allocation2 + $0xc8] sm:$0xff]
    %v104 = vld [vmem:[#allocation2 + $0xd0] sm:$0xff]
    %v105 = vld [vmem:[#allocation2 + $0xd8] sm:$0xff]
    %v106 = vld [vmem:[#allocation2 + $0xe0] sm:$0xff]
    %v107 = vld [vmem:[#allocation2 + $0xe8] sm:$0xff]
    %v108 = vld [vmem:[#allocation2 + $0xf0] sm:$0xff]
    %v109 = vld [vmem:[#allocation2 + $0xf8] sm:$0xff]
    %v110 = vld [vmem:[#allocation2 + $0x100] sm:$0xff]
    %v111 = vld [vmem:[#allocation2 + $0x108] sm:$0xff]
    %v112 = vld [vmem:[#allocation2 + $0x110] sm:$0xff]
    %v113 = vld [vmem:[#allocation2 + $0x118] sm:$0xff]
    %v114 = vld [vmem:[#allocation2 + $0x120] sm:$0xff]
    %v115 = vld [vmem:[#allocation2 + $0x128] sm:$0xff]
    %v116 = vld [vmem:[#allocation2 + $0x130] sm:$0xff]
    %v117 = vld [vmem:[#allocation2 + $0x138] sm:$0xff]
    %v118 = vld [vmem:[#allocation2 + $0x140] sm:$0xff]
    %v119 = vld [vmem:[#allocation2 + $0x148] sm:$0xff]
    %v120 = vld [vmem:[#allocation2 + $0x150] sm:$0xff]
    %v121 = vld [vmem:[#allocation2 + $0x158] sm:$0xff]
    %v122 = vld [vmem:[#allocation2 + $0x160] sm:$0xff]
    %v123 = vld [vmem:[#allocation2 + $0x168] sm:$0xff]
    %v124 = vld [vmem:[#allocation2 + $0x170] sm:$0xff]
    %v125 = vld [vmem:[#allocation2 + $0x178] sm:$0xff]
    %v126 = vld [vmem:[#allocation2 + $0x180] sm:$0xff]
    %v127 = vld [vmem:[#allocation2 + $0x188] sm:$0xff]
    %v128 = vld [vmem:[#allocation2 + $0x190] sm:$0xff]
    %v129 = vld [vmem:[#allocation2 + $0x198] sm:$0xff]
    %v130 = vld [vmem:[#allocation2 + $0x1a0] sm:$0xff]
    %v131 = vld [vmem:[#allocation2 + $0x1a8] sm:$0xff]
    %v132 = vld [vmem:[#allocation2 + $0x1b0] sm:$0xff]
    %v133 = vld [vmem:[#allocation2 + $0x1b8] sm:$0xff]
    %v134 = vld [vmem:[#allocation2 + $0x1c0] sm:$0xff]
    %v135 = vld [vmem:[#allocation2 + $0x1c8] sm:$0xff]
    %v136 = vld [vmem:[#allocation2 + $0x1d0] sm:$0xff]
    %v137 = vld [vmem:[#allocation2 + $0x1d8] sm:$0xff]
    %v138 = vld [vmem:[#allocation2 + $0x1e0] sm:$0xff]
    %v139 = vld [vmem:[#allocation2 + $0x1e8] sm:$0xff]
    %v140 = vld [vmem:[#allocation2 + $0x1f0] sm:$0xff]
    %v141 = vld [vmem:[#allocation2 + $0x1f8] sm:$0xff]
    %v142 = vld [vmem:[#allocation7] sm:$0x3]
    %v144 = vperm.slane %v142, 0
    %v145 = vperm.slane %v142, 1
    %148 = vmatpush.msra.mxu0 %v108
    %149 = vmatpush.msra.mxu0 %v106
    %150 = vmatpush.msra.mxu0 %v104
    %151 = vmatpush.msra.mxu0 %v102
    %152 = vmatpush.msra.mxu0 %v100
    %153 = vmatpush.msra.mxu0 %v98
    %154 = vmatpush.msra.mxu0 %v96
    %155 = vmatpush.msra.mxu0 %v94
    %156 = vmatpush.msra.mxu0 %v92
    %157 = vmatpush.msra.mxu0 %v90
    %158 = vmatpush.msra.mxu0 %v88
    %159 = vmatpush.msra.mxu0 %v86
    %160 = vmatpush.msra.mxu0 %v84
    %161 = vmatpush.msra.mxu0 %v82
    %162 = vmatpush.msra.mxu0 %v80
    %163 = vmatpush.msra.mxu0 %v78
    %164 = vmatmul.f32.gmra.mxu0 %v56
    %v165 = vpop.f32.mrf.mxu0
    %v166 = vadd.f32 %v144, %v165
    %167 = vdwg.mxu0
    %168 = vmatpush.msra.mxu0 %v140
    %169 = vmatpush.msra.mxu0 %v138
    %170 = vmatpush.msra.mxu0 %v136
    %171 = vmatpush.msra.mxu0 %v134
    %172 = vmatpush.msra.mxu0 %v132
    %173 = vmatpush.msra.mxu0 %v130
    %174 = vmatpush.msra.mxu0 %v128
    %175 = vmatpush.msra.mxu0 %v126
    %176 = vmatpush.msra.mxu0 %v124
    %177 = vmatpush.msra.mxu0 %v122
    %178 = vmatpush.msra.mxu0 %v120
    %179 = vmatpush.msra.mxu0 %v118
    %180 = vmatpush.msra.mxu0 %v116
    %181 = vmatpush.msra.mxu0 %v114
    %182 = vmatpush.msra.mxu0 %v112
    %183 = vmatpush.msra.mxu0 %v110
    %184 = vmatmul.f32.gmra.mxu0 %v57
    %v185 = vpop.f32.mrf.mxu0
    %v186 = vadd.f32 %v166, %v185
    %187 = vdwg.mxu0
    %188 = vmatpush.msra.mxu0 %v109
    %189 = vmatpush.msra.mxu0 %v107
    %190 = vmatpush.msra.mxu0 %v105
    %191 = vmatpush.msra.mxu0 %v103
    %192 = vmatpush.msra.mxu0 %v101
    %193 = vmatpush.msra.mxu0 %v99
    %194 = vmatpush.msra.mxu0 %v97
    %195 = vmatpush.msra.mxu0 %v95
    %196 = vmatpush.msra.mxu0 %v93
    %197 = vmatpush.msra.mxu0 %v91
    %198 = vmatpush.msra.mxu0 %v89
    %199 = vmatpush.msra.mxu0 %v87
    %200 = vmatpush.msra.mxu0 %v85
    %201 = vmatpush.msra.mxu0 %v83
    %202 = vmatpush.msra.mxu0 %v81
    %203 = vmatpush.msra.mxu0 %v79
    %204 = vmatmul.f32.gmra.mxu0 %v56
    %v205 = vpop.f32.mrf.mxu0
    %v206 = vadd.f32 %v145, %v205
    %207 = vdwg.mxu0
    %208 = vmatpush.msra.mxu0 %v141
    %209 = vmatpush.msra.mxu0 %v139
    %210 = vmatpush.msra.mxu0 %v137
    %211 = vmatpush.msra.mxu0 %v135
    %212 = vmatpush.msra.mxu0 %v133
    %213 = vmatpush.msra.mxu0 %v131
    %214 = vmatpush.msra.mxu0 %v129
    %215 = vmatpush.msra.mxu0 %v127
    %216 = vmatpush.msra.mxu0 %v125
    %217 = vmatpush.msra.mxu0 %v123
    %218 = vmatpush.msra.mxu0 %v121
    %219 = vmatpush.msra.mxu0 %v119
    %220 = vmatpush.msra.mxu0 %v117
    %221 = vmatpush.msra.mxu0 %v115
    %222 = vmatpush.msra.mxu0 %v113
    %223 = vmatpush.msra.mxu0 %v111
    %224 = vmatmul.f32.gmra.mxu0 %v57
    %v225 = vpop.f32.mrf.mxu0
    %v226 = vadd.f32 %v206, %v225
    %227 = vdwg.mxu0
    %v228 = vmax.f32 %v186, 0.0
    %v229 = vmax.f32 %v226, 0.0
    %s230 = sshll.u32 %s59, 4
    %231 = dma.done %s64, %s230
    %s232 = scalar_lea.hbm %s2, 1024
    // Predicated region
    $region26: #{tpu_custom_call.1} parent=1 // pred_check
      _
    $region27: #{tpu_custom_call.1} parent=1 // pred_check_branch
      %234 = sbr.rel target = $region29
    $region28: #{tpu_custom_call.1} parent=1 // pred_region
      %235 = sst [smem:[#allocation12]] [#allocation17]
      %236 = sst [smem:[#allocation13]] [#allocation16]
    $region29: #{tpu_custom_call.1} parent=1 // pred_fallthru
      _
    %238 = shalt.err (0)
    %s240 = sshll.u32 %s232, 4
    %s241 = int_to_ptr.hbm [resolvable:$true] %s240
    %s242 = sshll.u32 [#allocation2], 4
    %s243 = int_to_ptr.vmem [resolvable:$true] %s242
    %245 = dma.hbm_to_vmem [thread:$0]  %s241, 8192, %s243, [#allocation3]
    %v246 = vld [vmem:[%s63] sm:$0xff]
    %v247 = vld [vmem:[%s63 + $0x8] sm:$0xff]
    %v248 = vld [vmem:[%s63 + $0x10] sm:$0xff]
    %v249 = vld [vmem:[%s63 + $0x18] sm:$0xff]
    %v250 = vld [vmem:[%s63 + $0x20] sm:$0xff]
    %v251 = vld [vmem:[%s63 + $0x28] sm:$0xff]
    %v252 = vld [vmem:[%s63 + $0x30] sm:$0xff]
    %v253 = vld [vmem:[%s63 + $0x38] sm:$0xff]
    %v254 = vld [vmem:[%s63 + $0x40] sm:$0xff]
    %v255 = vld [vmem:[%s63 + $0x48] sm:$0xff]
    %v256 = vld [vmem:[%s63 + $0x50] sm:$0xff]
    %v257 = vld [vmem:[%s63 + $0x58] sm:$0xff]
    %v258 = vld [vmem:[%s63 + $0x60] sm:$0xff]
    %v259 = vld [vmem:[%s63 + $0x68] sm:$0xff]
    %v260 = vld [vmem:[%s63 + $0x70] sm:$0xff]
    %v261 = vld [vmem:[%s63 + $0x78] sm:$0xff]
    %v262 = vld [vmem:[%s63 + $0x80] sm:$0xff]
    %v263 = vld [vmem:[%s63 + $0x88] sm:$0xff]
    %v264 = vld [vmem:[%s63 + $0x90] sm:$0xff]
    %v265 = vld [vmem:[%s63 + $0x98] sm:$0xff]
    %v266 = vld [vmem:[%s63 + $0xa0] sm:$0xff]
    %v267 = vld [vmem:[%s63 + $0xa8] sm:$0xff]
    %v268 = vld [vmem:[%s63 + $0xb0] sm:$0xff]
    %v269 = vld [vmem:[%s63 + $0xb8] sm:$0xff]
    %v270 = vld [vmem:[%s63 + $0xc0] sm:$0xff]
    %v271 = vld [vmem:[%s63 + $0xc8] sm:$0xff]
    %v272 = vld [vmem:[%s63 + $0xd0] sm:$0xff]
    %v273 = vld [vmem:[%s63 + $0xd8] sm:$0xff]
    %v274 = vld [vmem:[%s63 + $0xe0] sm:$0xff]
    %v275 = vld [vmem:[%s63 + $0xe8] sm:$0xff]
    %v276 = vld [vmem:[%s63 + $0xf0] sm:$0xff]
    %v277 = vld [vmem:[%s63 + $0xf8] sm:$0xff]
    %v278 = vld [vmem:[%s63 + $0x100] sm:$0xff]
    %v279 = vld [vmem:[%s63 + $0x108] sm:$0xff]
    %v280 = vld [vmem:[%s63 + $0x110] sm:$0xff]
    %v281 = vld [vmem:[%s63 + $0x118] sm:$0xff]
    %v282 = vld [vmem:[%s63 + $0x120] sm:$0xff]
    %v283 = vld [vmem:[%s63 + $0x128] sm:$0xff]
    %v284 = vld [vmem:[%s63 + $0x130] sm:$0xff]
    %v285 = vld [vmem:[%s63 + $0x138] sm:$0xff]
    %v286 = vld [vmem:[%s63 + $0x140] sm:$0xff]
    %v287 = vld [vmem:[%s63 + $0x148] sm:$0xff]
    %v288 = vld [vmem:[%s63 + $0x150] sm:$0xff]
    %v289 = vld [vmem:[%s63 + $0x158] sm:$0xff]
    %v290 = vld [vmem:[%s63 + $0x160] sm:$0xff]
    %v291 = vld [vmem:[%s63 + $0x168] sm:$0xff]
    %v292 = vld [vmem:[%s63 + $0x170] sm:$0xff]
    %v293 = vld [vmem:[%s63 + $0x178] sm:$0xff]
    %v294 = vld [vmem:[%s63 + $0x180] sm:$0xff]
    %v295 = vld [vmem:[%s63 + $0x188] sm:$0xff]
    %v296 = vld [vmem:[%s63 + $0x190] sm:$0xff]
    %v297 = vld [vmem:[%s63 + $0x198] sm:$0xff]
    %v298 = vld [vmem:[%s63 + $0x1a0] sm:$0xff]
    %v299 = vld [vmem:[%s63 + $0x1a8] sm:$0xff]
    %v300 = vld [vmem:[%s63 + $0x1b0] sm:$0xff]
    %v301 = vld [vmem:[%s63 + $0x1b8] sm:$0xff]
    %v302 = vld [vmem:[%s63 + $0x1c0] sm:$0xff]
    %v303 = vld [vmem:[%s63 + $0x1c8] sm:$0xff]
    %v304 = vld [vmem:[%s63 + $0x1d0] sm:$0xff]
    %v305 = vld [vmem:[%s63 + $0x1d8] sm:$0xff]
    %v306 = vld [vmem:[%s63 + $0x1e0] sm:$0xff]
    %v307 = vld [vmem:[%s63 + $0x1e8] sm:$0xff]
    %v308 = vld [vmem:[%s63 + $0x1f0] sm:$0xff]
    %v309 = vld [vmem:[%s63 + $0x1f8] sm:$0xff]
    %s310 = scalar_lea.vmem [#allocation7], 2
    %v311 = vld [vmem:[%s310] sm:$0x3]
    %v313 = vperm.slane %v311, 0
    %v314 = vperm.slane %v311, 1
    %317 = vmatpush.msra.mxu0 %v276
    %318 = vmatpush.msra.mxu0 %v274
    %319 = vmatpush.msra.mxu0 %v272
    %320 = vmatpush.msra.mxu0 %v270
    %321 = vmatpush.msra.mxu0 %v268
    %322 = vmatpush.msra.mxu0 %v266
    %323 = vmatpush.msra.mxu0 %v264
    %324 = vmatpush.msra.mxu0 %v262
    %325 = vmatpush.msra.mxu0 %v260
    %326 = vmatpush.msra.mxu0 %v258
    %327 = vmatpush.msra.mxu0 %v256
    %328 = vmatpush.msra.mxu0 %v254
    %329 = vmatpush.msra.mxu0 %v252
    %330 = vmatpush.msra.mxu0 %v250
    %331 = vmatpush.msra.mxu0 %v248
    %332 = vmatpush.msra.mxu0 %v246
    %333 = vmatmul.f32.gmra.mxu0 %v228
    %v334 = vpop.f32.mrf.mxu0
    %v335 = vadd.f32 %v313, %v334
    %336 = vdwg.mxu0
    %337 = vmatpush.msra.mxu0 %v308
    %338 = vmatpush.msra.mxu0 %v306
    %339 = vmatpush.msra.mxu0 %v304
    %340 = vmatpush.msra.mxu0 %v302
    %341 = vmatpush.msra.mxu0 %v300
    %342 = vmatpush.msra.mxu0 %v298
    %343 = vmatpush.msra.mxu0 %v296
    %344 = vmatpush.msra.mxu0 %v294
    %345 = vmatpush.msra.mxu0 %v292
    %346 = vmatpush.msra.mxu0 %v290
    %347 = vmatpush.msra.mxu0 %v288
    %348 = vmatpush.msra.mxu0 %v286
    %349 = vmatpush.msra.mxu0 %v284
    %350 = vmatpush.msra.mxu0 %v282
    %351 = vmatpush.msra.mxu0 %v280
    %352 = vmatpush.msra.mxu0 %v278
    %353 = vmatmul.f32.gmra.mxu0 %v229
    %v354 = vpop.f32.mrf.mxu0
    %v355 = vadd.f32 %v335, %v354
    %356 = vdwg.mxu0
    %357 = vmatpush.msra.mxu0 %v277
    %358 = vmatpush.msra.mxu0 %v275
    %359 = vmatpush.msra.mxu0 %v273
    %360 = vmatpush.msra.mxu0 %v271
    %361 = vmatpush.msra.mxu0 %v269
    %362 = vmatpush.msra.mxu0 %v267
    %363 = vmatpush.msra.mxu0 %v265
    %364 = vmatpush.msra.mxu0 %v263
    %365 = vmatpush.msra.mxu0 %v261
    %366 = vmatpush.msra.mxu0 %v259
    %367 = vmatpush.msra.mxu0 %v257
    %368 = vmatpush.msra.mxu0 %v255
    %369 = vmatpush.msra.mxu0 %v253
    %370 = vmatpush.msra.mxu0 %v251
    %371 = vmatpush.msra.mxu0 %v249
    %372 = vmatpush.msra.mxu0 %v247
    %373 = vmatmul.f32.gmra.mxu0 %v228
    %v374 = vpop.f32.mrf.mxu0
    %v375 = vadd.f32 %v314, %v374
    %376 = vdwg.mxu0
    %377 = vmatpush.msra.mxu0 %v309
    %378 = vmatpush.msra.mxu0 %v307
    %379 = vmatpush.msra.mxu0 %v305
    %380 = vmatpush.msra.mxu0 %v303
    %381 = vmatpush.msra.mxu0 %v301
    %382 = vmatpush.msra.mxu0 %v299
    %383 = vmatpush.msra.mxu0 %v297
    %384 = vmatpush.msra.mxu0 %v295
    %385 = vmatpush.msra.mxu0 %v293
    %386 = vmatpush.msra.mxu0 %v291
    %387 = vmatpush.msra.mxu0 %v289
    %388 = vmatpush.msra.mxu0 %v287
    %389 = vmatpush.msra.mxu0 %v285
    %390 = vmatpush.msra.mxu0 %v283
    %391 = vmatpush.msra.mxu0 %v281
    %392 = vmatpush.msra.mxu0 %v279
    %393 = vmatmul.f32.gmra.mxu0 %v229
    %v394 = vpop.f32.mrf.mxu0
    %v395 = vadd.f32 %v375, %v394
    %396 = vdwg.mxu0
    %v397 = vmax.f32 %v355, 0.0
    %v398 = vmax.f32 %v395, 0.0
    %s399 = sshll.u32 %s59, 4
    %400 = dma.done [#allocation3], %s399
    %s401 = scalar_lea.hbm %s2, 1536
    // Predicated region
    $region30: #{tpu_custom_call.1} parent=1 // pred_check
      _
    $region31: #{tpu_custom_call.1} parent=1 // pred_check_branch
      %403 = sbr.rel target = $region33
    $region32: #{tpu_custom_call.1} parent=1 // pred_region
      %404 = sst [smem:[#allocation12]] [#allocation19]
      %405 = sst [smem:[#allocation13]] [#allocation18]
    $region33: #{tpu_custom_call.1} parent=1 // pred_fallthru
      _
    %407 = shalt.err (0)
    %s409 = sshll.u32 %s401, 4
    %s410 = int_to_ptr.hbm [resolvable:$true] %s409
    %s411 = sshll.u32 %s63, 4
    %s412 = int_to_ptr.vmem [resolvable:$true] %s411
    %414 = dma.hbm_to_vmem [thread:$0]  %s410, 8192, %s412, %s64
    %v415 = vld [vmem:[#allocation2] sm:$0xff]
    %v416 = vld [vmem:[#allocation2 + $0x8] sm:$0xff]
    %v417 = vld [vmem:[#allocation2 + $0x10] sm:$0xff]
    %v418 = vld [vmem:[#allocation2 + $0x18] sm:$0xff]
    %v419 = vld [vmem:[#allocation2 + $0x20] sm:$0xff]
    %v420 = vld [vmem:[#allocation2 + $0x28] sm:$0xff]
    %v421 = vld [vmem:[#allocation2 + $0x30] sm:$0xff]
    %v422 = vld [vmem:[#allocation2 + $0x38] sm:$0xff]
    %v423 = vld [vmem:[#allocation2 + $0x40] sm:$0xff]
    %v424 = vld [vmem:[#allocation2 + $0x48] sm:$0xff]
    %v425 = vld [vmem:[#allocation2 + $0x50] sm:$0xff]
    %v426 = vld [vmem:[#allocation2 + $0x58] sm:$0xff]
    %v427 = vld [vmem:[#allocation2 + $0x60] sm:$0xff]
    %v428 = vld [vmem:[#allocation2 + $0x68] sm:$0xff]
    %v429 = vld [vmem:[#allocation2 + $0x70] sm:$0xff]
    %v430 = vld [vmem:[#allocation2 + $0x78] sm:$0xff]
    %v431 = vld [vmem:[#allocation2 + $0x80] sm:$0xff]
    %v432 = vld [vmem:[#allocation2 + $0x88] sm:$0xff]
    %v433 = vld [vmem:[#allocation2 + $0x90] sm:$0xff]
    %v434 = vld [vmem:[#allocation2 + $0x98] sm:$0xff]
    %v435 = vld [vmem:[#allocation2 + $0xa0] sm:$0xff]
    %v436 = vld [vmem:[#allocation2 + $0xa8] sm:$0xff]
    %v437 = vld [vmem:[#allocation2 + $0xb0] sm:$0xff]
    %v438 = vld [vmem:[#allocation2 + $0xb8] sm:$0xff]
    %v439 = vld [vmem:[#allocation2 + $0xc0] sm:$0xff]
    %v440 = vld [vmem:[#allocation2 + $0xc8] sm:$0xff]
    %v441 = vld [vmem:[#allocation2 + $0xd0] sm:$0xff]
    %v442 = vld [vmem:[#allocation2 + $0xd8] sm:$0xff]
    %v443 = vld [vmem:[#allocation2 + $0xe0] sm:$0xff]
    %v444 = vld [vmem:[#allocation2 + $0xe8] sm:$0xff]
    %v445 = vld [vmem:[#allocation2 + $0xf0] sm:$0xff]
    %v446 = vld [vmem:[#allocation2 + $0xf8] sm:$0xff]
    %v447 = vld [vmem:[#allocation2 + $0x100] sm:$0xff]
    %v448 = vld [vmem:[#allocation2 + $0x108] sm:$0xff]
    %v449 = vld [vmem:[#allocation2 + $0x110] sm:$0xff]
    %v450 = vld [vmem:[#allocation2 + $0x118] sm:$0xff]
    %v451 = vld [vmem:[#allocation2 + $0x120] sm:$0xff]
    %v452 = vld [vmem:[#allocation2 + $0x128] sm:$0xff]
    %v453 = vld [vmem:[#allocation2 + $0x130] sm:$0xff]
    %v454 = vld [vmem:[#allocation2 + $0x138] sm:$0xff]
    %v455 = vld [vmem:[#allocation2 + $0x140] sm:$0xff]
    %v456 = vld [vmem:[#allocation2 + $0x148] sm:$0xff]
    %v457 = vld [vmem:[#allocation2 + $0x150] sm:$0xff]
    %v458 = vld [vmem:[#allocation2 + $0x158] sm:$0xff]
    %v459 = vld [vmem:[#allocation2 + $0x160] sm:$0xff]
    %v460 = vld [vmem:[#allocation2 + $0x168] sm:$0xff]
    %v461 = vld [vmem:[#allocation2 + $0x170] sm:$0xff]
    %v462 = vld [vmem:[#allocation2 + $0x178] sm:$0xff]
    %v463 = vld [vmem:[#allocation2 + $0x180] sm:$0xff]
    %v464 = vld [vmem:[#allocation2 + $0x188] sm:$0xff]
    %v465 = vld [vmem:[#allocation2 + $0x190] sm:$0xff]
    %v466 = vld [vmem:[#allocation2 + $0x198] sm:$0xff]
    %v467 = vld [vmem:[#allocation2 + $0x1a0] sm:$0xff]
    %v468 = vld [vmem:[#allocation2 + $0x1a8] sm:$0xff]
    %v469 = vld [vmem:[#allocation2 + $0x1b0] sm:$0xff]
    %v470 = vld [vmem:[#allocation2 + $0x1b8] sm:$0xff]
    %v471 = vld [vmem:[#allocation2 + $0x1c0] sm:$0xff]
    %v472 = vld [vmem:[#allocation2 + $0x1c8] sm:$0xff]
    %v473 = vld [vmem:[#allocation2 + $0x1d0] sm:$0xff]
    %v474 = vld [vmem:[#allocation2 + $0x1d8] sm:$0xff]
    %v475 = vld [vmem:[#allocation2 + $0x1e0] sm:$0xff]
    %v476 = vld [vmem:[#allocation2 + $0x1e8] sm:$0xff]
    %v477 = vld [vmem:[#allocation2 + $0x1f0] sm:$0xff]
    %v478 = vld [vmem:[#allocation2 + $0x1f8] sm:$0xff]
    %s479 = scalar_lea.vmem [#allocation7], 4
    %v480 = vld [vmem:[%s479] sm:$0x3]
    %v482 = vperm.slane %v480, 0
    %v483 = vperm.slane %v480, 1
    %486 = vmatpush.msra.mxu0 %v445
    %487 = vmatpush.msra.mxu0 %v443
    %488 = vmatpush.msra.mxu0 %v441
    %489 = vmatpush.msra.mxu0 %v439
    %490 = vmatpush.msra.mxu0 %v437
    %491 = vmatpush.msra.mxu0 %v435
    %492 = vmatpush.msra.mxu0 %v433
    %493 = vmatpush.msra.mxu0 %v431
    %494 = vmatpush.msra.mxu0 %v429
    %495 = vmatpush.msra.mxu0 %v427
    %496 = vmatpush.msra.mxu0 %v425
    %497 = vmatpush.msra.mxu0 %v423
    %498 = vmatpush.msra.mxu0 %v421
    %499 = vmatpush.msra.mxu0 %v419
    %500 = vmatpush.msra.mxu0 %v417
    %501 = vmatpush.msra.mxu0 %v415
    %502 = vmatmul.f32.gmra.mxu0 %v397
    %v503 = vpop.f32.mrf.mxu0
    %v504 = vadd.f32 %v482, %v503
    %505 = vdwg.mxu0
    %506 = vmatpush.msra.mxu0 %v477
    %507 = vmatpush.msra.mxu0 %v475
    %508 = vmatpush.msra.mxu0 %v473
    %509 = vmatpush.msra.mxu0 %v471
    %510 = vmatpush.msra.mxu0 %v469
    %511 = vmatpush.msra.mxu0 %v467
    %512 = vmatpush.msra.mxu0 %v465
    %513 = vmatpush.msra.mxu0 %v463
    %514 = vmatpush.msra.mxu0 %v461
    %515 = vmatpush.msra.mxu0 %v459
    %516 = vmatpush.msra.mxu0 %v457
    %517 = vmatpush.msra.mxu0 %v455
    %518 = vmatpush.msra.mxu0 %v453
    %519 = vmatpush.msra.mxu0 %v451
    %520 = vmatpush.msra.mxu0 %v449
    %521 = vmatpush.msra.mxu0 %v447
    %522 = vmatmul.f32.gmra.mxu0 %v398
    %v523 = vpop.f32.mrf.mxu0
    %v524 = vadd.f32 %v504, %v523
    %525 = vdwg.mxu0
    %526 = vmatpush.msra.mxu0 %v446
    %527 = vmatpush.msra.mxu0 %v444
    %528 = vmatpush.msra.mxu0 %v442
    %529 = vmatpush.msra.mxu0 %v440
    %530 = vmatpush.msra.mxu0 %v438
    %531 = vmatpush.msra.mxu0 %v436
    %532 = vmatpush.msra.mxu0 %v434
    %533 = vmatpush.msra.mxu0 %v432
    %534 = vmatpush.msra.mxu0 %v430
    %535 = vmatpush.msra.mxu0 %v428
    %536 = vmatpush.msra.mxu0 %v426
    %537 = vmatpush.msra.mxu0 %v424
    %538 = vmatpush.msra.mxu0 %v422
    %539 = vmatpush.msra.mxu0 %v420
    %540 = vmatpush.msra.mxu0 %v418
    %541 = vmatpush.msra.mxu0 %v416
    %542 = vmatmul.f32.gmra.mxu0 %v397
    %v543 = vpop.f32.mrf.mxu0
    %v544 = vadd.f32 %v483, %v543
    %545 = vdwg.mxu0
    %546 = vmatpush.msra.mxu0 %v478
    %547 = vmatpush.msra.mxu0 %v476
    %548 = vmatpush.msra.mxu0 %v474
    %549 = vmatpush.msra.mxu0 %v472
    %550 = vmatpush.msra.mxu0 %v470
    %551 = vmatpush.msra.mxu0 %v468
    %552 = vmatpush.msra.mxu0 %v466
    %553 = vmatpush.msra.mxu0 %v464
    %554 = vmatpush.msra.mxu0 %v462
    %555 = vmatpush.msra.mxu0 %v460
    %556 = vmatpush.msra.mxu0 %v458
    %557 = vmatpush.msra.mxu0 %v456
    %558 = vmatpush.msra.mxu0 %v454
    %559 = vmatpush.msra.mxu0 %v452
    %560 = vmatpush.msra.mxu0 %v450
    %561 = vmatpush.msra.mxu0 %v448
    %562 = vmatmul.f32.gmra.mxu0 %v398
    %v563 = vpop.f32.mrf.mxu0
    %v564 = vadd.f32 %v544, %v563
    %565 = vdwg.mxu0
    %v566 = vmax.f32 %v524, 0.0
    %v567 = vmax.f32 %v564, 0.0
    %s568 = sshll.u32 %s59, 4
    %569 = dma.done %s64, %s568
    %s570 = scalar_lea.hbm %s2, 2048
    // Predicated region
    $region34: #{tpu_custom_call.1} parent=1 // pred_check
      _
    $region35: #{tpu_custom_call.1} parent=1 // pred_check_branch
      %572 = sbr.rel target = $region37
    $region36: #{tpu_custom_call.1} parent=1 // pred_region
      %573 = sst [smem:[#allocation12]] [#allocation21]
      %574 = sst [smem:[#allocation13]] [#allocation20]
    $region37: #{tpu_custom_call.1} parent=1 // pred_fallthru
      _
    %576 = shalt.err (0)
    %s578 = sshll.u32 %s570, 4
    %s579 = int_to_ptr.hbm [resolvable:$true] %s578
    %s580 = sshll.u32 [#allocation2], 4
    %s581 = int_to_ptr.vmem [resolvable:$true] %s580
    %583 = dma.hbm_to_vmem [thread:$0]  %s579, 8192, %s581, [#allocation3]
    %v584 = vld [vmem:[%s63] sm:$0xff]
    %v585 = vld [vmem:[%s63 + $0x8] sm:$0xff]
    %v586 = vld [vmem:[%s63 + $0x10] sm:$0xff]
    %v587 = vld [vmem:[%s63 + $0x18] sm:$0xff]
    %v588 = vld [vmem:[%s63 + $0x20] sm:$0xff]
    %v589 = vld [vmem:[%s63 + $0x28] sm:$0xff]
    %v590 = vld [vmem:[%s63 + $0x30] sm:$0xff]
    %v591 = vld [vmem:[%s63 + $0x38] sm:$0xff]
    %v592 = vld [vmem:[%s63 + $0x40] sm:$0xff]
    %v593 = vld [vmem:[%s63 + $0x48] sm:$0xff]
    %v594 = vld [vmem:[%s63 + $0x50] sm:$0xff]
    %v595 = vld [vmem:[%s63 + $0x58] sm:$0xff]
    %v596 = vld [vmem:[%s63 + $0x60] sm:$0xff]
    %v597 = vld [vmem:[%s63 + $0x68] sm:$0xff]
    %v598 = vld [vmem:[%s63 + $0x70] sm:$0xff]
    %v599 = vld [vmem:[%s63 + $0x78] sm:$0xff]
    %v600 = vld [vmem:[%s63 + $0x80] sm:$0xff]
    %v601 = vld [vmem:[%s63 + $0x88] sm:$0xff]
    %v602 = vld [vmem:[%s63 + $0x90] sm:$0xff]
    %v603 = vld [vmem:[%s63 + $0x98] sm:$0xff]
    %v604 = vld [vmem:[%s63 + $0xa0] sm:$0xff]
    %v605 = vld [vmem:[%s63 + $0xa8] sm:$0xff]
    %v606 = vld [vmem:[%s63 + $0xb0] sm:$0xff]
    %v607 = vld [vmem:[%s63 + $0xb8] sm:$0xff]
    %v608 = vld [vmem:[%s63 + $0xc0] sm:$0xff]
    %v609 = vld [vmem:[%s63 + $0xc8] sm:$0xff]
    %v610 = vld [vmem:[%s63 + $0xd0] sm:$0xff]
    %v611 = vld [vmem:[%s63 + $0xd8] sm:$0xff]
    %v612 = vld [vmem:[%s63 + $0xe0] sm:$0xff]
    %v613 = vld [vmem:[%s63 + $0xe8] sm:$0xff]
    %v614 = vld [vmem:[%s63 + $0xf0] sm:$0xff]
    %v615 = vld [vmem:[%s63 + $0xf8] sm:$0xff]
    %v616 = vld [vmem:[%s63 + $0x100] sm:$0xff]
    %v617 = vld [vmem:[%s63 + $0x108] sm:$0xff]
    %v618 = vld [vmem:[%s63 + $0x110] sm:$0xff]
    %v619 = vld [vmem:[%s63 + $0x118] sm:$0xff]
    %v620 = vld [vmem:[%s63 + $0x120] sm:$0xff]
    %v621 = vld [vmem:[%s63 + $0x128] sm:$0xff]
    %v622 = vld [vmem:[%s63 + $0x130] sm:$0xff]
    %v623 = vld [vmem:[%s63 + $0x138] sm:$0xff]
    %v624 = vld [vmem:[%s63 + $0x140] sm:$0xff]
    %v625 = vld [vmem:[%s63 + $0x148] sm:$0xff]
    %v626 = vld [vmem:[%s63 + $0x150] sm:$0xff]
    %v627 = vld [vmem:[%s63 + $0x158] sm:$0xff]
    %v628 = vld [vmem:[%s63 + $0x160] sm:$0xff]
    %v629 = vld [vmem:[%s63 + $0x168] sm:$0xff]
    %v630 = vld [vmem:[%s63 + $0x170] sm:$0xff]
    %v631 = vld [vmem:[%s63 + $0x178] sm:$0xff]
    %v632 = vld [vmem:[%s63 + $0x180] sm:$0xff]
    %v633 = vld [vmem:[%s63 + $0x188] sm:$0xff]
    %v634 = vld [vmem:[%s63 + $0x190] sm:$0xff]
    %v635 = vld [vmem:[%s63 + $0x198] sm:$0xff]
    %v636 = vld [vmem:[%s63 + $0x1a0] sm:$0xff]
    %v637 = vld [vmem:[%s63 + $0x1a8] sm:$0xff]
    %v638 = vld [vmem:[%s63 + $0x1b0] sm:$0xff]
    %v639 = vld [vmem:[%s63 + $0x1b8] sm:$0xff]
    %v640 = vld [vmem:[%s63 + $0x1c0] sm:$0xff]
    %v641 = vld [vmem:[%s63 + $0x1c8] sm:$0xff]
    %v642 = vld [vmem:[%s63 + $0x1d0] sm:$0xff]
    %v643 = vld [vmem:[%s63 + $0x1d8] sm:$0xff]
    %v644 = vld [vmem:[%s63 + $0x1e0] sm:$0xff]
    %v645 = vld [vmem:[%s63 + $0x1e8] sm:$0xff]
    %v646 = vld [vmem:[%s63 + $0x1f0] sm:$0xff]
    %v647 = vld [vmem:[%s63 + $0x1f8] sm:$0xff]
    %s648 = scalar_lea.vmem [#allocation7], 6
    %v649 = vld [vmem:[%s648] sm:$0x3]
    %v651 = vperm.slane %v649, 0
    %v652 = vperm.slane %v649, 1
    %655 = vmatpush.msra.mxu0 %v614
    %656 = vmatpush.msra.mxu0 %v612
    %657 = vmatpush.msra.mxu0 %v610
    %658 = vmatpush.msra.mxu0 %v608
    %659 = vmatpush.msra.mxu0 %v606
    %660 = vmatpush.msra.mxu0 %v604
    %661 = vmatpush.msra.mxu0 %v602
    %662 = vmatpush.msra.mxu0 %v600
    %663 = vmatpush.msra.mxu0 %v598
    %664 = vmatpush.msra.mxu0 %v596
    %665 = vmatpush.msra.mxu0 %v594
    %666 = vmatpush.msra.mxu0 %v592
    %667 = vmatpush.msra.mxu0 %v590
    %668 = vmatpush.msra.mxu0 %v588
    %669 = vmatpush.msra.mxu0 %v586
    %670 = vmatpush.msra.mxu0 %v584
    %671 = vmatmul.f32.gmra.mxu0 %v566
    %v672 = vpop.f32.mrf.mxu0
    %v673 = vadd.f32 %v651, %v672
    %674 = vdwg.mxu0
    %675 = vmatpush.msra.mxu0 %v646
    %676 = vmatpush.msra.mxu0 %v644
    %677 = vmatpush.msra.mxu0 %v642
    %678 = vmatpush.msra.mxu0 %v640
    %679 = vmatpush.msra.mxu0 %v638
    %680 = vmatpush.msra.mxu0 %v636
    %681 = vmatpush.msra.mxu0 %v634
    %682 = vmatpush.msra.mxu0 %v632
    %683 = vmatpush.msra.mxu0 %v630
    %684 = vmatpush.msra.mxu0 %v628
    %685 = vmatpush.msra.mxu0 %v626
    %686 = vmatpush.msra.mxu0 %v624
    %687 = vmatpush.msra.mxu0 %v622
    %688 = vmatpush.msra.mxu0 %v620
    %689 = vmatpush.msra.mxu0 %v618
    %690 = vmatpush.msra.mxu0 %v616
    %691 = vmatmul.f32.gmra.mxu0 %v567
    %v692 = vpop.f32.mrf.mxu0
    %v693 = vadd.f32 %v673, %v692
    %694 = vdwg.mxu0
    %695 = vmatpush.msra.mxu0 %v615
    %696 = vmatpush.msra.mxu0 %v613
    %697 = vmatpush.msra.mxu0 %v611
    %698 = vmatpush.msra.mxu0 %v609
    %699 = vmatpush.msra.mxu0 %v607
    %700 = vmatpush.msra.mxu0 %v605
    %701 = vmatpush.msra.mxu0 %v603
    %702 = vmatpush.msra.mxu0 %v601
    %703 = vmatpush.msra.mxu0 %v599
    %704 = vmatpush.msra.mxu0 %v597
    %705 = vmatpush.msra.mxu0 %v595
    %706 = vmatpush.msra.mxu0 %v593
    %707 = vmatpush.msra.mxu0 %v591
    %708 = vmatpush.msra.mxu0 %v589
    %709 = vmatpush.msra.mxu0 %v587
    %710 = vmatpush.msra.mxu0 %v585
    %711 = vmatmul.f32.gmra.mxu0 %v566
    %v712 = vpop.f32.mrf.mxu0
    %v713 = vadd.f32 %v652, %v712
    %714 = vdwg.mxu0
    %715 = vmatpush.msra.mxu0 %v647
    %716 = vmatpush.msra.mxu0 %v645
    %717 = vmatpush.msra.mxu0 %v643
    %718 = vmatpush.msra.mxu0 %v641
    %719 = vmatpush.msra.mxu0 %v639
    %720 = vmatpush.msra.mxu0 %v637
    %721 = vmatpush.msra.mxu0 %v635
    %722 = vmatpush.msra.mxu0 %v633
    %723 = vmatpush.msra.mxu0 %v631
    %724 = vmatpush.msra.mxu0 %v629
    %725 = vmatpush.msra.mxu0 %v627
    %726 = vmatpush.msra.mxu0 %v625
    %727 = vmatpush.msra.mxu0 %v623
    %728 = vmatpush.msra.mxu0 %v621
    %729 = vmatpush.msra.mxu0 %v619
    %730 = vmatpush.msra.mxu0 %v617
    %731 = vmatmul.f32.gmra.mxu0 %v567
    %v732 = vpop.f32.mrf.mxu0
    %v733 = vadd.f32 %v713, %v732
    %734 = vdwg.mxu0
    %v735 = vmax.f32 %v693, 0.0
    %v736 = vmax.f32 %v733, 0.0
    %s737 = sshll.u32 %s59, 4
    %738 = dma.done [#allocation3], %s737
    %s739 = scalar_lea.hbm %s2, 2560
    // Predicated region
    $region38: #{tpu_custom_call.1} parent=1 // pred_check
      _
    $region39: #{tpu_custom_call.1} parent=1 // pred_check_branch
      %741 = sbr.rel target = $region41
    $region40: #{tpu_custom_call.1} parent=1 // pred_region
      %742 = sst [smem:[#allocation12]] [#allocation23]
      %743 = sst [smem:[#allocation13]] [#allocation22]
    $region41: #{tpu_custom_call.1} parent=1 // pred_fallthru
      _
    %745 = shalt.err (0)
    %s747 = sshll.u32 %s739, 4
    %s748 = int_to_ptr.hbm [resolvable:$true] %s747
    %s749 = sshll.u32 %s63, 4
    %s750 = int_to_ptr.vmem [resolvable:$true] %s749
    %752 = dma.hbm_to_vmem [thread:$0]  %s748, 8192, %s750, %s64
    %v753 = vld [vmem:[#allocation2] sm:$0xff]
    %v754 = vld [vmem:[#allocation2 + $0x8] sm:$0xff]
    %v755 = vld [vmem:[#allocation2 + $0x10] sm:$0xff]
    %v756 = vld [vmem:[#allocation2 + $0x18] sm:$0xff]
    %v757 = vld [vmem:[#allocation2 + $0x20] sm:$0xff]
    %v758 = vld [vmem:[#allocation2 + $0x28] sm:$0xff]
    %v759 = vld [vmem:[#allocation2 + $0x30] sm:$0xff]
    %v760 = vld [vmem:[#allocation2 + $0x38] sm:$0xff]
    %v761 = vld [vmem:[#allocation2 + $0x40] sm:$0xff]
    %v762 = vld [vmem:[#allocation2 + $0x48] sm:$0xff]
    %v763 = vld [vmem:[#allocation2 + $0x50] sm:$0xff]
    %v764 = vld [vmem:[#allocation2 + $0x58] sm:$0xff]
    %v765 = vld [vmem:[#allocation2 + $0x60] sm:$0xff]
    %v766 = vld [vmem:[#allocation2 + $0x68] sm:$0xff]
    %v767 = vld [vmem:[#allocation2 + $0x70] sm:$0xff]
    %v768 = vld [vmem:[#allocation2 + $0x78] sm:$0xff]
    %v769 = vld [vmem:[#allocation2 + $0x80] sm:$0xff]
    %v770 = vld [vmem:[#allocation2 + $0x88] sm:$0xff]
    %v771 = vld [vmem:[#allocation2 + $0x90] sm:$0xff]
    %v772 = vld [vmem:[#allocation2 + $0x98] sm:$0xff]
    %v773 = vld [vmem:[#allocation2 + $0xa0] sm:$0xff]
    %v774 = vld [vmem:[#allocation2 + $0xa8] sm:$0xff]
    %v775 = vld [vmem:[#allocation2 + $0xb0] sm:$0xff]
    %v776 = vld [vmem:[#allocation2 + $0xb8] sm:$0xff]
    %v777 = vld [vmem:[#allocation2 + $0xc0] sm:$0xff]
    %v778 = vld [vmem:[#allocation2 + $0xc8] sm:$0xff]
    %v779 = vld [vmem:[#allocation2 + $0xd0] sm:$0xff]
    %v780 = vld [vmem:[#allocation2 + $0xd8] sm:$0xff]
    %v781 = vld [vmem:[#allocation2 + $0xe0] sm:$0xff]
    %v782 = vld [vmem:[#allocation2 + $0xe8] sm:$0xff]
    %v783 = vld [vmem:[#allocation2 + $0xf0] sm:$0xff]
    %v784 = vld [vmem:[#allocation2 + $0xf8] sm:$0xff]
    %v785 = vld [vmem:[#allocation2 + $0x100] sm:$0xff]
    %v786 = vld [vmem:[#allocation2 + $0x108] sm:$0xff]
    %v787 = vld [vmem:[#allocation2 + $0x110] sm:$0xff]
    %v788 = vld [vmem:[#allocation2 + $0x118] sm:$0xff]
    %v789 = vld [vmem:[#allocation2 + $0x120] sm:$0xff]
    %v790 = vld [vmem:[#allocation2 + $0x128] sm:$0xff]
    %v791 = vld [vmem:[#allocation2 + $0x130] sm:$0xff]
    %v792 = vld [vmem:[#allocation2 + $0x138] sm:$0xff]
    %v793 = vld [vmem:[#allocation2 + $0x140] sm:$0xff]
    %v794 = vld [vmem:[#allocation2 + $0x148] sm:$0xff]
    %v795 = vld [vmem:[#allocation2 + $0x150] sm:$0xff]
    %v796 = vld [vmem:[#allocation2 + $0x158] sm:$0xff]
    %v797 = vld [vmem:[#allocation2 + $0x160] sm:$0xff]
    %v798 = vld [vmem:[#allocation2 + $0x168] sm:$0xff]
    %v799 = vld [vmem:[#allocation2 + $0x170] sm:$0xff]
    %v800 = vld [vmem:[#allocation2 + $0x178] sm:$0xff]
    %v801 = vld [vmem:[#allocation2 + $0x180] sm:$0xff]
    %v802 = vld [vmem:[#allocation2 + $0x188] sm:$0xff]
    %v803 = vld [vmem:[#allocation2 + $0x190] sm:$0xff]
    %v804 = vld [vmem:[#allocation2 + $0x198] sm:$0xff]
    %v805 = vld [vmem:[#allocation2 + $0x1a0] sm:$0xff]
    %v806 = vld [vmem:[#allocation2 + $0x1a8] sm:$0xff]
    %v807 = vld [vmem:[#allocation2 + $0x1b0] sm:$0xff]
    %v808 = vld [vmem:[#allocation2 + $0x1b8] sm:$0xff]
    %v809 = vld [vmem:[#allocation2 + $0x1c0] sm:$0xff]
    %v810 = vld [vmem:[#allocation2 + $0x1c8] sm:$0xff]
    %v811 = vld [vmem:[#allocation2 + $0x1d0] sm:$0xff]
    %v812 = vld [vmem:[#allocation2 + $0x1d8] sm:$0xff]
    %v813 = vld [vmem:[#allocation2 + $0x1e0] sm:$0xff]
    %v814 = vld [vmem:[#allocation2 + $0x1e8] sm:$0xff]
    %v815 = vld [vmem:[#allocation2 + $0x1f0] sm:$0xff]
    %v816 = vld [vmem:[#allocation2 + $0x1f8] sm:$0xff]
    %s817 = scalar_lea.vmem [#allocation7], 8
    %v818 = vld [vmem:[%s817] sm:$0x3]
    %v820 = vperm.slane %v818, 0
    %v821 = vperm.slane %v818, 1
    %824 = vmatpush.msra.mxu0 %v783
    %825 = vmatpush.msra.mxu0 %v781
    %826 = vmatpush.msra.mxu0 %v779
    %827 = vmatpush.msra.mxu0 %v777
    %828 = vmatpush.msra.mxu0 %v775
    %829 = vmatpush.msra.mxu0 %v773
    %830 = vmatpush.msra.mxu0 %v771
    %831 = vmatpush.msra.mxu0 %v769
    %832 = vmatpush.msra.mxu0 %v767
    %833 = vmatpush.msra.mxu0 %v765
    %834 = vmatpush.msra.mxu0 %v763
    %835 = vmatpush.msra.mxu0 %v761
    %836 = vmatpush.msra.mxu0 %v759
    %837 = vmatpush.msra.mxu0 %v757
    %838 = vmatpush.msra.mxu0 %v755
    %839 = vmatpush.msra.mxu0 %v753
    %840 = vmatmul.f32.gmra.mxu0 %v735
    %v841 = vpop.f32.mrf.mxu0
    %v842 = vadd.f32 %v820, %v841
    %843 = vdwg.mxu0
    %844 = vmatpush.msra.mxu0 %v815
    %845 = vmatpush.msra.mxu0 %v813
    %846 = vmatpush.msra.mxu0 %v811
    %847 = vmatpush.msra.mxu0 %v809
    %848 = vmatpush.msra.mxu0 %v807
    %849 = vmatpush.msra.mxu0 %v805
    %850 = vmatpush.msra.mxu0 %v803
    %851 = vmatpush.msra.mxu0 %v801
    %852 = vmatpush.msra.mxu0 %v799
    %853 = vmatpush.msra.mxu0 %v797
    %854 = vmatpush.msra.mxu0 %v795
    %855 = vmatpush.msra.mxu0 %v793
    %856 = vmatpush.msra.mxu0 %v791
    %857 = vmatpush.msra.mxu0 %v789
    %858 = vmatpush.msra.mxu0 %v787
    %859 = vmatpush.msra.mxu0 %v785
    %860 = vmatmul.f32.gmra.mxu0 %v736
    %v861 = vpop.f32.mrf.mxu0
    %v862 = vadd.f32 %v842, %v861
    %863 = vdwg.mxu0
    %864 = vmatpush.msra.mxu0 %v784
    %865 = vmatpush.msra.mxu0 %v782
    %866 = vmatpush.msra.mxu0 %v780
    %867 = vmatpush.msra.mxu0 %v778
    %868 = vmatpush.msra.mxu0 %v776
    %869 = vmatpush.msra.mxu0 %v774
    %870 = vmatpush.msra.mxu0 %v772
    %871 = vmatpush.msra.mxu0 %v770
    %872 = vmatpush.msra.mxu0 %v768
    %873 = vmatpush.msra.mxu0 %v766
    %874 = vmatpush.msra.mxu0 %v764
    %875 = vmatpush.msra.mxu0 %v762
    %876 = vmatpush.msra.mxu0 %v760
    %877 = vmatpush.msra.mxu0 %v758
    %878 = vmatpush.msra.mxu0 %v756
    %879 = vmatpush.msra.mxu0 %v754
    %880 = vmatmul.f32.gmra.mxu0 %v735
    %v881 = vpop.f32.mrf.mxu0
    %v882 = vadd.f32 %v821, %v881
    %883 = vdwg.mxu0
    %884 = vmatpush.msra.mxu0 %v816
    %885 = vmatpush.msra.mxu0 %v814
    %886 = vmatpush.msra.mxu0 %v812
    %887 = vmatpush.msra.mxu0 %v810
    %888 = vmatpush.msra.mxu0 %v808
    %889 = vmatpush.msra.mxu0 %v806
    %890 = vmatpush.msra.mxu0 %v804
    %891 = vmatpush.msra.mxu0 %v802
    %892 = vmatpush.msra.mxu0 %v800
    %893 = vmatpush.msra.mxu0 %v798
    %894 = vmatpush.msra.mxu0 %v796
    %895 = vmatpush.msra.mxu0 %v794
    %896 = vmatpush.msra.mxu0 %v792
    %897 = vmatpush.msra.mxu0 %v790
    %898 = vmatpush.msra.mxu0 %v788
    %899 = vmatpush.msra.mxu0 %v786
    %900 = vmatmul.f32.gmra.mxu0 %v736
    %v901 = vpop.f32.mrf.mxu0
    %v902 = vadd.f32 %v882, %v901
    %903 = vdwg.mxu0
    %v904 = vmax.f32 %v862, 0.0
    %v905 = vmax.f32 %v902, 0.0
    %s906 = sshll.u32 %s59, 4
    %907 = dma.done %s64, %s906
    %s908 = scalar_lea.hbm %s2, 3072
    // Predicated region
    $region42: #{tpu_custom_call.1} parent=1 // pred_check
      _
    $region43: #{tpu_custom_call.1} parent=1 // pred_check_branch
      %910 = sbr.rel target = $region45
    $region44: #{tpu_custom_call.1} parent=1 // pred_region
      %911 = sst [smem:[#allocation12]] [#allocation25]
      %912 = sst [smem:[#allocation13]] [#allocation24]
    $region45: #{tpu_custom_call.1} parent=1 // pred_fallthru
      _
    %914 = shalt.err (0)
    %s916 = sshll.u32 %s908, 4
    %s917 = int_to_ptr.hbm [resolvable:$true] %s916
    %s918 = sshll.u32 [#allocation2], 4
    %s919 = int_to_ptr.vmem [resolvable:$true] %s918
    %921 = dma.hbm_to_vmem [thread:$0]  %s917, 8192, %s919, [#allocation3]
    %v922 = vld [vmem:[%s63] sm:$0xff]
    %v923 = vld [vmem:[%s63 + $0x8] sm:$0xff]
    %v924 = vld [vmem:[%s63 + $0x10] sm:$0xff]
    %v925 = vld [vmem:[%s63 + $0x18] sm:$0xff]
    %v926 = vld [vmem:[%s63 + $0x20] sm:$0xff]
    %v927 = vld [vmem:[%s63 + $0x28] sm:$0xff]
    %v928 = vld [vmem:[%s63 + $0x30] sm:$0xff]
    %v929 = vld [vmem:[%s63 + $0x38] sm:$0xff]
    %v930 = vld [vmem:[%s63 + $0x40] sm:$0xff]
    %v931 = vld [vmem:[%s63 + $0x48] sm:$0xff]
    %v932 = vld [vmem:[%s63 + $0x50] sm:$0xff]
    %v933 = vld [vmem:[%s63 + $0x58] sm:$0xff]
    %v934 = vld [vmem:[%s63 + $0x60] sm:$0xff]
    %v935 = vld [vmem:[%s63 + $0x68] sm:$0xff]
    %v936 = vld [vmem:[%s63 + $0x70] sm:$0xff]
    %v937 = vld [vmem:[%s63 + $0x78] sm:$0xff]
    %v938 = vld [vmem:[%s63 + $0x80] sm:$0xff]
    %v939 = vld [vmem:[%s63 + $0x88] sm:$0xff]
    %v940 = vld [vmem:[%s63 + $0x90] sm:$0xff]
    %v941 = vld [vmem:[%s63 + $0x98] sm:$0xff]
    %v942 = vld [vmem:[%s63 + $0xa0] sm:$0xff]
    %v943 = vld [vmem:[%s63 + $0xa8] sm:$0xff]
    %v944 = vld [vmem:[%s63 + $0xb0] sm:$0xff]
    %v945 = vld [vmem:[%s63 + $0xb8] sm:$0xff]
    %v946 = vld [vmem:[%s63 + $0xc0] sm:$0xff]
    %v947 = vld [vmem:[%s63 + $0xc8] sm:$0xff]
    %v948 = vld [vmem:[%s63 + $0xd0] sm:$0xff]
    %v949 = vld [vmem:[%s63 + $0xd8] sm:$0xff]
    %v950 = vld [vmem:[%s63 + $0xe0] sm:$0xff]
    %v951 = vld [vmem:[%s63 + $0xe8] sm:$0xff]
    %v952 = vld [vmem:[%s63 + $0xf0] sm:$0xff]
    %v953 = vld [vmem:[%s63 + $0xf8] sm:$0xff]
    %v954 = vld [vmem:[%s63 + $0x100] sm:$0xff]
    %v955 = vld [vmem:[%s63 + $0x108] sm:$0xff]
    %v956 = vld [vmem:[%s63 + $0x110] sm:$0xff]
    %v957 = vld [vmem:[%s63 + $0x118] sm:$0xff]
    %v958 = vld [vmem:[%s63 + $0x120] sm:$0xff]
    %v959 = vld [vmem:[%s63 + $0x128] sm:$0xff]
    %v960 = vld [vmem:[%s63 + $0x130] sm:$0xff]
    %v961 = vld [vmem:[%s63 + $0x138] sm:$0xff]
    %v962 = vld [vmem:[%s63 + $0x140] sm:$0xff]
    %v963 = vld [vmem:[%s63 + $0x148] sm:$0xff]
    %v964 = vld [vmem:[%s63 + $0x150] sm:$0xff]
    %v965 = vld [vmem:[%s63 + $0x158] sm:$0xff]
    %v966 = vld [vmem:[%s63 + $0x160] sm:$0xff]
    %v967 = vld [vmem:[%s63 + $0x168] sm:$0xff]
    %v968 = vld [vmem:[%s63 + $0x170] sm:$0xff]
    %v969 = vld [vmem:[%s63 + $0x178] sm:$0xff]
    %v970 = vld [vmem:[%s63 + $0x180] sm:$0xff]
    %v971 = vld [vmem:[%s63 + $0x188] sm:$0xff]
    %v972 = vld [vmem:[%s63 + $0x190] sm:$0xff]
    %v973 = vld [vmem:[%s63 + $0x198] sm:$0xff]
    %v974 = vld [vmem:[%s63 + $0x1a0] sm:$0xff]
    %v975 = vld [vmem:[%s63 + $0x1a8] sm:$0xff]
    %v976 = vld [vmem:[%s63 + $0x1b0] sm:$0xff]
    %v977 = vld [vmem:[%s63 + $0x1b8] sm:$0xff]
    %v978 = vld [vmem:[%s63 + $0x1c0] sm:$0xff]
    %v979 = vld [vmem:[%s63 + $0x1c8] sm:$0xff]
    %v980 = vld [vmem:[%s63 + $0x1d0] sm:$0xff]
    %v981 = vld [vmem:[%s63 + $0x1d8] sm:$0xff]
    %v982 = vld [vmem:[%s63 + $0x1e0] sm:$0xff]
    %v983 = vld [vmem:[%s63 + $0x1e8] sm:$0xff]
    %v984 = vld [vmem:[%s63 + $0x1f0] sm:$0xff]
    %v985 = vld [vmem:[%s63 + $0x1f8] sm:$0xff]
    %s986 = scalar_lea.vmem [#allocation7], 10
    %v987 = vld [vmem:[%s986] sm:$0x3]
    %v989 = vperm.slane %v987, 0
    %v990 = vperm.slane %v987, 1
    %993 = vmatpush.msra.mxu0 %v952
    %994 = vmatpush.msra.mxu0 %v950
    %995 = vmatpush.msra.mxu0 %v948
    %996 = vmatpush.msra.mxu0 %v946
    %997 = vmatpush.msra.mxu0 %v944
    %998 = vmatpush.msra.mxu0 %v942
    %999 = vmatpush.msra.mxu0 %v940
    %1000 = vmatpush.msra.mxu0 %v938
    %1001 = vmatpush.msra.mxu0 %v936
    %1002 = vmatpush.msra.mxu0 %v934
    %1003 = vmatpush.msra.mxu0 %v932
    %1004 = vmatpush.msra.mxu0 %v930
    %1005 = vmatpush.msra.mxu0 %v928
    %1006 = vmatpush.msra.mxu0 %v926
    %1007 = vmatpush.msra.mxu0 %v924
    %1008 = vmatpush.msra.mxu0 %v922
    %1009 = vmatmul.f32.gmra.mxu0 %v904
    %v1010 = vpop.f32.mrf.mxu0
    %v1011 = vadd.f32 %v989, %v1010
    %1012 = vdwg.mxu0
    %1013 = vmatpush.msra.mxu0 %v984
    %1014 = vmatpush.msra.mxu0 %v982
    %1015 = vmatpush.msra.mxu0 %v980
    %1016 = vmatpush.msra.mxu0 %v978
    %1017 = vmatpush.msra.mxu0 %v976
    %1018 = vmatpush.msra.mxu0 %v974
    %1019 = vmatpush.msra.mxu0 %v972
    %1020 = vmatpush.msra.mxu0 %v970
    %1021 = vmatpush.msra.mxu0 %v968
    %1022 = vmatpush.msra.mxu0 %v966
    %1023 = vmatpush.msra.mxu0 %v964
    %1024 = vmatpush.msra.mxu0 %v962
    %1025 = vmatpush.msra.mxu0 %v960
    %1026 = vmatpush.msra.mxu0 %v958
    %1027 = vmatpush.msra.mxu0 %v956
    %1028 = vmatpush.msra.mxu0 %v954
    %1029 = vmatmul.f32.gmra.mxu0 %v905
    %v1030 = vpop.f32.mrf.mxu0
    %v1031 = vadd.f32 %v1011, %v1030
    %1032 = vdwg.mxu0
    %1033 = vmatpush.msra.mxu0 %v953
    %1034 = vmatpush.msra.mxu0 %v951
    %1035 = vmatpush.msra.mxu0 %v949
    %1036 = vmatpush.msra.mxu0 %v947
    %1037 = vmatpush.msra.mxu0 %v945
    %1038 = vmatpush.msra.mxu0 %v943
    %1039 = vmatpush.msra.mxu0 %v941
    %1040 = vmatpush.msra.mxu0 %v939
    %1041 = vmatpush.msra.mxu0 %v937
    %1042 = vmatpush.msra.mxu0 %v935
    %1043 = vmatpush.msra.mxu0 %v933
    %1044 = vmatpush.msra.mxu0 %v931
    %1045 = vmatpush.msra.mxu0 %v929
    %1046 = vmatpush.msra.mxu0 %v927
    %1047 = vmatpush.msra.mxu0 %v925
    %1048 = vmatpush.msra.mxu0 %v923
    %1049 = vmatmul.f32.gmra.mxu0 %v904
    %v1050 = vpop.f32.mrf.mxu0
    %v1051 = vadd.f32 %v990, %v1050
    %1052 = vdwg.mxu0
    %1053 = vmatpush.msra.mxu0 %v985
    %1054 = vmatpush.msra.mxu0 %v983
    %1055 = vmatpush.msra.mxu0 %v981
    %1056 = vmatpush.msra.mxu0 %v979
    %1057 = vmatpush.msra.mxu0 %v977
    %1058 = vmatpush.msra.mxu0 %v975
    %1059 = vmatpush.msra.mxu0 %v973
    %1060 = vmatpush.msra.mxu0 %v971
    %1061 = vmatpush.msra.mxu0 %v969
    %1062 = vmatpush.msra.mxu0 %v967
    %1063 = vmatpush.msra.mxu0 %v965
    %1064 = vmatpush.msra.mxu0 %v963
    %1065 = vmatpush.msra.mxu0 %v961
    %1066 = vmatpush.msra.mxu0 %v959
    %1067 = vmatpush.msra.mxu0 %v957
    %1068 = vmatpush.msra.mxu0 %v955
    %1069 = vmatmul.f32.gmra.mxu0 %v905
    %v1070 = vpop.f32.mrf.mxu0
    %v1071 = vadd.f32 %v1051, %v1070
    %1072 = vdwg.mxu0
    %v1073 = vmax.f32 %v1031, 0.0
    %v1074 = vmax.f32 %v1071, 0.0
    %s1075 = sshll.u32 %s59, 4
    %1076 = dma.done [#allocation3], %s1075
    %s1077 = scalar_lea.hbm %s2, 3584
    // Predicated region
    $region46: #{tpu_custom_call.1} parent=1 // pred_check
      _
    $region47: #{tpu_custom_call.1} parent=1 // pred_check_branch
      %1079 = sbr.rel target = $region49
    $region48: #{tpu_custom_call.1} parent=1 // pred_region
      %1080 = sst [smem:[#allocation12]] [#allocation27]
      %1081 = sst [smem:[#allocation13]] [#allocation26]
    $region49: #{tpu_custom_call.1} parent=1 // pred_fallthru
      _
    %1083 = shalt.err (0)
    %s1085 = sshll.u32 %s1077, 4
    %s1086 = int_to_ptr.hbm [resolvable:$true] %s1085
    %s1087 = sshll.u32 %s63, 4
    %s1088 = int_to_ptr.vmem [resolvable:$true] %s1087
    %1090 = dma.hbm_to_vmem [thread:$0]  %s1086, 8192, %s1088, %s64
    %v1091 = vld [vmem:[#allocation2] sm:$0xff]
    %v1092 = vld [vmem:[#allocation2 + $0x8] sm:$0xff]
    %v1093 = vld [vmem:[#allocation2 + $0x10] sm:$0xff]
    %v1094 = vld [vmem:[#allocation2 + $0x18] sm:$0xff]
    %v1095 = vld [vmem:[#allocation2 + $0x20] sm:$0xff]
    %v1096 = vld [vmem:[#allocation2 + $0x28] sm:$0xff]
    %v1097 = vld [vmem:[#allocation2 + $0x30] sm:$0xff]
    %v1098 = vld [vmem:[#allocation2 + $0x38] sm:$0xff]
    %v1099 = vld [vmem:[#allocation2 + $0x40] sm:$0xff]
    %v1100 = vld [vmem:[#allocation2 + $0x48] sm:$0xff]
    %v1101 = vld [vmem:[#allocation2 + $0x50] sm:$0xff]
    %v1102 = vld [vmem:[#allocation2 + $0x58] sm:$0xff]
    %v1103 = vld [vmem:[#allocation2 + $0x60] sm:$0xff]
    %v1104 = vld [vmem:[#allocation2 + $0x68] sm:$0xff]
    %v1105 = vld [vmem:[#allocation2 + $0x70] sm:$0xff]
    %v1106 = vld [vmem:[#allocation2 + $0x78] sm:$0xff]
    %v1107 = vld [vmem:[#allocation2 + $0x80] sm:$0xff]
    %v1108 = vld [vmem:[#allocation2 + $0x88] sm:$0xff]
    %v1109 = vld [vmem:[#allocation2 + $0x90] sm:$0xff]
    %v1110 = vld [vmem:[#allocation2 + $0x98] sm:$0xff]
    %v1111 = vld [vmem:[#allocation2 + $0xa0] sm:$0xff]
    %v1112 = vld [vmem:[#allocation2 + $0xa8] sm:$0xff]
    %v1113 = vld [vmem:[#allocation2 + $0xb0] sm:$0xff]
    %v1114 = vld [vmem:[#allocation2 + $0xb8] sm:$0xff]
    %v1115 = vld [vmem:[#allocation2 + $0xc0] sm:$0xff]
    %v1116 = vld [vmem:[#allocation2 + $0xc8] sm:$0xff]
    %v1117 = vld [vmem:[#allocation2 + $0xd0] sm:$0xff]
    %v1118 = vld [vmem:[#allocation2 + $0xd8] sm:$0xff]
    %v1119 = vld [vmem:[#allocation2 + $0xe0] sm:$0xff]
    %v1120 = vld [vmem:[#allocation2 + $0xe8] sm:$0xff]
    %v1121 = vld [vmem:[#allocation2 + $0xf0] sm:$0xff]
    %v1122 = vld [vmem:[#allocation2 + $0xf8] sm:$0xff]
    %v1123 = vld [vmem:[#allocation2 + $0x100] sm:$0xff]
    %v1124 = vld [vmem:[#allocation2 + $0x108] sm:$0xff]
    %v1125 = vld [vmem:[#allocation2 + $0x110] sm:$0xff]
    %v1126 = vld [vmem:[#allocation2 + $0x118] sm:$0xff]
    %v1127 = vld [vmem:[#allocation2 + $0x120] sm:$0xff]
    %v1128 = vld [vmem:[#allocation2 + $0x128] sm:$0xff]
    %v1129 = vld [vmem:[#allocation2 + $0x130] sm:$0xff]
    %v1130 = vld [vmem:[#allocation2 + $0x138] sm:$0xff]
    %v1131 = vld [vmem:[#allocation2 + $0x140] sm:$0xff]
    %v1132 = vld [vmem:[#allocation2 + $0x148] sm:$0xff]
    %v1133 = vld [vmem:[#allocation2 + $0x150] sm:$0xff]
    %v1134 = vld [vmem:[#allocation2 + $0x158] sm:$0xff]
    %v1135 = vld [vmem:[#allocation2 + $0x160] sm:$0xff]
    %v1136 = vld [vmem:[#allocation2 + $0x168] sm:$0xff]
    %v1137 = vld [vmem:[#allocation2 + $0x170] sm:$0xff]
    %v1138 = vld [vmem:[#allocation2 + $0x178] sm:$0xff]
    %v1139 = vld [vmem:[#allocation2 + $0x180] sm:$0xff]
    %v1140 = vld [vmem:[#allocation2 + $0x188] sm:$0xff]
    %v1141 = vld [vmem:[#allocation2 + $0x190] sm:$0xff]
    %v1142 = vld [vmem:[#allocation2 + $0x198] sm:$0xff]
    %v1143 = vld [vmem:[#allocation2 + $0x1a0] sm:$0xff]
    %v1144 = vld [vmem:[#allocation2 + $0x1a8] sm:$0xff]
    %v1145 = vld [vmem:[#allocation2 + $0x1b0] sm:$0xff]
    %v1146 = vld [vmem:[#allocation2 + $0x1b8] sm:$0xff]
    %v1147 = vld [vmem:[#allocation2 + $0x1c0] sm:$0xff]
    %v1148 = vld [vmem:[#allocation2 + $0x1c8] sm:$0xff]
    %v1149 = vld [vmem:[#allocation2 + $0x1d0] sm:$0xff]
    %v1150 = vld [vmem:[#allocation2 + $0x1d8] sm:$0xff]
    %v1151 = vld [vmem:[#allocation2 + $0x1e0] sm:$0xff]
    %v1152 = vld [vmem:[#allocation2 + $0x1e8] sm:$0xff]
    %v1153 = vld [vmem:[#allocation2 + $0x1f0] sm:$0xff]
    %v1154 = vld [vmem:[#allocation2 + $0x1f8] sm:$0xff]
    %s1155 = scalar_lea.vmem [#allocation7], 12
    %v1156 = vld [vmem:[%s1155] sm:$0x3]
    %v1158 = vperm.slane %v1156, 0
    %v1159 = vperm.slane %v1156, 1
    %1162 = vmatpush.msra.mxu0 %v1121
    %1163 = vmatpush.msra.mxu0 %v1119
    %1164 = vmatpush.msra.mxu0 %v1117
    %1165 = vmatpush.msra.mxu0 %v1115
    %1166 = vmatpush.msra.mxu0 %v1113
    %1167 = vmatpush.msra.mxu0 %v1111
    %1168 = vmatpush.msra.mxu0 %v1109
    %1169 = vmatpush.msra.mxu0 %v1107
    %1170 = vmatpush.msra.mxu0 %v1105
    %1171 = vmatpush.msra.mxu0 %v1103
    %1172 = vmatpush.msra.mxu0 %v1101
    %1173 = vmatpush.msra.mxu0 %v1099
    %1174 = vmatpush.msra.mxu0 %v1097
    %1175 = vmatpush.msra.mxu0 %v1095
    %1176 = vmatpush.msra.mxu0 %v1093
    %1177 = vmatpush.msra.mxu0 %v1091
    %1178 = vmatmul.f32.gmra.mxu0 %v1073
    %v1179 = vpop.f32.mrf.mxu0
    %v1180 = vadd.f32 %v1158, %v1179
    %1181 = vdwg.mxu0
    %1182 = vmatpush.msra.mxu0 %v1153
    %1183 = vmatpush.msra.mxu0 %v1151
    %1184 = vmatpush.msra.mxu0 %v1149
    %1185 = vmatpush.msra.mxu0 %v1147
    %1186 = vmatpush.msra.mxu0 %v1145
    %1187 = vmatpush.msra.mxu0 %v1143
    %1188 = vmatpush.msra.mxu0 %v1141
    %1189 = vmatpush.msra.mxu0 %v1139
    %1190 = vmatpush.msra.mxu0 %v1137
    %1191 = vmatpush.msra.mxu0 %v1135
    %1192 = vmatpush.msra.mxu0 %v1133
    %1193 = vmatpush.msra.mxu0 %v1131
    %1194 = vmatpush.msra.mxu0 %v1129
    %1195 = vmatpush.msra.mxu0 %v1127
    %1196 = vmatpush.msra.mxu0 %v1125
    %1197 = vmatpush.msra.mxu0 %v1123
    %1198 = vmatmul.f32.gmra.mxu0 %v1074
    %v1199 = vpop.f32.mrf.mxu0
    %v1200 = vadd.f32 %v1180, %v1199
    %1201 = vdwg.mxu0
    %1202 = vmatpush.msra.mxu0 %v1122
    %1203 = vmatpush.msra.mxu0 %v1120
    %1204 = vmatpush.msra.mxu0 %v1118
    %1205 = vmatpush.msra.mxu0 %v1116
    %1206 = vmatpush.msra.mxu0 %v1114
    %1207 = vmatpush.msra.mxu0 %v1112
    %1208 = vmatpush.msra.mxu0 %v1110
    %1209 = vmatpush.msra.mxu0 %v1108
    %1210 = vmatpush.msra.mxu0 %v1106
    %1211 = vmatpush.msra.mxu0 %v1104
    %1212 = vmatpush.msra.mxu0 %v1102
    %1213 = vmatpush.msra.mxu0 %v1100
    %1214 = vmatpush.msra.mxu0 %v1098
    %1215 = vmatpush.msra.mxu0 %v1096
    %1216 = vmatpush.msra.mxu0 %v1094
    %1217 = vmatpush.msra.mxu0 %v1092
    %1218 = vmatmul.f32.gmra.mxu0 %v1073
    %v1219 = vpop.f32.mrf.mxu0
    %v1220 = vadd.f32 %v1159, %v1219
    %1221 = vdwg.mxu0
    %1222 = vmatpush.msra.mxu0 %v1154
    %1223 = vmatpush.msra.mxu0 %v1152
    %1224 = vmatpush.msra.mxu0 %v1150
    %1225 = vmatpush.msra.mxu0 %v1148
    %1226 = vmatpush.msra.mxu0 %v1146
    %1227 = vmatpush.msra.mxu0 %v1144
    %1228 = vmatpush.msra.mxu0 %v1142
    %1229 = vmatpush.msra.mxu0 %v1140
    %1230 = vmatpush.msra.mxu0 %v1138
    %1231 = vmatpush.msra.mxu0 %v1136
    %1232 = vmatpush.msra.mxu0 %v1134
    %1233 = vmatpush.msra.mxu0 %v1132
    %1234 = vmatpush.msra.mxu0 %v1130
    %1235 = vmatpush.msra.mxu0 %v1128
    %1236 = vmatpush.msra.mxu0 %v1126
    %1237 = vmatpush.msra.mxu0 %v1124
    %1238 = vmatmul.f32.gmra.mxu0 %v1074
    %v1239 = vpop.f32.mrf.mxu0
    %v1240 = vadd.f32 %v1220, %v1239
    %1241 = vdwg.mxu0
    %v1242 = vmax.f32 %v1200, 0.0
    %v1243 = vmax.f32 %v1240, 0.0
    %s1244 = sshll.u32 %s59, 4
    %1245 = dma.done %s64, %s1244
    %s1246 = scalar_lea.hbm %s2, 4096
    // Predicated region
    $region50: #{tpu_custom_call.1} parent=1 // pred_check
      _
    $region51: #{tpu_custom_call.1} parent=1 // pred_check_branch
      %1248 = sbr.rel target = $region53
    $region52: #{tpu_custom_call.1} parent=1 // pred_region
      %1249 = sst [smem:[#allocation12]] [#allocation29]
      %1250 = sst [smem:[#allocation13]] [#allocation28]
    $region53: #{tpu_custom_call.1} parent=1 // pred_fallthru
      _
    %1252 = shalt.err (0)
    %s1254 = sshll.u32 %s1246, 4
    %s1255 = int_to_ptr.hbm [resolvable:$true] %s1254
    %s1256 = sshll.u32 [#allocation2], 4
    %s1257 = int_to_ptr.vmem [resolvable:$true] %s1256
    %1259 = dma.hbm_to_vmem [thread:$0]  %s1255, 8192, %s1257, [#allocation3]
    %v1260 = vld [vmem:[%s63] sm:$0xff]
    %v1261 = vld [vmem:[%s63 + $0x8] sm:$0xff]
    %v1262 = vld [vmem:[%s63 + $0x10] sm:$0xff]
    %v1263 = vld [vmem:[%s63 + $0x18] sm:$0xff]
    %v1264 = vld [vmem:[%s63 + $0x20] sm:$0xff]
    %v1265 = vld [vmem:[%s63 + $0x28] sm:$0xff]
    %v1266 = vld [vmem:[%s63 + $0x30] sm:$0xff]
    %v1267 = vld [vmem:[%s63 + $0x38] sm:$0xff]
    %v1268 = vld [vmem:[%s63 + $0x40] sm:$0xff]
    %v1269 = vld [vmem:[%s63 + $0x48] sm:$0xff]
    %v1270 = vld [vmem:[%s63 + $0x50] sm:$0xff]
    %v1271 = vld [vmem:[%s63 + $0x58] sm:$0xff]
    %v1272 = vld [vmem:[%s63 + $0x60] sm:$0xff]
    %v1273 = vld [vmem:[%s63 + $0x68] sm:$0xff]
    %v1274 = vld [vmem:[%s63 + $0x70] sm:$0xff]
    %v1275 = vld [vmem:[%s63 + $0x78] sm:$0xff]
    %v1276 = vld [vmem:[%s63 + $0x80] sm:$0xff]
    %v1277 = vld [vmem:[%s63 + $0x88] sm:$0xff]
    %v1278 = vld [vmem:[%s63 + $0x90] sm:$0xff]
    %v1279 = vld [vmem:[%s63 + $0x98] sm:$0xff]
    %v1280 = vld [vmem:[%s63 + $0xa0] sm:$0xff]
    %v1281 = vld [vmem:[%s63 + $0xa8] sm:$0xff]
    %v1282 = vld [vmem:[%s63 + $0xb0] sm:$0xff]
    %v1283 = vld [vmem:[%s63 + $0xb8] sm:$0xff]
    %v1284 = vld [vmem:[%s63 + $0xc0] sm:$0xff]
    %v1285 = vld [vmem:[%s63 + $0xc8] sm:$0xff]
    %v1286 = vld [vmem:[%s63 + $0xd0] sm:$0xff]
    %v1287 = vld [vmem:[%s63 + $0xd8] sm:$0xff]
    %v1288 = vld [vmem:[%s63 + $0xe0] sm:$0xff]
    %v1289 = vld [vmem:[%s63 + $0xe8] sm:$0xff]
    %v1290 = vld [vmem:[%s63 + $0xf0] sm:$0xff]
    %v1291 = vld [vmem:[%s63 + $0xf8] sm:$0xff]
    %v1292 = vld [vmem:[%s63 + $0x100] sm:$0xff]
    %v1293 = vld [vmem:[%s63 + $0x108] sm:$0xff]
    %v1294 = vld [vmem:[%s63 + $0x110] sm:$0xff]
    %v1295 = vld [vmem:[%s63 + $0x118] sm:$0xff]
    %v1296 = vld [vmem:[%s63 + $0x120] sm:$0xff]
    %v1297 = vld [vmem:[%s63 + $0x128] sm:$0xff]
    %v1298 = vld [vmem:[%s63 + $0x130] sm:$0xff]
    %v1299 = vld [vmem:[%s63 + $0x138] sm:$0xff]
    %v1300 = vld [vmem:[%s63 + $0x140] sm:$0xff]
    %v1301 = vld [vmem:[%s63 + $0x148] sm:$0xff]
    %v1302 = vld [vmem:[%s63 + $0x150] sm:$0xff]
    %v1303 = vld [vmem:[%s63 + $0x158] sm:$0xff]
    %v1304 = vld [vmem:[%s63 + $0x160] sm:$0xff]
    %v1305 = vld [vmem:[%s63 + $0x168] sm:$0xff]
    %v1306 = vld [vmem:[%s63 + $0x170] sm:$0xff]
    %v1307 = vld [vmem:[%s63 + $0x178] sm:$0xff]
    %v1308 = vld [vmem:[%s63 + $0x180] sm:$0xff]
    %v1309 = vld [vmem:[%s63 + $0x188] sm:$0xff]
    %v1310 = vld [vmem:[%s63 + $0x190] sm:$0xff]
    %v1311 = vld [vmem:[%s63 + $0x198] sm:$0xff]
    %v1312 = vld [vmem:[%s63 + $0x1a0] sm:$0xff]
    %v1313 = vld [vmem:[%s63 + $0x1a8] sm:$0xff]
    %v1314 = vld [vmem:[%s63 + $0x1b0] sm:$0xff]
    %v1315 = vld [vmem:[%s63 + $0x1b8] sm:$0xff]
    %v1316 = vld [vmem:[%s63 + $0x1c0] sm:$0xff]
    %v1317 = vld [vmem:[%s63 + $0x1c8] sm:$0xff]
    %v1318 = vld [vmem:[%s63 + $0x1d0] sm:$0xff]
    %v1319 = vld [vmem:[%s63 + $0x1d8] sm:$0xff]
    %v1320 = vld [vmem:[%s63 + $0x1e0] sm:$0xff]
    %v1321 = vld [vmem:[%s63 + $0x1e8] sm:$0xff]
    %v1322 = vld [vmem:[%s63 + $0x1f0] sm:$0xff]
    %v1323 = vld [vmem:[%s63 + $0x1f8] sm:$0xff]
    %s1324 = scalar_lea.vmem [#allocation7], 14
    %v1325 = vld [vmem:[%s1324] sm:$0x3]
    %v1327 = vperm.slane %v1325, 0
    %v1328 = vperm.slane %v1325, 1
    %1331 = vmatpush.msra.mxu0 %v1290
    %1332 = vmatpush.msra.mxu0 %v1288
    %1333 = vmatpush.msra.mxu0 %v1286
    %1334 = vmatpush.msra.mxu0 %v1284
    %1335 = vmatpush.msra.mxu0 %v1282
    %1336 = vmatpush.msra.mxu0 %v1280
    %1337 = vmatpush.msra.mxu0 %v1278
    %1338 = vmatpush.msra.mxu0 %v1276
    %1339 = vmatpush.msra.mxu0 %v1274
    %1340 = vmatpush.msra.mxu0 %v1272
    %1341 = vmatpush.msra.mxu0 %v1270
    %1342 = vmatpush.msra.mxu0 %v1268
    %1343 = vmatpush.msra.mxu0 %v1266
    %1344 = vmatpush.msra.mxu0 %v1264
    %1345 = vmatpush.msra.mxu0 %v1262
    %1346 = vmatpush.msra.mxu0 %v1260
    %1347 = vmatmul.f32.gmra.mxu0 %v1242
    %v1348 = vpop.f32.mrf.mxu0
    %v1349 = vadd.f32 %v1327, %v1348
    %1350 = vdwg.mxu0
    %1351 = vmatpush.msra.mxu0 %v1322
    %1352 = vmatpush.msra.mxu0 %v1320
    %1353 = vmatpush.msra.mxu0 %v1318
    %1354 = vmatpush.msra.mxu0 %v1316
    %1355 = vmatpush.msra.mxu0 %v1314
    %1356 = vmatpush.msra.mxu0 %v1312
    %1357 = vmatpush.msra.mxu0 %v1310
    %1358 = vmatpush.msra.mxu0 %v1308
    %1359 = vmatpush.msra.mxu0 %v1306
    %1360 = vmatpush.msra.mxu0 %v1304
    %1361 = vmatpush.msra.mxu0 %v1302
    %1362 = vmatpush.msra.mxu0 %v1300
    %1363 = vmatpush.msra.mxu0 %v1298
    %1364 = vmatpush.msra.mxu0 %v1296
    %1365 = vmatpush.msra.mxu0 %v1294
    %1366 = vmatpush.msra.mxu0 %v1292
    %1367 = vmatmul.f32.gmra.mxu0 %v1243
    %v1368 = vpop.f32.mrf.mxu0
    %v1369 = vadd.f32 %v1349, %v1368
    %1370 = vdwg.mxu0
    %1371 = vmatpush.msra.mxu0 %v1291
    %1372 = vmatpush.msra.mxu0 %v1289
    %1373 = vmatpush.msra.mxu0 %v1287
    %1374 = vmatpush.msra.mxu0 %v1285
    %1375 = vmatpush.msra.mxu0 %v1283
    %1376 = vmatpush.msra.mxu0 %v1281
    %1377 = vmatpush.msra.mxu0 %v1279
    %1378 = vmatpush.msra.mxu0 %v1277
    %1379 = vmatpush.msra.mxu0 %v1275
    %1380 = vmatpush.msra.mxu0 %v1273
    %1381 = vmatpush.msra.mxu0 %v1271
    %1382 = vmatpush.msra.mxu0 %v1269
    %1383 = vmatpush.msra.mxu0 %v1267
    %1384 = vmatpush.msra.mxu0 %v1265
    %1385 = vmatpush.msra.mxu0 %v1263
    %1386 = vmatpush.msra.mxu0 %v1261
    %1387 = vmatmul.f32.gmra.mxu0 %v1242
    %v1388 = vpop.f32.mrf.mxu0
    %v1389 = vadd.f32 %v1328, %v1388
    %1390 = vdwg.mxu0
    %1391 = vmatpush.msra.mxu0 %v1323
    %1392 = vmatpush.msra.mxu0 %v1321
    %1393 = vmatpush.msra.mxu0 %v1319
    %1394 = vmatpush.msra.mxu0 %v1317
    %1395 = vmatpush.msra.mxu0 %v1315
    %1396 = vmatpush.msra.mxu0 %v1313
    %1397 = vmatpush.msra.mxu0 %v1311
    %1398 = vmatpush.msra.mxu0 %v1309
    %1399 = vmatpush.msra.mxu0 %v1307
    %1400 = vmatpush.msra.mxu0 %v1305
    %1401 = vmatpush.msra.mxu0 %v1303
    %1402 = vmatpush.msra.mxu0 %v1301
    %1403 = vmatpush.msra.mxu0 %v1299
    %1404 = vmatpush.msra.mxu0 %v1297
    %1405 = vmatpush.msra.mxu0 %v1295
    %1406 = vmatpush.msra.mxu0 %v1293
    %1407 = vmatmul.f32.gmra.mxu0 %v1243
    %v1408 = vpop.f32.mrf.mxu0
    %v1409 = vadd.f32 %v1389, %v1408
    %1410 = vdwg.mxu0
    %v1411 = vmax.f32 %v1369, 0.0
    %v1412 = vmax.f32 %v1409, 0.0
    %s1413 = sshll.u32 %s59, 4
    %1414 = dma.done [#allocation3], %s1413
    %s1415 = scalar_lea.hbm %s2, 4608
    // Predicated region
    $region54: #{tpu_custom_call.1} parent=1 // pred_check
      _
    $region55: #{tpu_custom_call.1} parent=1 // pred_check_branch
      %1417 = sbr.rel target = $region57
    $region56: #{tpu_custom_call.1} parent=1 // pred_region
      %1418 = sst [smem:[#allocation12]] [#allocation31]
      %1419 = sst [smem:[#allocation13]] [#allocation30]
    $region57: #{tpu_custom_call.1} parent=1 // pred_fallthru
      _
    %1421 = shalt.err (0)
    %s1423 = sshll.u32 %s1415, 4
    %s1424 = int_to_ptr.hbm [resolvable:$true] %s1423
    %s1425 = sshll.u32 %s63, 4
    %s1426 = int_to_ptr.vmem [resolvable:$true] %s1425
    %1428 = dma.hbm_to_vmem [thread:$0]  %s1424, 8192, %s1426, %s64
    %v1429 = vld [vmem:[#allocation2] sm:$0xff]
    %v1430 = vld [vmem:[#allocation2 + $0x8] sm:$0xff]
    %v1431 = vld [vmem:[#allocation2 + $0x10] sm:$0xff]
    %v1432 = vld [vmem:[#allocation2 + $0x18] sm:$0xff]
    %v1433 = vld [vmem:[#allocation2 + $0x20] sm:$0xff]
    %v1434 = vld [vmem:[#allocation2 + $0x28] sm:$0xff]
    %v1435 = vld [vmem:[#allocation2 + $0x30] sm:$0xff]
    %v1436 = vld [vmem:[#allocation2 + $0x38] sm:$0xff]
    %v1437 = vld [vmem:[#allocation2 + $0x40] sm:$0xff]
    %v1438 = vld [vmem:[#allocation2 + $0x48] sm:$0xff]
    %v1439 = vld [vmem:[#allocation2 + $0x50] sm:$0xff]
    %v1440 = vld [vmem:[#allocation2 + $0x58] sm:$0xff]
    %v1441 = vld [vmem:[#allocation2 + $0x60] sm:$0xff]
    %v1442 = vld [vmem:[#allocation2 + $0x68] sm:$0xff]
    %v1443 = vld [vmem:[#allocation2 + $0x70] sm:$0xff]
    %v1444 = vld [vmem:[#allocation2 + $0x78] sm:$0xff]
    %v1445 = vld [vmem:[#allocation2 + $0x80] sm:$0xff]
    %v1446 = vld [vmem:[#allocation2 + $0x88] sm:$0xff]
    %v1447 = vld [vmem:[#allocation2 + $0x90] sm:$0xff]
    %v1448 = vld [vmem:[#allocation2 + $0x98] sm:$0xff]
    %v1449 = vld [vmem:[#allocation2 + $0xa0] sm:$0xff]
    %v1450 = vld [vmem:[#allocation2 + $0xa8] sm:$0xff]
    %v1451 = vld [vmem:[#allocation2 + $0xb0] sm:$0xff]
    %v1452 = vld [vmem:[#allocation2 + $0xb8] sm:$0xff]
    %v1453 = vld [vmem:[#allocation2 + $0xc0] sm:$0xff]
    %v1454 = vld [vmem:[#allocation2 + $0xc8] sm:$0xff]
    %v1455 = vld [vmem:[#allocation2 + $0xd0] sm:$0xff]
    %v1456 = vld [vmem:[#allocation2 + $0xd8] sm:$0xff]
    %v1457 = vld [vmem:[#allocation2 + $0xe0] sm:$0xff]
    %v1458 = vld [vmem:[#allocation2 + $0xe8] sm:$0xff]
    %v1459 = vld [vmem:[#allocation2 + $0xf0] sm:$0xff]
    %v1460 = vld [vmem:[#allocation2 + $0xf8] sm:$0xff]
    %v1461 = vld [vmem:[#allocation2 + $0x100] sm:$0xff]
    %v1462 = vld [vmem:[#allocation2 + $0x108] sm:$0xff]
    %v1463 = vld [vmem:[#allocation2 + $0x110] sm:$0xff]
    %v1464 = vld [vmem:[#allocation2 + $0x118] sm:$0xff]
    %v1465 = vld [vmem:[#allocation2 + $0x120] sm:$0xff]
    %v1466 = vld [vmem:[#allocation2 + $0x128] sm:$0xff]
    %v1467 = vld [vmem:[#allocation2 + $0x130] sm:$0xff]
    %v1468 = vld [vmem:[#allocation2 + $0x138] sm:$0xff]
    %v1469 = vld [vmem:[#allocation2 + $0x140] sm:$0xff]
    %v1470 = vld [vmem:[#allocation2 + $0x148] sm:$0xff]
    %v1471 = vld [vmem:[#allocation2 + $0x150] sm:$0xff]
    %v1472 = vld [vmem:[#allocation2 + $0x158] sm:$0xff]
    %v1473 = vld [vmem:[#allocation2 + $0x160] sm:$0xff]
    %v1474 = vld [vmem:[#allocation2 + $0x168] sm:$0xff]
    %v1475 = vld [vmem:[#allocation2 + $0x170] sm:$0xff]
    %v1476 = vld [vmem:[#allocation2 + $0x178] sm:$0xff]
    %v1477 = vld [vmem:[#allocation2 + $0x180] sm:$0xff]
    %v1478 = vld [vmem:[#allocation2 + $0x188] sm:$0xff]
    %v1479 = vld [vmem:[#allocation2 + $0x190] sm:$0xff]
    %v1480 = vld [vmem:[#allocation2 + $0x198] sm:$0xff]
    %v1481 = vld [vmem:[#allocation2 + $0x1a0] sm:$0xff]
    %v1482 = vld [vmem:[#allocation2 + $0x1a8] sm:$0xff]
    %v1483 = vld [vmem:[#allocation2 + $0x1b0] sm:$0xff]
    %v1484 = vld [vmem:[#allocation2 + $0x1b8] sm:$0xff]
    %v1485 = vld [vmem:[#allocation2 + $0x1c0] sm:$0xff]
    %v1486 = vld [vmem:[#allocation2 + $0x1c8] sm:$0xff]
    %v1487 = vld [vmem:[#allocation2 + $0x1d0] sm:$0xff]
    %v1488 = vld [vmem:[#allocation2 + $0x1d8] sm:$0xff]
    %v1489 = vld [vmem:[#allocation2 + $0x1e0] sm:$0xff]
    %v1490 = vld [vmem:[#allocation2 + $0x1e8] sm:$0xff]
    %v1491 = vld [vmem:[#allocation2 + $0x1f0] sm:$0xff]
    %v1492 = vld [vmem:[#allocation2 + $0x1f8] sm:$0xff]
    %s1493 = scalar_lea.vmem [#allocation7], 16
    %v1494 = vld [vmem:[%s1493] sm:$0x3]
    %v1496 = vperm.slane %v1494, 0
    %v1497 = vperm.slane %v1494, 1
    %1500 = vmatpush.msra.mxu0 %v1459
    %1501 = vmatpush.msra.mxu0 %v1457
    %1502 = vmatpush.msra.mxu0 %v1455
    %1503 = vmatpush.msra.mxu0 %v1453
    %1504 = vmatpush.msra.mxu0 %v1451
    %1505 = vmatpush.msra.mxu0 %v1449
    %1506 = vmatpush.msra.mxu0 %v1447
    %1507 = vmatpush.msra.mxu0 %v1445
    %1508 = vmatpush.msra.mxu0 %v1443
    %1509 = vmatpush.msra.mxu0 %v1441
    %1510 = vmatpush.msra.mxu0 %v1439
    %1511 = vmatpush.msra.mxu0 %v1437
    %1512 = vmatpush.msra.mxu0 %v1435
    %1513 = vmatpush.msra.mxu0 %v1433
    %1514 = vmatpush.msra.mxu0 %v1431
    %1515 = vmatpush.msra.mxu0 %v1429
    %1516 = vmatmul.f32.gmra.mxu0 %v1411
    %v1517 = vpop.f32.mrf.mxu0
    %v1518 = vadd.f32 %v1496, %v1517
    %1519 = vdwg.mxu0
    %1520 = vmatpush.msra.mxu0 %v1491
    %1521 = vmatpush.msra.mxu0 %v1489
    %1522 = vmatpush.msra.mxu0 %v1487
    %1523 = vmatpush.msra.mxu0 %v1485
    %1524 = vmatpush.msra.mxu0 %v1483
    %1525 = vmatpush.msra.mxu0 %v1481
    %1526 = vmatpush.msra.mxu0 %v1479
    %1527 = vmatpush.msra.mxu0 %v1477
    %1528 = vmatpush.msra.mxu0 %v1475
    %1529 = vmatpush.msra.mxu0 %v1473
    %1530 = vmatpush.msra.mxu0 %v1471
    %1531 = vmatpush.msra.mxu0 %v1469
    %1532 = vmatpush.msra.mxu0 %v1467
    %1533 = vmatpush.msra.mxu0 %v1465
    %1534 = vmatpush.msra.mxu0 %v1463
    %1535 = vmatpush.msra.mxu0 %v1461
    %1536 = vmatmul.f32.gmra.mxu0 %v1412
    %v1537 = vpop.f32.mrf.mxu0
    %v1538 = vadd.f32 %v1518, %v1537
    %1539 = vdwg.mxu0
    %1540 = vmatpush.msra.mxu0 %v1460
    %1541 = vmatpush.msra.mxu0 %v1458
    %1542 = vmatpush.msra.mxu0 %v1456
    %1543 = vmatpush.msra.mxu0 %v1454
    %1544 = vmatpush.msra.mxu0 %v1452
    %1545 = vmatpush.msra.mxu0 %v1450
    %1546 = vmatpush.msra.mxu0 %v1448
    %1547 = vmatpush.msra.mxu0 %v1446
    %1548 = vmatpush.msra.mxu0 %v1444
    %1549 = vmatpush.msra.mxu0 %v1442
    %1550 = vmatpush.msra.mxu0 %v1440
    %1551 = vmatpush.msra.mxu0 %v1438
    %1552 = vmatpush.msra.mxu0 %v1436
    %1553 = vmatpush.msra.mxu0 %v1434
    %1554 = vmatpush.msra.mxu0 %v1432
    %1555 = vmatpush.msra.mxu0 %v1430
    %1556 = vmatmul.f32.gmra.mxu0 %v1411
    %v1557 = vpop.f32.mrf.mxu0
    %v1558 = vadd.f32 %v1497, %v1557
    %1559 = vdwg.mxu0
    %1560 = vmatpush.msra.mxu0 %v1492
    %1561 = vmatpush.msra.mxu0 %v1490
    %1562 = vmatpush.msra.mxu0 %v1488
    %1563 = vmatpush.msra.mxu0 %v1486
    %1564 = vmatpush.msra.mxu0 %v1484
    %1565 = vmatpush.msra.mxu0 %v1482
    %1566 = vmatpush.msra.mxu0 %v1480
    %1567 = vmatpush.msra.mxu0 %v1478
    %1568 = vmatpush.msra.mxu0 %v1476
    %1569 = vmatpush.msra.mxu0 %v1474
    %1570 = vmatpush.msra.mxu0 %v1472
    %1571 = vmatpush.msra.mxu0 %v1470
    %1572 = vmatpush.msra.mxu0 %v1468
    %1573 = vmatpush.msra.mxu0 %v1466
    %1574 = vmatpush.msra.mxu0 %v1464
    %1575 = vmatpush.msra.mxu0 %v1462
    %1576 = vmatmul.f32.gmra.mxu0 %v1412
    %v1577 = vpop.f32.mrf.mxu0
    %v1578 = vadd.f32 %v1558, %v1577
    %1579 = vdwg.mxu0
    %v1580 = vmax.f32 %v1538, 0.0
    %v1581 = vmax.f32 %v1578, 0.0
    %s1582 = sshll.u32 %s59, 4
    %1583 = dma.done %s64, %s1582
    %s1584 = scalar_lea.hbm %s2, 5120
    // Predicated region
    $region58: #{tpu_custom_call.1} parent=1 // pred_check
      _
    $region59: #{tpu_custom_call.1} parent=1 // pred_check_branch
      %1586 = sbr.rel target = $region61
    $region60: #{tpu_custom_call.1} parent=1 // pred_region
      %1587 = sst [smem:[#allocation12]] [#allocation33]
      %1588 = sst [smem:[#allocation13]] [#allocation32]
    $region61: #{tpu_custom_call.1} parent=1 // pred_fallthru
      _
    %1590 = shalt.err (0)
    %s1592 = sshll.u32 %s1584, 4
    %s1593 = int_to_ptr.hbm [resolvable:$true] %s1592
    %s1594 = sshll.u32 [#allocation2], 4
    %s1595 = int_to_ptr.vmem [resolvable:$true] %s1594
    %1597 = dma.hbm_to_vmem [thread:$0]  %s1593, 8192, %s1595, [#allocation3]
    %v1598 = vld [vmem:[%s63] sm:$0xff]
    %v1599 = vld [vmem:[%s63 + $0x8] sm:$0xff]
    %v1600 = vld [vmem:[%s63 + $0x10] sm:$0xff]
    %v1601 = vld [vmem:[%s63 + $0x18] sm:$0xff]
    %v1602 = vld [vmem:[%s63 + $0x20] sm:$0xff]
    %v1603 = vld [vmem:[%s63 + $0x28] sm:$0xff]
    %v1604 = vld [vmem:[%s63 + $0x30] sm:$0xff]
    %v1605 = vld [vmem:[%s63 + $0x38] sm:$0xff]
    %v1606 = vld [vmem:[%s63 + $0x40] sm:$0xff]
    %v1607 = vld [vmem:[%s63 + $0x48] sm:$0xff]
    %v1608 = vld [vmem:[%s63 + $0x50] sm:$0xff]
    %v1609 = vld [vmem:[%s63 + $0x58] sm:$0xff]
    %v1610 = vld [vmem:[%s63 + $0x60] sm:$0xff]
    %v1611 = vld [vmem:[%s63 + $0x68] sm:$0xff]
    %v1612 = vld [vmem:[%s63 + $0x70] sm:$0xff]
    %v1613 = vld [vmem:[%s63 + $0x78] sm:$0xff]
    %v1614 = vld [vmem:[%s63 + $0x80] sm:$0xff]
    %v1615 = vld [vmem:[%s63 + $0x88] sm:$0xff]
    %v1616 = vld [vmem:[%s63 + $0x90] sm:$0xff]
    %v1617 = vld [vmem:[%s63 + $0x98] sm:$0xff]
    %v1618 = vld [vmem:[%s63 + $0xa0] sm:$0xff]
    %v1619 = vld [vmem:[%s63 + $0xa8] sm:$0xff]
    %v1620 = vld [vmem:[%s63 + $0xb0] sm:$0xff]
    %v1621 = vld [vmem:[%s63 + $0xb8] sm:$0xff]
    %v1622 = vld [vmem:[%s63 + $0xc0] sm:$0xff]
    %v1623 = vld [vmem:[%s63 + $0xc8] sm:$0xff]
    %v1624 = vld [vmem:[%s63 + $0xd0] sm:$0xff]
    %v1625 = vld [vmem:[%s63 + $0xd8] sm:$0xff]
    %v1626 = vld [vmem:[%s63 + $0xe0] sm:$0xff]
    %v1627 = vld [vmem:[%s63 + $0xe8] sm:$0xff]
    %v1628 = vld [vmem:[%s63 + $0xf0] sm:$0xff]
    %v1629 = vld [vmem:[%s63 + $0xf8] sm:$0xff]
    %v1630 = vld [vmem:[%s63 + $0x100] sm:$0xff]
    %v1631 = vld [vmem:[%s63 + $0x108] sm:$0xff]
    %v1632 = vld [vmem:[%s63 + $0x110] sm:$0xff]
    %v1633 = vld [vmem:[%s63 + $0x118] sm:$0xff]
    %v1634 = vld [vmem:[%s63 + $0x120] sm:$0xff]
    %v1635 = vld [vmem:[%s63 + $0x128] sm:$0xff]
    %v1636 = vld [vmem:[%s63 + $0x130] sm:$0xff]
    %v1637 = vld [vmem:[%s63 + $0x138] sm:$0xff]
    %v1638 = vld [vmem:[%s63 + $0x140] sm:$0xff]
    %v1639 = vld [vmem:[%s63 + $0x148] sm:$0xff]
    %v1640 = vld [vmem:[%s63 + $0x150] sm:$0xff]
    %v1641 = vld [vmem:[%s63 + $0x158] sm:$0xff]
    %v1642 = vld [vmem:[%s63 + $0x160] sm:$0xff]
    %v1643 = vld [vmem:[%s63 + $0x168] sm:$0xff]
    %v1644 = vld [vmem:[%s63 + $0x170] sm:$0xff]
    %v1645 = vld [vmem:[%s63 + $0x178] sm:$0xff]
    %v1646 = vld [vmem:[%s63 + $0x180] sm:$0xff]
    %v1647 = vld [vmem:[%s63 + $0x188] sm:$0xff]
    %v1648 = vld [vmem:[%s63 + $0x190] sm:$0xff]
    %v1649 = vld [vmem:[%s63 + $0x198] sm:$0xff]
    %v1650 = vld [vmem:[%s63 + $0x1a0] sm:$0xff]
    %v1651 = vld [vmem:[%s63 + $0x1a8] sm:$0xff]
    %v1652 = vld [vmem:[%s63 + $0x1b0] sm:$0xff]
    %v1653 = vld [vmem:[%s63 + $0x1b8] sm:$0xff]
    %v1654 = vld [vmem:[%s63 + $0x1c0] sm:$0xff]
    %v1655 = vld [vmem:[%s63 + $0x1c8] sm:$0xff]
    %v1656 = vld [vmem:[%s63 + $0x1d0] sm:$0xff]
    %v1657 = vld [vmem:[%s63 + $0x1d8] sm:$0xff]
    %v1658 = vld [vmem:[%s63 + $0x1e0] sm:$0xff]
    %v1659 = vld [vmem:[%s63 + $0x1e8] sm:$0xff]
    %v1660 = vld [vmem:[%s63 + $0x1f0] sm:$0xff]
    %v1661 = vld [vmem:[%s63 + $0x1f8] sm:$0xff]
    %s1662 = scalar_lea.vmem [#allocation7], 18
    %v1663 = vld [vmem:[%s1662] sm:$0x3]
    %v1665 = vperm.slane %v1663, 0
    %v1666 = vperm.slane %v1663, 1
    %1669 = vmatpush.msra.mxu0 %v1628
    %1670 = vmatpush.msra.mxu0 %v1626
    %1671 = vmatpush.msra.mxu0 %v1624
    %1672 = vmatpush.msra.mxu0 %v1622
    %1673 = vmatpush.msra.mxu0 %v1620
    %1674 = vmatpush.msra.mxu0 %v1618
    %1675 = vmatpush.msra.mxu0 %v1616
    %1676 = vmatpush.msra.mxu0 %v1614
    %1677 = vmatpush.msra.mxu0 %v1612
    %1678 = vmatpush.msra.mxu0 %v1610
    %1679 = vmatpush.msra.mxu0 %v1608
    %1680 = vmatpush.msra.mxu0 %v1606
    %1681 = vmatpush.msra.mxu0 %v1604
    %1682 = vmatpush.msra.mxu0 %v1602
    %1683 = vmatpush.msra.mxu0 %v1600
    %1684 = vmatpush.msra.mxu0 %v1598
    %1685 = vmatmul.f32.gmra.mxu0 %v1580
    %v1686 = vpop.f32.mrf.mxu0
    %v1687 = vadd.f32 %v1665, %v1686
    %1688 = vdwg.mxu0
    %1689 = vmatpush.msra.mxu0 %v1660
    %1690 = vmatpush.msra.mxu0 %v1658
    %1691 = vmatpush.msra.mxu0 %v1656
    %1692 = vmatpush.msra.mxu0 %v1654
    %1693 = vmatpush.msra.mxu0 %v1652
    %1694 = vmatpush.msra.mxu0 %v1650
    %1695 = vmatpush.msra.mxu0 %v1648
    %1696 = vmatpush.msra.mxu0 %v1646
    %1697 = vmatpush.msra.mxu0 %v1644
    %1698 = vmatpush.msra.mxu0 %v1642
    %1699 = vmatpush.msra.mxu0 %v1640
    %1700 = vmatpush.msra.mxu0 %v1638
    %1701 = vmatpush.msra.mxu0 %v1636
    %1702 = vmatpush.msra.mxu0 %v1634
    %1703 = vmatpush.msra.mxu0 %v1632
    %1704 = vmatpush.msra.mxu0 %v1630
    %1705 = vmatmul.f32.gmra.mxu0 %v1581
    %v1706 = vpop.f32.mrf.mxu0
    %v1707 = vadd.f32 %v1687, %v1706
    %1708 = vdwg.mxu0
    %1709 = vmatpush.msra.mxu0 %v1629
    %1710 = vmatpush.msra.mxu0 %v1627
    %1711 = vmatpush.msra.mxu0 %v1625
    %1712 = vmatpush.msra.mxu0 %v1623
    %1713 = vmatpush.msra.mxu0 %v1621
    %1714 = vmatpush.msra.mxu0 %v1619
    %1715 = vmatpush.msra.mxu0 %v1617
    %1716 = vmatpush.msra.mxu0 %v1615
    %1717 = vmatpush.msra.mxu0 %v1613
    %1718 = vmatpush.msra.mxu0 %v1611
    %1719 = vmatpush.msra.mxu0 %v1609
    %1720 = vmatpush.msra.mxu0 %v1607
    %1721 = vmatpush.msra.mxu0 %v1605
    %1722 = vmatpush.msra.mxu0 %v1603
    %1723 = vmatpush.msra.mxu0 %v1601
    %1724 = vmatpush.msra.mxu0 %v1599
    %1725 = vmatmul.f32.gmra.mxu0 %v1580
    %v1726 = vpop.f32.mrf.mxu0
    %v1727 = vadd.f32 %v1666, %v1726
    %1728 = vdwg.mxu0
    %1729 = vmatpush.msra.mxu0 %v1661
    %1730 = vmatpush.msra.mxu0 %v1659
    %1731 = vmatpush.msra.mxu0 %v1657
    %1732 = vmatpush.msra.mxu0 %v1655
    %1733 = vmatpush.msra.mxu0 %v1653
    %1734 = vmatpush.msra.mxu0 %v1651
    %1735 = vmatpush.msra.mxu0 %v1649
    %1736 = vmatpush.msra.mxu0 %v1647
    %1737 = vmatpush.msra.mxu0 %v1645
    %1738 = vmatpush.msra.mxu0 %v1643
    %1739 = vmatpush.msra.mxu0 %v1641
    %1740 = vmatpush.msra.mxu0 %v1639
    %1741 = vmatpush.msra.mxu0 %v1637
    %1742 = vmatpush.msra.mxu0 %v1635
    %1743 = vmatpush.msra.mxu0 %v1633
    %1744 = vmatpush.msra.mxu0 %v1631
    %1745 = vmatmul.f32.gmra.mxu0 %v1581
    %v1746 = vpop.f32.mrf.mxu0
    %v1747 = vadd.f32 %v1727, %v1746
    %1748 = vdwg.mxu0
    %v1749 = vmax.f32 %v1707, 0.0
    %v1750 = vmax.f32 %v1747, 0.0
    %s1751 = sshll.u32 %s59, 4
    %1752 = dma.done [#allocation3], %s1751
    %s1753 = scalar_lea.hbm %s2, 5632
    // Predicated region
    $region62: #{tpu_custom_call.1} parent=1 // pred_check
      _
    $region63: #{tpu_custom_call.1} parent=1 // pred_check_branch
      %1755 = sbr.rel target = $region65
    $region64: #{tpu_custom_call.1} parent=1 // pred_region
      %1756 = sst [smem:[#allocation12]] [#allocation35]
      %1757 = sst [smem:[#allocation13]] [#allocation34]
    $region65: #{tpu_custom_call.1} parent=1 // pred_fallthru
      _
    %1759 = shalt.err (0)
    %s1761 = sshll.u32 %s1753, 4
    %s1762 = int_to_ptr.hbm [resolvable:$true] %s1761
    %s1763 = sshll.u32 %s63, 4
    %s1764 = int_to_ptr.vmem [resolvable:$true] %s1763
    %1766 = dma.hbm_to_vmem [thread:$0]  %s1762, 8192, %s1764, %s64
    %v1767 = vld [vmem:[#allocation2] sm:$0xff]
    %v1768 = vld [vmem:[#allocation2 + $0x8] sm:$0xff]
    %v1769 = vld [vmem:[#allocation2 + $0x10] sm:$0xff]
    %v1770 = vld [vmem:[#allocation2 + $0x18] sm:$0xff]
    %v1771 = vld [vmem:[#allocation2 + $0x20] sm:$0xff]
    %v1772 = vld [vmem:[#allocation2 + $0x28] sm:$0xff]
    %v1773 = vld [vmem:[#allocation2 + $0x30] sm:$0xff]
    %v1774 = vld [vmem:[#allocation2 + $0x38] sm:$0xff]
    %v1775 = vld [vmem:[#allocation2 + $0x40] sm:$0xff]
    %v1776 = vld [vmem:[#allocation2 + $0x48] sm:$0xff]
    %v1777 = vld [vmem:[#allocation2 + $0x50] sm:$0xff]
    %v1778 = vld [vmem:[#allocation2 + $0x58] sm:$0xff]
    %v1779 = vld [vmem:[#allocation2 + $0x60] sm:$0xff]
    %v1780 = vld [vmem:[#allocation2 + $0x68] sm:$0xff]
    %v1781 = vld [vmem:[#allocation2 + $0x70] sm:$0xff]
    %v1782 = vld [vmem:[#allocation2 + $0x78] sm:$0xff]
    %v1783 = vld [vmem:[#allocation2 + $0x80] sm:$0xff]
    %v1784 = vld [vmem:[#allocation2 + $0x88] sm:$0xff]
    %v1785 = vld [vmem:[#allocation2 + $0x90] sm:$0xff]
    %v1786 = vld [vmem:[#allocation2 + $0x98] sm:$0xff]
    %v1787 = vld [vmem:[#allocation2 + $0xa0] sm:$0xff]
    %v1788 = vld [vmem:[#allocation2 + $0xa8] sm:$0xff]
    %v1789 = vld [vmem:[#allocation2 + $0xb0] sm:$0xff]
    %v1790 = vld [vmem:[#allocation2 + $0xb8] sm:$0xff]
    %v1791 = vld [vmem:[#allocation2 + $0xc0] sm:$0xff]
    %v1792 = vld [vmem:[#allocation2 + $0xc8] sm:$0xff]
    %v1793 = vld [vmem:[#allocation2 + $0xd0] sm:$0xff]
    %v1794 = vld [vmem:[#allocation2 + $0xd8] sm:$0xff]
    %v1795 = vld [vmem:[#allocation2 + $0xe0] sm:$0xff]
    %v1796 = vld [vmem:[#allocation2 + $0xe8] sm:$0xff]
    %v1797 = vld [vmem:[#allocation2 + $0xf0] sm:$0xff]
    %v1798 = vld [vmem:[#allocation2 + $0xf8] sm:$0xff]
    %v1799 = vld [vmem:[#allocation2 + $0x100] sm:$0xff]
    %v1800 = vld [vmem:[#allocation2 + $0x108] sm:$0xff]
    %v1801 = vld [vmem:[#allocation2 + $0x110] sm:$0xff]
    %v1802 = vld [vmem:[#allocation2 + $0x118] sm:$0xff]
    %v1803 = vld [vmem:[#allocation2 + $0x120] sm:$0xff]
    %v1804 = vld [vmem:[#allocation2 + $0x128] sm:$0xff]
    %v1805 = vld [vmem:[#allocation2 + $0x130] sm:$0xff]
    %v1806 = vld [vmem:[#allocation2 + $0x138] sm:$0xff]
    %v1807 = vld [vmem:[#allocation2 + $0x140] sm:$0xff]
    %v1808 = vld [vmem:[#allocation2 + $0x148] sm:$0xff]
    %v1809 = vld [vmem:[#allocation2 + $0x150] sm:$0xff]
    %v1810 = vld [vmem:[#allocation2 + $0x158] sm:$0xff]
    %v1811 = vld [vmem:[#allocation2 + $0x160] sm:$0xff]
    %v1812 = vld [vmem:[#allocation2 + $0x168] sm:$0xff]
    %v1813 = vld [vmem:[#allocation2 + $0x170] sm:$0xff]
    %v1814 = vld [vmem:[#allocation2 + $0x178] sm:$0xff]
    %v1815 = vld [vmem:[#allocation2 + $0x180] sm:$0xff]
    %v1816 = vld [vmem:[#allocation2 + $0x188] sm:$0xff]
    %v1817 = vld [vmem:[#allocation2 + $0x190] sm:$0xff]
    %v1818 = vld [vmem:[#allocation2 + $0x198] sm:$0xff]
    %v1819 = vld [vmem:[#allocation2 + $0x1a0] sm:$0xff]
    %v1820 = vld [vmem:[#allocation2 + $0x1a8] sm:$0xff]
    %v1821 = vld [vmem:[#allocation2 + $0x1b0] sm:$0xff]
    %v1822 = vld [vmem:[#allocation2 + $0x1b8] sm:$0xff]
    %v1823 = vld [vmem:[#allocation2 + $0x1c0] sm:$0xff]
    %v1824 = vld [vmem:[#allocation2 + $0x1c8] sm:$0xff]
    %v1825 = vld [vmem:[#allocation2 + $0x1d0] sm:$0xff]
    %v1826 = vld [vmem:[#allocation2 + $0x1d8] sm:$0xff]
    %v1827 = vld [vmem:[#allocation2 + $0x1e0] sm:$0xff]
    %v1828 = vld [vmem:[#allocation2 + $0x1e8] sm:$0xff]
    %v1829 = vld [vmem:[#allocation2 + $0x1f0] sm:$0xff]
    %v1830 = vld [vmem:[#allocation2 + $0x1f8] sm:$0xff]
    %s1831 = scalar_lea.vmem [#allocation7], 20
    %v1832 = vld [vmem:[%s1831] sm:$0x3]
    %v1834 = vperm.slane %v1832, 0
    %v1835 = vperm.slane %v1832, 1
    %1838 = vmatpush.msra.mxu0 %v1797
    %1839 = vmatpush.msra.mxu0 %v1795
    %1840 = vmatpush.msra.mxu0 %v1793
    %1841 = vmatpush.msra.mxu0 %v1791
    %1842 = vmatpush.msra.mxu0 %v1789
    %1843 = vmatpush.msra.mxu0 %v1787
    %1844 = vmatpush.msra.mxu0 %v1785
    %1845 = vmatpush.msra.mxu0 %v1783
    %1846 = vmatpush.msra.mxu0 %v1781
    %1847 = vmatpush.msra.mxu0 %v1779
    %1848 = vmatpush.msra.mxu0 %v1777
    %1849 = vmatpush.msra.mxu0 %v1775
    %1850 = vmatpush.msra.mxu0 %v1773
    %1851 = vmatpush.msra.mxu0 %v1771
    %1852 = vmatpush.msra.mxu0 %v1769
    %1853 = vmatpush.msra.mxu0 %v1767
    %1854 = vmatmul.f32.gmra.mxu0 %v1749
    %v1855 = vpop.f32.mrf.mxu0
    %v1856 = vadd.f32 %v1834, %v1855
    %1857 = vdwg.mxu0
    %1858 = vmatpush.msra.mxu0 %v1829
    %1859 = vmatpush.msra.mxu0 %v1827
    %1860 = vmatpush.msra.mxu0 %v1825
    %1861 = vmatpush.msra.mxu0 %v1823
    %1862 = vmatpush.msra.mxu0 %v1821
    %1863 = vmatpush.msra.mxu0 %v1819
    %1864 = vmatpush.msra.mxu0 %v1817
    %1865 = vmatpush.msra.mxu0 %v1815
    %1866 = vmatpush.msra.mxu0 %v1813
    %1867 = vmatpush.msra.mxu0 %v1811
    %1868 = vmatpush.msra.mxu0 %v1809
    %1869 = vmatpush.msra.mxu0 %v1807
    %1870 = vmatpush.msra.mxu0 %v1805
    %1871 = vmatpush.msra.mxu0 %v1803
    %1872 = vmatpush.msra.mxu0 %v1801
    %1873 = vmatpush.msra.mxu0 %v1799
    %1874 = vmatmul.f32.gmra.mxu0 %v1750
    %v1875 = vpop.f32.mrf.mxu0
    %v1876 = vadd.f32 %v1856, %v1875
    %1877 = vdwg.mxu0
    %1878 = vmatpush.msra.mxu0 %v1798
    %1879 = vmatpush.msra.mxu0 %v1796
    %1880 = vmatpush.msra.mxu0 %v1794
    %1881 = vmatpush.msra.mxu0 %v1792
    %1882 = vmatpush.msra.mxu0 %v1790
    %1883 = vmatpush.msra.mxu0 %v1788
    %1884 = vmatpush.msra.mxu0 %v1786
    %1885 = vmatpush.msra.mxu0 %v1784
    %1886 = vmatpush.msra.mxu0 %v1782
    %1887 = vmatpush.msra.mxu0 %v1780
    %1888 = vmatpush.msra.mxu0 %v1778
    %1889 = vmatpush.msra.mxu0 %v1776
    %1890 = vmatpush.msra.mxu0 %v1774
    %1891 = vmatpush.msra.mxu0 %v1772
    %1892 = vmatpush.msra.mxu0 %v1770
    %1893 = vmatpush.msra.mxu0 %v1768
    %1894 = vmatmul.f32.gmra.mxu0 %v1749
    %v1895 = vpop.f32.mrf.mxu0
    %v1896 = vadd.f32 %v1835, %v1895
    %1897 = vdwg.mxu0
    %1898 = vmatpush.msra.mxu0 %v1830
    %1899 = vmatpush.msra.mxu0 %v1828
    %1900 = vmatpush.msra.mxu0 %v1826
    %1901 = vmatpush.msra.mxu0 %v1824
    %1902 = vmatpush.msra.mxu0 %v1822
    %1903 = vmatpush.msra.mxu0 %v1820
    %1904 = vmatpush.msra.mxu0 %v1818
    %1905 = vmatpush.msra.mxu0 %v1816
    %1906 = vmatpush.msra.mxu0 %v1814
    %1907 = vmatpush.msra.mxu0 %v1812
    %1908 = vmatpush.msra.mxu0 %v1810
    %1909 = vmatpush.msra.mxu0 %v1808
    %1910 = vmatpush.msra.mxu0 %v1806
    %1911 = vmatpush.msra.mxu0 %v1804
    %1912 = vmatpush.msra.mxu0 %v1802
    %1913 = vmatpush.msra.mxu0 %v1800
    %1914 = vmatmul.f32.gmra.mxu0 %v1750
    %v1915 = vpop.f32.mrf.mxu0
    %v1916 = vadd.f32 %v1896, %v1915
    %1917 = vdwg.mxu0
    %v1918 = vmax.f32 %v1876, 0.0
    %v1919 = vmax.f32 %v1916, 0.0
    %s1920 = sshll.u32 %s59, 4
    %1921 = dma.done %s64, %s1920
    %s1922 = scalar_lea.hbm %s2, 6144
    // Predicated region
    $region66: #{tpu_custom_call.1} parent=1 // pred_check
      _
    $region67: #{tpu_custom_call.1} parent=1 // pred_check_branch
      %1924 = sbr.rel target = $region69
    $region68: #{tpu_custom_call.1} parent=1 // pred_region
      %1925 = sst [smem:[#allocation12]] [#allocation37]
      %1926 = sst [smem:[#allocation13]] [#allocation36]
    $region69: #{tpu_custom_call.1} parent=1 // pred_fallthru
      _
    %1928 = shalt.err (0)
    %s1930 = sshll.u32 %s1922, 4
    %s1931 = int_to_ptr.hbm [resolvable:$true] %s1930
    %s1932 = sshll.u32 [#allocation2], 4
    %s1933 = int_to_ptr.vmem [resolvable:$true] %s1932
    %1935 = dma.hbm_to_vmem [thread:$0]  %s1931, 8192, %s1933, [#allocation3]
    %v1936 = vld [vmem:[%s63] sm:$0xff]
    %v1937 = vld [vmem:[%s63 + $0x8] sm:$0xff]
    %v1938 = vld [vmem:[%s63 + $0x10] sm:$0xff]
    %v1939 = vld [vmem:[%s63 + $0x18] sm:$0xff]
    %v1940 = vld [vmem:[%s63 + $0x20] sm:$0xff]
    %v1941 = vld [vmem:[%s63 + $0x28] sm:$0xff]
    %v1942 = vld [vmem:[%s63 + $0x30] sm:$0xff]
    %v1943 = vld [vmem:[%s63 + $0x38] sm:$0xff]
    %v1944 = vld [vmem:[%s63 + $0x40] sm:$0xff]
    %v1945 = vld [vmem:[%s63 + $0x48] sm:$0xff]
    %v1946 = vld [vmem:[%s63 + $0x50] sm:$0xff]
    %v1947 = vld [vmem:[%s63 + $0x58] sm:$0xff]
    %v1948 = vld [vmem:[%s63 + $0x60] sm:$0xff]
    %v1949 = vld [vmem:[%s63 + $0x68] sm:$0xff]
    %v1950 = vld [vmem:[%s63 + $0x70] sm:$0xff]
    %v1951 = vld [vmem:[%s63 + $0x78] sm:$0xff]
    %v1952 = vld [vmem:[%s63 + $0x80] sm:$0xff]
    %v1953 = vld [vmem:[%s63 + $0x88] sm:$0xff]
    %v1954 = vld [vmem:[%s63 + $0x90] sm:$0xff]
    %v1955 = vld [vmem:[%s63 + $0x98] sm:$0xff]
    %v1956 = vld [vmem:[%s63 + $0xa0] sm:$0xff]
    %v1957 = vld [vmem:[%s63 + $0xa8] sm:$0xff]
    %v1958 = vld [vmem:[%s63 + $0xb0] sm:$0xff]
    %v1959 = vld [vmem:[%s63 + $0xb8] sm:$0xff]
    %v1960 = vld [vmem:[%s63 + $0xc0] sm:$0xff]
    %v1961 = vld [vmem:[%s63 + $0xc8] sm:$0xff]
    %v1962 = vld [vmem:[%s63 + $0xd0] sm:$0xff]
    %v1963 = vld [vmem:[%s63 + $0xd8] sm:$0xff]
    %v1964 = vld [vmem:[%s63 + $0xe0] sm:$0xff]
    %v1965 = vld [vmem:[%s63 + $0xe8] sm:$0xff]
    %v1966 = vld [vmem:[%s63 + $0xf0] sm:$0xff]
    %v1967 = vld [vmem:[%s63 + $0xf8] sm:$0xff]
    %v1968 = vld [vmem:[%s63 + $0x100] sm:$0xff]
    %v1969 = vld [vmem:[%s63 + $0x108] sm:$0xff]
    %v1970 = vld [vmem:[%s63 + $0x110] sm:$0xff]
    %v1971 = vld [vmem:[%s63 + $0x118] sm:$0xff]
    %v1972 = vld [vmem:[%s63 + $0x120] sm:$0xff]
    %v1973 = vld [vmem:[%s63 + $0x128] sm:$0xff]
    %v1974 = vld [vmem:[%s63 + $0x130] sm:$0xff]
    %v1975 = vld [vmem:[%s63 + $0x138] sm:$0xff]
    %v1976 = vld [vmem:[%s63 + $0x140] sm:$0xff]
    %v1977 = vld [vmem:[%s63 + $0x148] sm:$0xff]
    %v1978 = vld [vmem:[%s63 + $0x150] sm:$0xff]
    %v1979 = vld [vmem:[%s63 + $0x158] sm:$0xff]
    %v1980 = vld [vmem:[%s63 + $0x160] sm:$0xff]
    %v1981 = vld [vmem:[%s63 + $0x168] sm:$0xff]
    %v1982 = vld [vmem:[%s63 + $0x170] sm:$0xff]
    %v1983 = vld [vmem:[%s63 + $0x178] sm:$0xff]
    %v1984 = vld [vmem:[%s63 + $0x180] sm:$0xff]
    %v1985 = vld [vmem:[%s63 + $0x188] sm:$0xff]
    %v1986 = vld [vmem:[%s63 + $0x190] sm:$0xff]
    %v1987 = vld [vmem:[%s63 + $0x198] sm:$0xff]
    %v1988 = vld [vmem:[%s63 + $0x1a0] sm:$0xff]
    %v1989 = vld [vmem:[%s63 + $0x1a8] sm:$0xff]
    %v1990 = vld [vmem:[%s63 + $0x1b0] sm:$0xff]
    %v1991 = vld [vmem:[%s63 + $0x1b8] sm:$0xff]
    %v1992 = vld [vmem:[%s63 + $0x1c0] sm:$0xff]
    %v1993 = vld [vmem:[%s63 + $0x1c8] sm:$0xff]
    %v1994 = vld [vmem:[%s63 + $0x1d0] sm:$0xff]
    %v1995 = vld [vmem:[%s63 + $0x1d8] sm:$0xff]
    %v1996 = vld [vmem:[%s63 + $0x1e0] sm:$0xff]
    %v1997 = vld [vmem:[%s63 + $0x1e8] sm:$0xff]
    %v1998 = vld [vmem:[%s63 + $0x1f0] sm:$0xff]
    %v1999 = vld [vmem:[%s63 + $0x1f8] sm:$0xff]
    %s2000 = scalar_lea.vmem [#allocation7], 22
    %v2001 = vld [vmem:[%s2000] sm:$0x3]
    %v2003 = vperm.slane %v2001, 0
    %v2004 = vperm.slane %v2001, 1
    %2007 = vmatpush.msra.mxu0 %v1966
    %2008 = vmatpush.msra.mxu0 %v1964
    %2009 = vmatpush.msra.mxu0 %v1962
    %2010 = vmatpush.msra.mxu0 %v1960
    %2011 = vmatpush.msra.mxu0 %v1958
    %2012 = vmatpush.msra.mxu0 %v1956
    %2013 = vmatpush.msra.mxu0 %v1954
    %2014 = vmatpush.msra.mxu0 %v1952
    %2015 = vmatpush.msra.mxu0 %v1950
    %2016 = vmatpush.msra.mxu0 %v1948
    %2017 = vmatpush.msra.mxu0 %v1946
    %2018 = vmatpush.msra.mxu0 %v1944
    %2019 = vmatpush.msra.mxu0 %v1942
    %2020 = vmatpush.msra.mxu0 %v1940
    %2021 = vmatpush.msra.mxu0 %v1938
    %2022 = vmatpush.msra.mxu0 %v1936
    %2023 = vmatmul.f32.gmra.mxu0 %v1918
    %v2024 = vpop.f32.mrf.mxu0
    %v2025 = vadd.f32 %v2003, %v2024
    %2026 = vdwg.mxu0
    %2027 = vmatpush.msra.mxu0 %v1998
    %2028 = vmatpush.msra.mxu0 %v1996
    %2029 = vmatpush.msra.mxu0 %v1994
    %2030 = vmatpush.msra.mxu0 %v1992
    %2031 = vmatpush.msra.mxu0 %v1990
    %2032 = vmatpush.msra.mxu0 %v1988
    %2033 = vmatpush.msra.mxu0 %v1986
    %2034 = vmatpush.msra.mxu0 %v1984
    %2035 = vmatpush.msra.mxu0 %v1982
    %2036 = vmatpush.msra.mxu0 %v1980
    %2037 = vmatpush.msra.mxu0 %v1978
    %2038 = vmatpush.msra.mxu0 %v1976
    %2039 = vmatpush.msra.mxu0 %v1974
    %2040 = vmatpush.msra.mxu0 %v1972
    %2041 = vmatpush.msra.mxu0 %v1970
    %2042 = vmatpush.msra.mxu0 %v1968
    %2043 = vmatmul.f32.gmra.mxu0 %v1919
    %v2044 = vpop.f32.mrf.mxu0
    %v2045 = vadd.f32 %v2025, %v2044
    %2046 = vdwg.mxu0
    %2047 = vmatpush.msra.mxu0 %v1967
    %2048 = vmatpush.msra.mxu0 %v1965
    %2049 = vmatpush.msra.mxu0 %v1963
    %2050 = vmatpush.msra.mxu0 %v1961
    %2051 = vmatpush.msra.mxu0 %v1959
    %2052 = vmatpush.msra.mxu0 %v1957
    %2053 = vmatpush.msra.mxu0 %v1955
    %2054 = vmatpush.msra.mxu0 %v1953
    %2055 = vmatpush.msra.mxu0 %v1951
    %2056 = vmatpush.msra.mxu0 %v1949
    %2057 = vmatpush.msra.mxu0 %v1947
    %2058 = vmatpush.msra.mxu0 %v1945
    %2059 = vmatpush.msra.mxu0 %v1943
    %2060 = vmatpush.msra.mxu0 %v1941
    %2061 = vmatpush.msra.mxu0 %v1939
    %2062 = vmatpush.msra.mxu0 %v1937
    %2063 = vmatmul.f32.gmra.mxu0 %v1918
    %v2064 = vpop.f32.mrf.mxu0
    %v2065 = vadd.f32 %v2004, %v2064
    %2066 = vdwg.mxu0
    %2067 = vmatpush.msra.mxu0 %v1999
    %2068 = vmatpush.msra.mxu0 %v1997
    %2069 = vmatpush.msra.mxu0 %v1995
    %2070 = vmatpush.msra.mxu0 %v1993
    %2071 = vmatpush.msra.mxu0 %v1991
    %2072 = vmatpush.msra.mxu0 %v1989
    %2073 = vmatpush.msra.mxu0 %v1987
    %2074 = vmatpush.msra.mxu0 %v1985
    %2075 = vmatpush.msra.mxu0 %v1983
    %2076 = vmatpush.msra.mxu0 %v1981
    %2077 = vmatpush.msra.mxu0 %v1979
    %2078 = vmatpush.msra.mxu0 %v1977
    %2079 = vmatpush.msra.mxu0 %v1975
    %2080 = vmatpush.msra.mxu0 %v1973
    %2081 = vmatpush.msra.mxu0 %v1971
    %2082 = vmatpush.msra.mxu0 %v1969
    %2083 = vmatmul.f32.gmra.mxu0 %v1919
    %v2084 = vpop.f32.mrf.mxu0
    %v2085 = vadd.f32 %v2065, %v2084
    %2086 = vdwg.mxu0
    %v2087 = vmax.f32 %v2045, 0.0
    %v2088 = vmax.f32 %v2085, 0.0
    %s2089 = sshll.u32 %s59, 4
    %2090 = dma.done [#allocation3], %s2089
    %v2091 = vld [vmem:[#allocation2] sm:$0xff]
    %v2092 = vld [vmem:[#allocation2 + $0x8] sm:$0xff]
    %v2093 = vld [vmem:[#allocation2 + $0x10] sm:$0xff]
    %v2094 = vld [vmem:[#allocation2 + $0x18] sm:$0xff]
    %v2095 = vld [vmem:[#allocation2 + $0x20] sm:$0xff]
    %v2096 = vld [vmem:[#allocation2 + $0x28] sm:$0xff]
    %v2097 = vld [vmem:[#allocation2 + $0x30] sm:$0xff]
    %v2098 = vld [vmem:[#allocation2 + $0x38] sm:$0xff]
    %v2099 = vld [vmem:[#allocation2 + $0x40] sm:$0xff]
    %v2100 = vld [vmem:[#allocation2 + $0x48] sm:$0xff]
    %v2101 = vld [vmem:[#allocation2 + $0x50] sm:$0xff]
    %v2102 = vld [vmem:[#allocation2 + $0x58] sm:$0xff]
    %v2103 = vld [vmem:[#allocation2 + $0x60] sm:$0xff]
    %v2104 = vld [vmem:[#allocation2 + $0x68] sm:$0xff]
    %v2105 = vld [vmem:[#allocation2 + $0x70] sm:$0xff]
    %v2106 = vld [vmem:[#allocation2 + $0x78] sm:$0xff]
    %v2107 = vld [vmem:[#allocation2 + $0x80] sm:$0xff]
    %v2108 = vld [vmem:[#allocation2 + $0x88] sm:$0xff]
    %v2109 = vld [vmem:[#allocation2 + $0x90] sm:$0xff]
    %v2110 = vld [vmem:[#allocation2 + $0x98] sm:$0xff]
    %v2111 = vld [vmem:[#allocation2 + $0xa0] sm:$0xff]
    %v2112 = vld [vmem:[#allocation2 + $0xa8] sm:$0xff]
    %v2113 = vld [vmem:[#allocation2 + $0xb0] sm:$0xff]
    %v2114 = vld [vmem:[#allocation2 + $0xb8] sm:$0xff]
    %v2115 = vld [vmem:[#allocation2 + $0xc0] sm:$0xff]
    %v2116 = vld [vmem:[#allocation2 + $0xc8] sm:$0xff]
    %v2117 = vld [vmem:[#allocation2 + $0xd0] sm:$0xff]
    %v2118 = vld [vmem:[#allocation2 + $0xd8] sm:$0xff]
    %v2119 = vld [vmem:[#allocation2 + $0xe0] sm:$0xff]
    %v2120 = vld [vmem:[#allocation2 + $0xe8] sm:$0xff]
    %v2121 = vld [vmem:[#allocation2 + $0xf0] sm:$0xff]
    %v2122 = vld [vmem:[#allocation2 + $0xf8] sm:$0xff]
    %v2123 = vld [vmem:[#allocation2 + $0x100] sm:$0xff]
    %v2124 = vld [vmem:[#allocation2 + $0x108] sm:$0xff]
    %v2125 = vld [vmem:[#allocation2 + $0x110] sm:$0xff]
    %v2126 = vld [vmem:[#allocation2 + $0x118] sm:$0xff]
    %v2127 = vld [vmem:[#allocation2 + $0x120] sm:$0xff]
    %v2128 = vld [vmem:[#allocation2 + $0x128] sm:$0xff]
    %v2129 = vld [vmem:[#allocation2 + $0x130] sm:$0xff]
    %v2130 = vld [vmem:[#allocation2 + $0x138] sm:$0xff]
    %v2131 = vld [vmem:[#allocation2 + $0x140] sm:$0xff]
    %v2132 = vld [vmem:[#allocation2 + $0x148] sm:$0xff]
    %v2133 = vld [vmem:[#allocation2 + $0x150] sm:$0xff]
    %v2134 = vld [vmem:[#allocation2 + $0x158] sm:$0xff]
    %v2135 = vld [vmem:[#allocation2 + $0x160] sm:$0xff]
    %v2136 = vld [vmem:[#allocation2 + $0x168] sm:$0xff]
    %v2137 = vld [vmem:[#allocation2 + $0x170] sm:$0xff]
    %v2138 = vld [vmem:[#allocation2 + $0x178] sm:$0xff]
    %v2139 = vld [vmem:[#allocation2 + $0x180] sm:$0xff]
    %v2140 = vld [vmem:[#allocation2 + $0x188] sm:$0xff]
    %v2141 = vld [vmem:[#allocation2 + $0x190] sm:$0xff]
    %v2142 = vld [vmem:[#allocation2 + $0x198] sm:$0xff]
    %v2143 = vld [vmem:[#allocation2 + $0x1a0] sm:$0xff]
    %v2144 = vld [vmem:[#allocation2 + $0x1a8] sm:$0xff]
    %v2145 = vld [vmem:[#allocation2 + $0x1b0] sm:$0xff]
    %v2146 = vld [vmem:[#allocation2 + $0x1b8] sm:$0xff]
    %v2147 = vld [vmem:[#allocation2 + $0x1c0] sm:$0xff]
    %v2148 = vld [vmem:[#allocation2 + $0x1c8] sm:$0xff]
    %v2149 = vld [vmem:[#allocation2 + $0x1d0] sm:$0xff]
    %v2150 = vld [vmem:[#allocation2 + $0x1d8] sm:$0xff]
    %v2151 = vld [vmem:[#allocation2 + $0x1e0] sm:$0xff]
    %v2152 = vld [vmem:[#allocation2 + $0x1e8] sm:$0xff]
    %v2153 = vld [vmem:[#allocation2 + $0x1f0] sm:$0xff]
    %v2154 = vld [vmem:[#allocation2 + $0x1f8] sm:$0xff]
    %s2155 = scalar_lea.vmem [#allocation7], 24
    %v2156 = vld [vmem:[%s2155] sm:$0x3]
    %v2158 = vperm.slane %v2156, 0
    %v2159 = vperm.slane %v2156, 1
    %2162 = vmatpush.msra.mxu0 %v2121
    %2163 = vmatpush.msra.mxu0 %v2119
    %2164 = vmatpush.msra.mxu0 %v2117
    %2165 = vmatpush.msra.mxu0 %v2115
    %2166 = vmatpush.msra.mxu0 %v2113
    %2167 = vmatpush.msra.mxu0 %v2111
    %2168 = vmatpush.msra.mxu0 %v2109
    %2169 = vmatpush.msra.mxu0 %v2107
    %2170 = vmatpush.msra.mxu0 %v2105
    %2171 = vmatpush.msra.mxu0 %v2103
    %2172 = vmatpush.msra.mxu0 %v2101
    %2173 = vmatpush.msra.mxu0 %v2099
    %2174 = vmatpush.msra.mxu0 %v2097
    %2175 = vmatpush.msra.mxu0 %v2095
    %2176 = vmatpush.msra.mxu0 %v2093
    %2177 = vmatpush.msra.mxu0 %v2091
    %2178 = vmatmul.f32.gmra.mxu0 %v2087
    %v2179 = vpop.f32.mrf.mxu0
    %v2180 = vadd.f32 %v2158, %v2179
    %2181 = vdwg.mxu0
    %2182 = vmatpush.msra.mxu0 %v2153
    %2183 = vmatpush.msra.mxu0 %v2151
    %2184 = vmatpush.msra.mxu0 %v2149
    %2185 = vmatpush.msra.mxu0 %v2147
    %2186 = vmatpush.msra.mxu0 %v2145
    %2187 = vmatpush.msra.mxu0 %v2143
    %2188 = vmatpush.msra.mxu0 %v2141
    %2189 = vmatpush.msra.mxu0 %v2139
    %2190 = vmatpush.msra.mxu0 %v2137
    %2191 = vmatpush.msra.mxu0 %v2135
    %2192 = vmatpush.msra.mxu0 %v2133
    %2193 = vmatpush.msra.mxu0 %v2131
    %2194 = vmatpush.msra.mxu0 %v2129
    %2195 = vmatpush.msra.mxu0 %v2127
    %2196 = vmatpush.msra.mxu0 %v2125
    %2197 = vmatpush.msra.mxu0 %v2123
    %2198 = vmatmul.f32.gmra.mxu0 %v2088
    %v2199 = vpop.f32.mrf.mxu0
    %v2200 = vadd.f32 %v2180, %v2199
    %2201 = vdwg.mxu0
    %2202 = vmatpush.msra.mxu0 %v2122
    %2203 = vmatpush.msra.mxu0 %v2120
    %2204 = vmatpush.msra.mxu0 %v2118
    %2205 = vmatpush.msra.mxu0 %v2116
    %2206 = vmatpush.msra.mxu0 %v2114
    %2207 = vmatpush.msra.mxu0 %v2112
    %2208 = vmatpush.msra.mxu0 %v2110
    %2209 = vmatpush.msra.mxu0 %v2108
    %2210 = vmatpush.msra.mxu0 %v2106
    %2211 = vmatpush.msra.mxu0 %v2104
    %2212 = vmatpush.msra.mxu0 %v2102
    %2213 = vmatpush.msra.mxu0 %v2100
    %2214 = vmatpush.msra.mxu0 %v2098
    %2215 = vmatpush.msra.mxu0 %v2096
    %2216 = vmatpush.msra.mxu0 %v2094
    %2217 = vmatpush.msra.mxu0 %v2092
    %2218 = vmatmul.f32.gmra.mxu0 %v2087
    %v2219 = vpop.f32.mrf.mxu0
    %v2220 = vadd.f32 %v2159, %v2219
    %2221 = vdwg.mxu0
    %2222 = vmatpush.msra.mxu0 %v2154
    %2223 = vmatpush.msra.mxu0 %v2152
    %2224 = vmatpush.msra.mxu0 %v2150
    %2225 = vmatpush.msra.mxu0 %v2148
    %2226 = vmatpush.msra.mxu0 %v2146
    %2227 = vmatpush.msra.mxu0 %v2144
    %2228 = vmatpush.msra.mxu0 %v2142
    %2229 = vmatpush.msra.mxu0 %v2140
    %2230 = vmatpush.msra.mxu0 %v2138
    %2231 = vmatpush.msra.mxu0 %v2136
    %2232 = vmatpush.msra.mxu0 %v2134
    %2233 = vmatpush.msra.mxu0 %v2132
    %2234 = vmatpush.msra.mxu0 %v2130
    %2235 = vmatpush.msra.mxu0 %v2128
    %2236 = vmatpush.msra.mxu0 %v2126
    %2237 = vmatpush.msra.mxu0 %v2124
    %2238 = vmatmul.f32.gmra.mxu0 %v2088
    %v2239 = vpop.f32.mrf.mxu0
    %v2240 = vadd.f32 %v2220, %v2239
    %2241 = vdwg.mxu0
    %2242 = vst [vmem:[#allocation9] sm:$0xff] %v2200
    %2243 = vst [vmem:[#allocation9 + $0x8] sm:$0xff] %v2240
    // Predicated region
    $region70: #{tpu_custom_call.1} parent=1 // pred_check
      _
    $region71: #{tpu_custom_call.1} parent=1 // pred_check_branch
      %2245 = sbr.rel (0) target = $region73
    $region72: #{tpu_custom_call.1} parent=1 // pred_region
      %2247 = vsyncadd [#allocation6], 0
      %s2249 = sshll.u32 [#allocation9], 4
      %s2250 = int_to_ptr.vmem [resolvable:$true] %s2249
      %s2251 = sshll.u32 %s3, 4
      %s2252 = int_to_ptr.hbm [resolvable:$true] %s2251
      %2254 = dma.vmem_to_hbm [thread:$0]  %s2250, 256, %s2252, [#allocation6]
    $region73: #{tpu_custom_call.1} parent=1 // pred_fallthru
      _
    // Predicated region
    $region74: #{tpu_custom_call.1} parent=1 // pred_check
      _
    $region75: #{tpu_custom_call.1} parent=1 // pred_check_branch
      %2256 = sbr.rel (0) target = $region77
    $region76: #{tpu_custom_call.1} parent=1 // pred_region
      %2258 = dma.done [#allocation6], 256
    $region77: #{tpu_custom_call.1} parent=1 // pred_fallthru
      _
    %2259 = vsyncpa [#allocation5], 1
    %2260 = vsyncpa [#allocation8], 1
    %2261 = vsyncpa [#allocation6], 1
  %2262 = vsyncmov [#allocation3]
  %s2263 = vpop.sfrf %2262
  %p2264 = scmp.eq.s32.totalorder %s2263, 0
  %p2265 = pneg %p2264
  %2267 = shalt.err (%p2265)
  %s2268 = scalar_lea.sflag [#allocation3], 1
  %2269 = vsyncmov %s2268
  %s2270 = vpop.sfrf %2269
  %p2271 = scmp.eq.s32.totalorder %s2270, 0
  %p2272 = pneg %p2271
  %2274 = shalt.err (%p2272)

</llo_original>
